<compile_context>
chip_gen: v6e
topology: v6e:2x2x1
jax: 0.10.0
libtpu: 0.0.40
codegen_flags: <defaults>
</compile_context>

<pallas_src>
import functools
import math

import jax
import jax.numpy as jnp
import numpy as np
from jax.experimental import pallas as pl
from jax.experimental.pallas import tpu as pltpu


# ----------------------------------------------------------------------------
# Pallas kernel: one grid step == (one batch element, one query tile).
# ----------------------------------------------------------------------------
def fusion_gate_kernel(cf_ref,                  # (1, N, 3C)   concat of h1,h2,h3
                       wqkv_ref, bqkv_ref,      # (3C, C+2Cr), (1, C+2Cr)  [v|q|k]
                       wg_ref, bg_ref,          # (C, 12C),    (1, 12C)    [(j*4+t)]
                       out_ref,                 # (1, TQ, 4C)
                       *, channels, reduced_dim, tq):
    C = channels
    Cr = reduced_dim
    N = cf_ref.shape[1]

    cf = cf_ref[0].astype(jnp.float32)          # (N, 3C)
    w = wqkv_ref[...].astype(jnp.float32)
    b = bqkv_ref[...].astype(jnp.float32)

    # One fused [v | q | k] projection over the full sequence (k and v need all
    # rows).  The 1/sqrt(Cr) attention scale is already folded into the q
    # columns (and bias) of w/b.
    qkv_f = jnp.dot(cf, w, preferred_element_type=jnp.float32) + b   # (N, C+2Cr)
    v = qkv_f[:, :C]                                                 # (N, C)  lane offset 0
    k = qkv_f[:, C + Cr:C + 2 * Cr]                                  # (N, Cr)

    if tq == N:
        # Single query tile per batch: reuse the fused projection directly.
        cq = cf
        q = jnp.maximum(qkv_f[:, C:C + Cr], 0.0)                     # ReLU (query only)
    else:
        # Multi-tile fallback for large N: slice the query rows out of the
        # resident concat block (no duplicate input) and project just them.
        q_start = pl.multiple_of(pl.program_id(1) * tq, tq)
        cq = cf_ref[0, pl.ds(q_start, tq), :].astype(jnp.float32)    # (TQ, 3C)
        q = jnp.maximum(
            jnp.dot(cq, w[:, C:C + Cr], preferred_element_type=jnp.float32)
            + b[:, C:C + Cr], 0.0)                                   # (TQ, Cr)

    # attention over spatial positions: attn[i, j] = <q_i, k_j>  (scale folded in)
    attn = jax.lax.dot_general(q, k, (((1,), (1,)), ((), ())),
                               preferred_element_type=jnp.float32)   # (TQ, N)
    attn = attn - jnp.max(attn, axis=-1, keepdims=True)
    p = jnp.exp(attn)

    # Deferred softmax normalization: normalize AFTER the PV matmul so the
    # divide only touches the (TQ, C) result instead of the (TQ, N) tile.
    out = jnp.dot(p, v, preferred_element_type=jnp.float32)          # (TQ, C)
    out = out * (1.0 / jnp.sum(p, axis=-1, keepdims=True))           # exact, (TQ, 1)

    # All 12 gates in one matmul + one sigmoid.  Column block (j*4 + t) holds
    # the gate for (task t, input j), so each per-input slab G[:, j*4C:(j+1)*4C]
    # is a 128-lane-aligned vreg group when C == 32.
    G = jax.nn.sigmoid(
        jnp.dot(out, wg_ref[...].astype(jnp.float32),
                preferred_element_type=jnp.float32)
        + bg_ref[...].astype(jnp.float32))                           # (TQ, 12C)

    h1 = cq[:, 0:C]
    h2 = cq[:, C:2 * C]
    h3 = cq[:, 2 * C:3 * C]

    def rep4(h):                       # (TQ, C) -> (TQ, 4C) lane replication
        return jnp.concatenate([h, h, h, h], axis=-1)

    fused = (rep4(h1) * G[:, 0:4 * C]
             + rep4(h2) * G[:, 4 * C:8 * C]
             + rep4(h3) * G[:, 8 * C:12 * C])                        # (TQ, 4C)

    # Single lane-dense store; column block t is task t.
    out_ref[0] = fused.astype(out_ref.dtype)


# ----------------------------------------------------------------------------
# Wrapper
# ----------------------------------------------------------------------------
def multi_task_fusion_gate(h1, h2, h3, kernel_params, tq=None):
    """h1/h2/h3: (B, N, C) float32.  Returns 4 arrays of shape (B, N, C)."""
    B, N, C = h1.shape
    wqkv, bqkv, wg, bg = kernel_params
    C3 = 3 * C
    Dqkv = wqkv.shape[1]
    Cr = (Dqkv - C) // 2

    # Query-tile size: use the whole sequence as one tile (single grid step per
    # batch element, k/v projected once) whenever the (N, N) attention tile is
    # comfortably within VMEM; otherwise fall back to 128-row query tiles.
    if tq is None:
        attn_bytes = N * N * 4
        if attn_bytes <= (8 << 20) or N % 128 != 0:
            tq = N
        else:
            tq = 128
    assert N % tq == 0
    num_q = N // tq

    # Pre-concatenate once in XLA; the kernel never does an in-kernel concat of
    # its inputs, and h1/h2/h3 for the gating are static lane slices of it.
    concat = jnp.concatenate([h1, h2, h3], axis=-1)                  # (B, N, 3C)

    kernel = functools.partial(fusion_gate_kernel,
                               channels=C, reduced_dim=Cr, tq=tq)

    def rep(shape):
        nd = len(shape)
        return pl.BlockSpec(shape, lambda b, qi, _nd=nd: (0,) * _nd)

    fused = pl.pallas_call(
        kernel,
        out_shape=jax.ShapeDtypeStruct((B, N, 4 * C), h1.dtype),
        grid_spec=pltpu.PrefetchScalarGridSpec(
            num_scalar_prefetch=0,
            grid=(B, num_q),
            in_specs=[
                pl.BlockSpec((1, N, C3), lambda b, qi: (b, 0, 0)),   # full concat
                rep((C3, Dqkv)), rep((1, Dqkv)),                     # fused q/k/v
                rep((C, 12 * C)), rep((1, 12 * C)),                  # fused gates
            ],
            out_specs=pl.BlockSpec((1, tq, 4 * C), lambda b, qi: (b, qi, 0)),
        ),
        compiler_params=pltpu.CompilerParams(
            dimension_semantics=("parallel", "parallel"),
            vmem_limit_bytes=48 * 1024 * 1024),
    )(concat, wqkv, bqkv, wg, bg)

    # Split the lane-dense (B, N, 4C) result into the 4 task features.
    return tuple(fused[..., t * C:(t + 1) * C] for t in range(4))


# ----------------------------------------------------------------------------
# Deterministic parameter construction (Conv1x1 + eval-mode BN, folded)
# ----------------------------------------------------------------------------
def fold_conv_bn(key, in_ch, out_ch, eps=1e-5):
    kw, kg, kb, km, kv = jax.random.split(key, 5)
    w = jax.random.normal(kw, (in_ch, out_ch), jnp.float32) * 0.1    # (in, out)
    gamma = 1.0 + 0.1 * jax.random.normal(kg, (out_ch,), jnp.float32)
    beta = 0.1 * jax.random.normal(kb, (out_ch,), jnp.float32)
    mean = 0.1 * jax.random.normal(km, (out_ch,), jnp.float32)
    var = 0.5 + 0.1 * jnp.abs(jax.random.normal(kv, (out_ch,), jnp.float32))
    scale = gamma / jnp.sqrt(var + eps)
    w_eff = w * scale[None, :]
    b_eff = beta - mean * scale
    return w_eff, b_eff


def make_logical_params(key, channels, reduction=8):
    """Per-layer folded weights, matching the PyTorch module structure."""
    reduced = channels // reduction
    keys = jax.random.split(key, 15)
    wq, bq = fold_conv_bn(keys[0], channels * 3, reduced)
    wk, bk = fold_conv_bn(keys[1], channels * 3, reduced)
    wv, bv = fold_conv_bn(keys[2], channels * 3, channels)
    gate_ws, gate_bs = [], []
    for i in range(12):                       # ordering: idx = 3*t + j (gate{t+1}_{j+1})
        w, b = fold_conv_bn(keys[3 + i], channels, channels)
        gate_ws.append(w)
        gate_bs.append(b)
    return dict(wq=wq, bq=bq, wk=wk, bk=bk, wv=wv, bv=bv,
                gate_ws=gate_ws, gate_bs=gate_bs,
                channels=channels, reduced=reduced)


def pack_kernel_params(p):
    """Fuse / reorder weights into the kernel-friendly layouts."""
    C = p["channels"]
    Cr = p["reduced"]
    s = 1.0 / math.sqrt(Cr)                   # fold attention scale into q (ReLU-safe)
    # [ v | q*s | k ]  — widest slice (v) at lane offset 0.
    wqkv = jnp.concatenate([p["wv"], p["wq"] * s, p["wk"]], axis=1)  # (3C, C+2Cr)
    bqkv = jnp.concatenate([p["bv"], p["bq"] * s, p["bk"]]).reshape(1, -1)
    # Gate columns reordered so task index is fastest-varying: block (j*4 + t).
    wg_cols = [None] * 12
    bg_cols = [None] * 12
    for t in range(4):
        for j in range(3):
            wg_cols[j * 4 + t] = p["gate_ws"][3 * t + j]
            bg_cols[j * 4 + t] = p["gate_bs"][3 * t + j]
    wg = jnp.concatenate(wg_cols, axis=1)                            # (C, 12C)
    bg = jnp.concatenate(bg_cols).reshape(1, -1)                     # (1, 12C)
    return wqkv, bqkv, wg, bg


# ----------------------------------------------------------------------------
# Pure-JAX reference (original module math, un-fused layouts)
# ----------------------------------------------------------------------------
def reference(h1, h2, h3, p):
    C = p["channels"]
    Cr = p["reduced"]
    concat = jnp.concatenate([h1, h2, h3], axis=-1)                  # (B, N, 3C)
    q = jnp.maximum(concat @ p["wq"] + p["bq"], 0.0)
    k = concat @ p["wk"] + p["bk"]
    v = concat @ p["wv"] + p["bv"]
    attn = jnp.einsum("bic,bjc->bij", q, k) / math.sqrt(Cr)
    attn = jax.nn.softmax(attn, axis=-1)
    out = jnp.einsum("bij,bjc->bic", attn, v)                        # (B, N, C)
    hs = (h1, h2, h3)
    feats = []
    for t in range(4):
        acc = jnp.zeros_like(out)
        for j in range(3):
            idx = 3 * t + j
            G = jax.nn.sigmoid(out @ p["gate_ws"][idx] + p["gate_bs"][idx])
            acc = acc + hs[j] * G
        feats.append(acc)
    return tuple(feats)


if __name__ == "__main__":
    # channels=32, reduction=8 -> reduced_dim=4; H=W=16 -> N=256 -> single query tile
    B, C, H, W = 2, 32, 16, 16
    N = H * W

    key = jax.random.PRNGKey(0)
    k1, k2, k3, kp = jax.random.split(key, 4)
    # inputs in (B, N, C) layout (equivalent to NCHW (B, C, H, W) flattened)
    h1 = jax.random.normal(k1, (B, N, C), jnp.float32)
    h2 = jax.random.normal(k2, (B, N, C), jnp.float32)
    h3 = jax.random.normal(k3, (B, N, C), jnp.float32)

    logical = make_logical_params(kp, C, reduction=8)
    kernel_params = pack_kernel_params(logical)

    outs = multi_task_fusion_gate(h1, h2, h3, kernel_params)
    outs = jax.block_until_ready(outs)

    refs = reference(h1, h2, h3, logical)
    for o, r in zip(outs, refs):
        np.testing.assert_allclose(np.asarray(o), np.asarray(r),
                                   rtol=5e-3, atol=5e-3)

    print("KERNEL_OK")
</pallas_src>

<mosaic_0001>
module attributes {stable_mosaic.version = 11 : i64} {
  func.func @fusion_gate_kernel(%arg0: i32, %arg1: i32, %arg2: memref<1x256x96xf32, #tpu.memory_space<vmem>>, %arg3: memref<96x40xf32, #tpu.memory_space<vmem>>, %arg4: memref<1x40xf32, #tpu.memory_space<vmem>>, %arg5: memref<32x384xf32, #tpu.memory_space<vmem>>, %arg6: memref<1x384xf32, #tpu.memory_space<vmem>>, %arg7: memref<1x256x128xf32, #tpu.memory_space<vmem>>) attributes {dimension_semantics = [#tpu.dimension_semantics<parallel>, #tpu.dimension_semantics<parallel>], iteration_bounds = array<i64: 2, 1>, scalar_prefetch = 0 : i64, scratch_operands = 0 : i64, tpu.core_type = #tpu.core_type<tc>, window_params = [{transform_indices = @transform_0, window_bounds = array<i64: 1, 256, 96>}, {pipeline_mode = #tpu.pipeline_mode<synchronous>, transform_indices = @transform_1, window_bounds = array<i64: 96, 40>}, {pipeline_mode = #tpu.pipeline_mode<synchronous>, transform_indices = @transform_2, window_bounds = array<i64: 1, 40>}, {pipeline_mode = #tpu.pipeline_mode<synchronous>, transform_indices = @transform_3, window_bounds = array<i64: 32, 384>}, {pipeline_mode = #tpu.pipeline_mode<synchronous>, transform_indices = @transform_4, window_bounds = array<i64: 1, 384>}, {transform_indices = @transform_5, window_bounds = array<i64: 1, 256, 128>}]} {
    %c0 = arith.constant 0 : index
    %c0_0 = arith.constant 0 : index
    %c0_1 = arith.constant 0 : index
    %0 = vector.load %arg2[%c0, %c0_0, %c0_1] : memref<1x256x96xf32, #tpu.memory_space<vmem>>, vector<1x256x96xf32>
    %1 = vector.shape_cast %0 : vector<1x256x96xf32> to vector<256x96xf32>
    %c0_2 = arith.constant 0 : index
    %c0_3 = arith.constant 0 : index
    %2 = vector.load %arg3[%c0_2, %c0_3] : memref<96x40xf32, #tpu.memory_space<vmem>>, vector<96x40xf32>
    %c0_4 = arith.constant 0 : index
    %c0_5 = arith.constant 0 : index
    %3 = vector.load %arg4[%c0_4, %c0_5] : memref<1x40xf32, #tpu.memory_space<vmem>>, vector<1x40xf32>
    %cst = arith.constant dense<0.000000e+00> : vector<256x40xf32>
    %4 = tpu.matmul %1, %2, %cst {dimension_numbers = #tpu.dot_dimension_numbers<[1], [0], [0], [1], [0, 0, 1, 1], [], []>} : vector<256x96xf32>, vector<96x40xf32>, vector<256x40xf32> -> vector<256x40xf32>
    %5 = vector.broadcast %3 : vector<1x40xf32> to vector<256x40xf32>
    %6 = arith.addf %4, %5 : vector<256x40xf32>
    %7 = vector.extract_strided_slice %6 {offsets = [0, 0], sizes = [256, 32], strides = [1, 1]} : vector<256x40xf32> to vector<256x32xf32>
    %8 = vector.extract_strided_slice %6 {offsets = [0, 36], sizes = [256, 4], strides = [1, 1]} : vector<256x40xf32> to vector<256x4xf32>
    %9 = vector.extract_strided_slice %6 {offsets = [0, 32], sizes = [256, 4], strides = [1, 1]} : vector<256x40xf32> to vector<256x4xf32>
    %cst_6 = arith.constant 0.000000e+00 : f32
    %10 = vector.broadcast %cst_6 : f32 to vector<256x4xf32>
    %11 = arith.maximumf %9, %10 : vector<256x4xf32>
    %cst_7 = arith.constant dense<0.000000e+00> : vector<256x256xf32>
    %12 = tpu.matmul %11, %8, %cst_7 {dimension_numbers = #tpu.dot_dimension_numbers<[1], [1], [0], [0], [0, 0, 1, 0], [], []>} : vector<256x4xf32>, vector<256x4xf32>, vector<256x256xf32> -> vector<256x256xf32>
    %cst_8 = arith.constant dense<0xFF800000> : vector<256xf32>
    %13 = vector.multi_reduction <maximumf>, %12, %cst_8 [1] : vector<256x256xf32> to vector<256xf32>
    %14 = vector.shape_cast %13 : vector<256xf32> to vector<256x1xf32>
    %15 = vector.broadcast %14 : vector<256x1xf32> to vector<256x256xf32>
    %16 = arith.subf %12, %15 : vector<256x256xf32>
    %17 = math.exp %16 : vector<256x256xf32>
    %cst_9 = arith.constant dense<0.000000e+00> : vector<256x32xf32>
    %18 = tpu.matmul %17, %7, %cst_9 {dimension_numbers = #tpu.dot_dimension_numbers<[1], [0], [0], [1], [0, 0, 1, 1], [], []>} : vector<256x256xf32>, vector<256x32xf32>, vector<256x32xf32> -> vector<256x32xf32>
    %cst_10 = arith.constant dense<0.000000e+00> : vector<256xf32>
    %19 = vector.multi_reduction <add>, %17, %cst_10 [1] : vector<256x256xf32> to vector<256xf32>
    %20 = vector.shape_cast %19 : vector<256xf32> to vector<256x1xf32>
    %cst_11 = arith.constant 1.000000e+00 : f32
    %21 = vector.broadcast %cst_11 : f32 to vector<256x1xf32>
    %22 = arith.divf %21, %20 : vector<256x1xf32>
    %23 = vector.broadcast %22 : vector<256x1xf32> to vector<256x32xf32>
    %24 = arith.mulf %18, %23 : vector<256x32xf32>
    %c0_12 = arith.constant 0 : index
    %c0_13 = arith.constant 0 : index
    %25 = vector.load %arg5[%c0_12, %c0_13] : memref<32x384xf32, #tpu.memory_space<vmem>>, vector<32x384xf32>
    %cst_14 = arith.constant dense<0.000000e+00> : vector<256x384xf32>
    %26 = tpu.matmul %24, %25, %cst_14 {dimension_numbers = #tpu.dot_dimension_numbers<[1], [0], [0], [1], [0, 0, 1, 1], [], []>} : vector<256x32xf32>, vector<32x384xf32>, vector<256x384xf32> -> vector<256x384xf32>
    %c0_15 = arith.constant 0 : index
    %c0_16 = arith.constant 0 : index
    %27 = vector.load %arg6[%c0_15, %c0_16] : memref<1x384xf32, #tpu.memory_space<vmem>>, vector<1x384xf32>
    %28 = vector.broadcast %27 : vector<1x384xf32> to vector<256x384xf32>
    %29 = arith.addf %26, %28 : vector<256x384xf32>
    %30 = arith.negf %29 : vector<256x384xf32>
    %31 = math.exp %30 : vector<256x384xf32>
    %cst_17 = arith.constant 1.000000e+00 : f32
    %32 = vector.broadcast %cst_17 : f32 to vector<256x384xf32>
    %33 = arith.addf %32, %31 : vector<256x384xf32>
    %34 = arith.divf %32, %33 : vector<256x384xf32>
    %35 = vector.extract_strided_slice %1 {offsets = [0, 0], sizes = [256, 32], strides = [1, 1]} : vector<256x96xf32> to vector<256x32xf32>
    %36 = vector.extract_strided_slice %1 {offsets = [0, 32], sizes = [256, 32], strides = [1, 1]} : vector<256x96xf32> to vector<256x32xf32>
    %37 = vector.extract_strided_slice %1 {offsets = [0, 64], sizes = [256, 32], strides = [1, 1]} : vector<256x96xf32> to vector<256x32xf32>
    %38 = tpu.concatenate %35, %35, %35, %35 in 1 : vector<256x32xf32>, vector<256x32xf32>, vector<256x32xf32>, vector<256x32xf32> -> vector<256x128xf32>
    %39 = vector.extract_strided_slice %34 {offsets = [0, 0], sizes = [256, 128], strides = [1, 1]} : vector<256x384xf32> to vector<256x128xf32>
    %40 = arith.mulf %38, %39 : vector<256x128xf32>
    %41 = tpu.concatenate %36, %36, %36, %36 in 1 : vector<256x32xf32>, vector<256x32xf32>, vector<256x32xf32>, vector<256x32xf32> -> vector<256x128xf32>
    %42 = vector.extract_strided_slice %34 {offsets = [0, 128], sizes = [256, 128], strides = [1, 1]} : vector<256x384xf32> to vector<256x128xf32>
    %43 = arith.mulf %41, %42 : vector<256x128xf32>
    %44 = arith.addf %40, %43 : vector<256x128xf32>
    %45 = tpu.concatenate %37, %37, %37, %37 in 1 : vector<256x32xf32>, vector<256x32xf32>, vector<256x32xf32>, vector<256x32xf32> -> vector<256x128xf32>
    %46 = vector.extract_strided_slice %34 {offsets = [0, 256], sizes = [256, 128], strides = [1, 1]} : vector<256x384xf32> to vector<256x128xf32>
    %47 = arith.mulf %45, %46 : vector<256x128xf32>
    %48 = arith.addf %44, %47 : vector<256x128xf32>
    %c0_18 = arith.constant 0 : index
    %c0_19 = arith.constant 0 : index
    %c0_20 = arith.constant 0 : index
    %49 = vector.load %arg7[%c0_18, %c0_19, %c0_20] : memref<1x256x128xf32, #tpu.memory_space<vmem>>, vector<1x256x128xf32>
    %50 = vector.shape_cast %49 : vector<1x256x128xf32> to vector<256x128xf32>
    %51 = vector.shape_cast %48 : vector<256x128xf32> to vector<1x256x128xf32>
    tpu.vector_store %arg7[%c0_18, %c0_19, %c0_20], %51 {strides = array<i32>} : memref<1x256x128xf32, #tpu.memory_space<vmem>>, vector<1x256x128xf32>,
    return
  }
  func.func @transform_0(%arg0: i32, %arg1: i32) -> (i32, i32, i32) {
    %c0_i32 = arith.constant 0 : i32
    %c0_i32_0 = arith.constant 0 : i32
    %c0_i32_1 = arith.constant 0 : i32
    return %arg0, %c0_i32, %c0_i32_0 : i32, i32, i32
  }
  func.func @transform_1(%arg0: i32, %arg1: i32) -> (i32, i32) {
    %c0_i32 = arith.constant 0 : i32
    %c0_i32_0 = arith.constant 0 : i32
    %c0_i32_1 = arith.constant 0 : i32
    return %c0_i32, %c0_i32_0 : i32, i32
  }
  func.func @transform_2(%arg0: i32, %arg1: i32) -> (i32, i32) {
    %c0_i32 = arith.constant 0 : i32
    %c0_i32_0 = arith.constant 0 : i32
    %c0_i32_1 = arith.constant 0 : i32
    return %c0_i32, %c0_i32_0 : i32, i32
  }
  func.func @transform_3(%arg0: i32, %arg1: i32) -> (i32, i32) {
    %c0_i32 = arith.constant 0 : i32
    %c0_i32_0 = arith.constant 0 : i32
    %c0_i32_1 = arith.constant 0 : i32
    return %c0_i32, %c0_i32_0 : i32, i32
  }
  func.func @transform_4(%arg0: i32, %arg1: i32) -> (i32, i32) {
    %c0_i32 = arith.constant 0 : i32
    %c0_i32_0 = arith.constant 0 : i32
    %c0_i32_1 = arith.constant 0 : i32
    return %c0_i32, %c0_i32_0 : i32, i32
  }
  func.func @transform_5(%arg0: i32, %arg1: i32) -> (i32, i32, i32) {
    %c0_i32 = arith.constant 0 : i32
    %c0_i32_0 = arith.constant 0 : i32
    return %arg0, %arg1, %c0_i32 : i32, i32, i32
  }
}

</mosaic_0001>

<llo_original>
// kernel: tpu_custom_call.1
$region0: #{tpu_custom_call.1}
  #allocation0 [shape = 'u32[]', space=smem, size = 0x4, offset = 0x4, fixed_abs, tag = 'smem constant byte address 0x4 - core index']
  #allocation1 [shape = 'u32[144,128]{1,0:T(1,128)}', space=vmem, size = 0x12000, scoped, tag = 'internal scratch']
  %s0 = inlined_call_operand.vmem [shape: f32[2,256,96], index: 0, kind: input, shape index: {}]
  %s1 = inlined_call_operand.vmem [shape: f32[96,40], index: 1, kind: input, shape index: {}]
  %s2 = inlined_call_operand.vmem [shape: f32[1,40], index: 2, kind: input, shape index: {}]
  %s3 = inlined_call_operand.vmem [shape: f32[32,384], index: 3, kind: input, shape index: {}]
  %s4 = inlined_call_operand.vmem [shape: f32[1,384], index: 4, kind: input, shape index: {}]
  %s5 = inlined_call_operand.hbm [shape: f32[2,256,128], index: 5, kind: output, shape index: {}]
  %s6 = sld [smem:[#allocation0]]
  $region53: #{tpu_custom_call.1} parent=0
    _
  %s8 = ssub.s32 1, %s6
  %s9 = scalar_select 0, %s8, %s6
  $region1: #{tpu_custom_call.1} parent=0
    #allocation2 [shape = 'u8[262144]{0}', space=vmem, size = 0x40000, scoped, tag = 'output window, operand 0']
    #allocation3 [shape = 's32[2]{0}', space=sflag, size = 0x8, scoped, tag = 'scoped memory for tpu_custom_call.1']
    %10 = vsyncpa [#allocation3], 0
    %s11 = scalar_lea.sflag [#allocation3], 1
    %12 = vsyncpa %s11, 0
    loop: start=0, step=1, limit=4
    $region2: #{tpu_custom_call.1} parent=1 // loop_pre_header
      _
    $region3: #{tpu_custom_call.1} parent=1 // loop_header
      %s14 = sphi 0, %s18
      %p15 = scmp.ge.s32.totalorder %s14, 4
      %s21 = sphi 0, %s33
      %s22 = sphi 0, %s29
      %s23 = sphi 0, %s21
      %s24 = sphi 0, %s22
      %s25 = sphi 0, %s23
      %s26 = sphi 0, %s24
      %s36 = sphi 0, %s38
      %s39 = sphi 0, %s36
      %s40 = sphi 0, %s39
      %s56 = sphi 0, %s40
      %s60 = sphi 0, %s60
      %s62 = sphi 0, %s60
      %s63 = sphi 0, %s62
      %s77 = sphi 0, %s63
      %s81 = sphi 0, %s81
      %s83 = sphi 0, %s81
      %s84 = sphi 0, %s83
      %s98 = sphi 0, %s84
      %s102 = sphi 0, %s102
      %s104 = sphi 0, %s102
      %s105 = sphi 0, %s104
      %s119 = sphi 0, %s105
      %s123 = sphi 0, %s123
      %s125 = sphi 0, %s123
      %s126 = sphi 0, %s125
      %s140 = sphi 0, %s126
      %s148 = sphi 0, %s150
      %s151 = sphi 0, %s148
      %s152 = sphi 0, %s151
      %s168 = sphi 0, %s152
    $region4: #{tpu_custom_call.1} parent=1 // loop_header_branch
      %17 = sbr.rel (%p15) target = $region8
    $region5: #{tpu_custom_call.1} parent=1 // loop_body
      %s19 = ssub.s32 %s14, 1
      %s20 = ssub.s32 %s14, 2
      %s27 = sadd.s32 1, %s22
      %p28 = scmp.ge.s32.totalorder %s27, 1
      %s29 = scalar_select %p28, 0, %s27
      %s30 = sadd.s32 1, %s21
      %s31 = scalar_select %p28, %s30, %s21
      %p32 = scmp.ge.s32.totalorder %s31, 2
      %s33 = scalar_select %p32, 0, %s31
      %s34 = ssub.s32 %s21, %s33
      %p35 = scmp.eq.s32.totalorder %s34, 0
      %s37 = sadd.s32 %s36, 1
      %s38 = scalar_select %p35, %s36, %s37
      %p41 = pneg %p35
      %p42 = scmp.eq.s32.totalorder %s14, 1
      %p43 = por %p41, %p42
      %p44 = scmp.ne.s32.totalorder %s36, %s39
      %p45 = scmp.eq.s32.totalorder %s14, 0
      %p46 = por %p44, %p45
      %p47 = scmp.ne.s32.totalorder %s36, %s39
      %p48 = scmp.eq.s32.totalorder %s19, 1
      %p49 = por %p47, %p48
      %p50 = scmp.ne.s32.totalorder %s39, %s40
      %p51 = scmp.eq.s32.totalorder %s19, 0
      %p52 = por %p50, %p51
      %p53 = scmp.ne.s32.totalorder %s39, %s40
      %p54 = scmp.eq.s32.totalorder %s20, 1
      %p55 = por %p53, %p54
      %p57 = scmp.ne.s32.totalorder %s40, %s56
      %p58 = scmp.eq.s32.totalorder %s20, 0
      %p59 = por %p57, %p58
      %s61 = sadd.s32 %s60, 1
      %p64 = scmp.eq.s32.totalorder %s14, 1
      %p65 = scmp.ne.s32.totalorder %s60, %s62
      %p66 = scmp.eq.s32.totalorder %s14, 0
      %p67 = por %p65, %p66
      %p68 = scmp.ne.s32.totalorder %s60, %s62
      %p69 = scmp.eq.s32.totalorder %s19, 1
      %p70 = por %p68, %p69
      %p71 = scmp.ne.s32.totalorder %s62, %s63
      %p72 = scmp.eq.s32.totalorder %s19, 0
      %p73 = por %p71, %p72
      %p74 = scmp.ne.s32.totalorder %s62, %s63
      %p75 = scmp.eq.s32.totalorder %s20, 1
      %p76 = por %p74, %p75
      %p78 = scmp.ne.s32.totalorder %s63, %s77
      %p79 = scmp.eq.s32.totalorder %s20, 0
      %p80 = por %p78, %p79
      %s82 = sadd.s32 %s81, 1
      %p85 = scmp.eq.s32.totalorder %s14, 1
      %p86 = scmp.ne.s32.totalorder %s81, %s83
      %p87 = scmp.eq.s32.totalorder %s14, 0
      %p88 = por %p86, %p87
      %p89 = scmp.ne.s32.totalorder %s81, %s83
      %p90 = scmp.eq.s32.totalorder %s19, 1
      %p91 = por %p89, %p90
      %p92 = scmp.ne.s32.totalorder %s83, %s84
      %p93 = scmp.eq.s32.totalorder %s19, 0
      %p94 = por %p92, %p93
      %p95 = scmp.ne.s32.totalorder %s83, %s84
      %p96 = scmp.eq.s32.totalorder %s20, 1
      %p97 = por %p95, %p96
      %p99 = scmp.ne.s32.totalorder %s84, %s98
      %p100 = scmp.eq.s32.totalorder %s20, 0
      %p101 = por %p99, %p100
      %s103 = sadd.s32 %s102, 1
      %p106 = scmp.eq.s32.totalorder %s14, 1
      %p107 = scmp.ne.s32.totalorder %s102, %s104
      %p108 = scmp.eq.s32.totalorder %s14, 0
      %p109 = por %p107, %p108
      %p110 = scmp.ne.s32.totalorder %s102, %s104
      %p111 = scmp.eq.s32.totalorder %s19, 1
      %p112 = por %p110, %p111
      %p113 = scmp.ne.s32.totalorder %s104, %s105
      %p114 = scmp.eq.s32.totalorder %s19, 0
      %p115 = por %p113, %p114
      %p116 = scmp.ne.s32.totalorder %s104, %s105
      %p117 = scmp.eq.s32.totalorder %s20, 1
      %p118 = por %p116, %p117
      %p120 = scmp.ne.s32.totalorder %s105, %s119
      %p121 = scmp.eq.s32.totalorder %s20, 0
      %p122 = por %p120, %p121
      %s124 = sadd.s32 %s123, 1
      %p127 = scmp.eq.s32.totalorder %s14, 1
      %p128 = scmp.ne.s32.totalorder %s123, %s125
      %p129 = scmp.eq.s32.totalorder %s14, 0
      %p130 = por %p128, %p129
      %p131 = scmp.ne.s32.totalorder %s123, %s125
      %p132 = scmp.eq.s32.totalorder %s19, 1
      %p133 = por %p131, %p132
      %p134 = scmp.ne.s32.totalorder %s125, %s126
      %p135 = scmp.eq.s32.totalorder %s19, 0
      %p136 = por %p134, %p135
      %p137 = scmp.ne.s32.totalorder %s125, %s126
      %p138 = scmp.eq.s32.totalorder %s20, 1
      %p139 = por %p137, %p138
      %p141 = scmp.ne.s32.totalorder %s126, %s140
      %p142 = scmp.eq.s32.totalorder %s20, 0
      %p143 = por %p141, %p142
      %s144 = ssub.s32 %s21, %s33
      %s145 = ssub.s32 %s22, %s29
      %s146 = sor.u32 %s144, %s145
      %p147 = scmp.eq.s32.totalorder %s146, 0
      %s149 = sadd.s32 %s148, 1
      %s150 = scalar_select %p147, %s148, %s149
      %p153 = pneg %p147
      %p154 = scmp.eq.s32.totalorder %s14, 1
      %p155 = por %p153, %p154
      %p156 = scmp.ne.s32.totalorder %s148, %s151
      %p157 = scmp.eq.s32.totalorder %s14, 0
      %p158 = por %p156, %p157
      %p159 = scmp.ne.s32.totalorder %s148, %s151
      %p160 = scmp.eq.s32.totalorder %s19, 1
      %p161 = por %p159, %p160
      %p162 = scmp.ne.s32.totalorder %s151, %s152
      %p163 = scmp.eq.s32.totalorder %s19, 0
      %p164 = por %p162, %p163
      %p165 = scmp.ne.s32.totalorder %s151, %s152
      %p166 = scmp.eq.s32.totalorder %s20, 1
      %p167 = por %p165, %p166
      %p169 = scmp.ne.s32.totalorder %s152, %s168
      %p170 = scmp.eq.s32.totalorder %s20, 0
      %p171 = por %p169, %p170
      %p172 = scmp.le.s32.totalorder 1, %s14
      %p173 = scmp.lt.s32.totalorder %s14, 3
      %p174 = pnand %p172, %p173
      %p175 = pneg %p174
      // Predicated region
      $region9: #{tpu_custom_call.1} parent=5 // pred_check
        _
      $region10: #{tpu_custom_call.1} parent=5 // pred_check_branch
        %177 = sbr.rel (%p174) target = $region12
      $region11: #{tpu_custom_call.1} parent=5 // pred_region
        %s178 = ssub.s32 %s14, 1
        // Predicated region
        $region13: #{tpu_custom_call.1} parent=11 // pred_check
          %p179 = pneg %p73
        $region14: #{tpu_custom_call.1} parent=11 // pred_check_branch
          %181 = sbr.rel (%p179) target = $region16
        $region15: #{tpu_custom_call.1} parent=11 // pred_region
          _
        $region16: #{tpu_custom_call.1} parent=11 // pred_fallthru
          _
        // Predicated region
        $region17: #{tpu_custom_call.1} parent=11 // pred_check
          %p182 = pneg %p94
        $region18: #{tpu_custom_call.1} parent=11 // pred_check_branch
          %184 = sbr.rel (%p182) target = $region20
        $region19: #{tpu_custom_call.1} parent=11 // pred_region
          _
        $region20: #{tpu_custom_call.1} parent=11 // pred_fallthru
          _
        // Predicated region
        $region21: #{tpu_custom_call.1} parent=11 // pred_check
          %p185 = pneg %p115
        $region22: #{tpu_custom_call.1} parent=11 // pred_check_branch
          %187 = sbr.rel (%p185) target = $region24
        $region23: #{tpu_custom_call.1} parent=11 // pred_region
          _
        $region24: #{tpu_custom_call.1} parent=11 // pred_fallthru
          _
        // Predicated region
        $region25: #{tpu_custom_call.1} parent=11 // pred_check
          %p188 = pneg %p136
        $region26: #{tpu_custom_call.1} parent=11 // pred_check_branch
          %190 = sbr.rel (%p188) target = $region28
        $region27: #{tpu_custom_call.1} parent=11 // pred_region
          _
        $region28: #{tpu_custom_call.1} parent=11 // pred_fallthru
          _
      $region12: #{tpu_custom_call.1} parent=5 // pred_fallthru
        _
      %p191 = scmp.lt.s32.totalorder %s14, 2
      // Predicated region
      $region29: #{tpu_custom_call.1} parent=5 // pred_check
        %p192 = pneg %p191
      $region30: #{tpu_custom_call.1} parent=5 // pred_check_branch
        %194 = sbr.rel (%p192) target = $region32
      $region31: #{tpu_custom_call.1} parent=5 // pred_region
        // Predicated region
        $region33: #{tpu_custom_call.1} parent=31 // pred_check
          %p195 = pneg %p46
        $region34: #{tpu_custom_call.1} parent=31 // pred_check_branch
          %197 = sbr.rel (%p195) target = $region36
        $region35: #{tpu_custom_call.1} parent=31 // pred_region
          %p198 = scmp.lt.s32.totalorder %s21, 1
          %s199 = scalar_select %p198, %s21, 1
          %s200 = smul.addr %s199, 32
          %s201 = smul.addr %s200, 8
          %s202 = scalar_lea.vmem %s0, %s201
        $region36: #{tpu_custom_call.1} parent=31 // pred_fallthru
          _
      $region32: #{tpu_custom_call.1} parent=5 // pred_fallthru
        _
      %p203 = scmp.le.s32.totalorder 1, %s14
      %p204 = scmp.lt.s32.totalorder %s14, 3
      %p205 = pnand %p203, %p204
      %p206 = pneg %p205
      // Predicated region
      $region37: #{tpu_custom_call.1} parent=5 // pred_check
        _
      $region38: #{tpu_custom_call.1} parent=5 // pred_check_branch
        %208 = sbr.rel (%p205) target = $region40
      $region39: #{tpu_custom_call.1} parent=5 // pred_region
        %s209 = ssub.s32 %s14, 1
        %p210 = scmp.lt.s32.totalorder %s23, 1
        %s211 = scalar_select %p210, %s23, 1
        %s212 = smul.addr %s211, 32
        %s213 = smul.addr %s212, 8
        %s214 = scalar_lea.vmem %s0, %s213
        %p215 = pneg %p52
        %p216 = pneg %p49
        %p217 = pneg %p73
        %p218 = pneg %p70
        %p219 = pneg %p94
        %p220 = pneg %p91
        %p221 = pneg %p115
        %p222 = pneg %p112
        %p223 = pneg %p136
        %p224 = pneg %p133
        %p225 = pneg %p164
        %p226 = pneg %p161
        %s227 = sand.u32 %s151, 1
        %s228 = scalar_lea.sflag [#allocation3], %s227
        %s229 = sand.u32 %s151, 1
        %s230 = smul.addr %s229, 256
        %s231 = scalar_lea.vmem [#allocation2], %s230
        %p232 = scmp.lt.s32.totalorder %s23, 1
        %s233 = scalar_select %p232, %s23, 1
        %s234 = smul.addr %s233, 32
        %s235 = smul.addr %s234, 8
        %s236 = scalar_lea.vmem %s0, %s235
        %s237 = smul.u32 32, %s24
        %v238 = vld [vmem:[%s236] sm:$0xff]
        %v239 = vld [vmem:[%s236 + $0x8] sm:$0xff]
        %v240 = vld [vmem:[%s236 + $0x10] sm:$0xff]
        %v241 = vld [vmem:[%s236 + $0x18] sm:$0xff]
        %v242 = vld [vmem:[%s236 + $0x20] sm:$0xff]
        %v243 = vld [vmem:[%s236 + $0x28] sm:$0xff]
        %v244 = vld [vmem:[%s236 + $0x30] sm:$0xff]
        %v245 = vld [vmem:[%s236 + $0x38] sm:$0xff]
        %v246 = vld [vmem:[%s236 + $0x40] sm:$0xff]
        %v247 = vld [vmem:[%s236 + $0x48] sm:$0xff]
        %v248 = vld [vmem:[%s236 + $0x50] sm:$0xff]
        %v249 = vld [vmem:[%s236 + $0x58] sm:$0xff]
        %v250 = vld [vmem:[%s236 + $0x60] sm:$0xff]
        %v251 = vld [vmem:[%s236 + $0x68] sm:$0xff]
        %v252 = vld [vmem:[%s236 + $0x70] sm:$0xff]
        %v253 = vld [vmem:[%s236 + $0x78] sm:$0xff]
        %v254 = vld [vmem:[%s236 + $0x80] sm:$0xff]
        %v255 = vld [vmem:[%s236 + $0x88] sm:$0xff]
        %v256 = vld [vmem:[%s236 + $0x90] sm:$0xff]
        %v257 = vld [vmem:[%s236 + $0x98] sm:$0xff]
        %v258 = vld [vmem:[%s236 + $0xa0] sm:$0xff]
        %v259 = vld [vmem:[%s236 + $0xa8] sm:$0xff]
        %v260 = vld [vmem:[%s236 + $0xb0] sm:$0xff]
        %v261 = vld [vmem:[%s236 + $0xb8] sm:$0xff]
        %v262 = vld [vmem:[%s236 + $0xc0] sm:$0xff]
        %v263 = vld [vmem:[%s236 + $0xc8] sm:$0xff]
        %v264 = vld [vmem:[%s236 + $0xd0] sm:$0xff]
        %v265 = vld [vmem:[%s236 + $0xd8] sm:$0xff]
        %v266 = vld [vmem:[%s236 + $0xe0] sm:$0xff]
        %v267 = vld [vmem:[%s236 + $0xe8] sm:$0xff]
        %v268 = vld [vmem:[%s236 + $0xf0] sm:$0xff]
        %v269 = vld [vmem:[%s236 + $0xf8] sm:$0xff]
        %v270 = vld [vmem:[%s1] sm:$0xff]
        %v271 = vld [vmem:[%s1 + $0x8] sm:$0xff]
        %v272 = vld [vmem:[%s1 + $0x10] sm:$0xff]
        %v273 = vld [vmem:[%s1 + $0x18] sm:$0xff]
        %v274 = vld [vmem:[%s1 + $0x20] sm:$0xff]
        %v275 = vld [vmem:[%s1 + $0x28] sm:$0xff]
        %v276 = vld [vmem:[%s1 + $0x30] sm:$0xff]
        %v277 = vld [vmem:[%s1 + $0x38] sm:$0xff]
        %v278 = vld [vmem:[%s1 + $0x40] sm:$0xff]
        %v279 = vld [vmem:[%s1 + $0x48] sm:$0xff]
        %v280 = vld [vmem:[%s1 + $0x50] sm:$0xff]
        %v281 = vld [vmem:[%s1 + $0x58] sm:$0xff]
        %v282 = vld [vmem:[%s2] sm:$0x1]
        %v284 = vlaneseq
        %v285 = vshrl.u32 %v284, 7
        %v286 = vsub.s32 0, %v285
        %v287 = vrot.slane %v282, %v286
        %vm289 = vcmask 785408
        %v291 = vsel %vm289, %v238, 0
        %v294 = vsel %vm289, %v239, 0
        %v297 = vsel %vm289, %v240, 0
        %v300 = vsel %vm289, %v241, 0
        %v303 = vsel %vm289, %v242, 0
        %v306 = vsel %vm289, %v243, 0
        %v309 = vsel %vm289, %v244, 0
        %v312 = vsel %vm289, %v245, 0
        %v315 = vsel %vm289, %v246, 0
        %v318 = vsel %vm289, %v247, 0
        %v321 = vsel %vm289, %v248, 0
        %v324 = vsel %vm289, %v249, 0
        %v327 = vsel %vm289, %v250, 0
        %v330 = vsel %vm289, %v251, 0
        %v333 = vsel %vm289, %v252, 0
        %v336 = vsel %vm289, %v253, 0
        %v339 = vsel %vm289, %v254, 0
        %v342 = vsel %vm289, %v255, 0
        %v345 = vsel %vm289, %v256, 0
        %v348 = vsel %vm289, %v257, 0
        %v351 = vsel %vm289, %v258, 0
        %v354 = vsel %vm289, %v259, 0
        %v357 = vsel %vm289, %v260, 0
        %v360 = vsel %vm289, %v261, 0
        %v363 = vsel %vm289, %v262, 0
        %v366 = vsel %vm289, %v263, 0
        %v369 = vsel %vm289, %v264, 0
        %v372 = vsel %vm289, %v265, 0
        %v375 = vsel %vm289, %v266, 0
        %v378 = vsel %vm289, %v267, 0
        %v381 = vsel %vm289, %v268, 0
        %v384 = vsel %vm289, %v269, 0
        %386 = vmatprep.subr.mxu0 0.0
        %387 = vmatpush1.msra.mxu0 0.0
        %388 = vmatprep.subr.mxu0 0.0
        %389 = vmatpush1.msra.mxu0 0.0
        %390 = vmatprep.subr.mxu0 0.0
        %391 = vmatpush1.msra.mxu0 0.0
        %392 = vmatprep.subr.mxu0 0.0
        %393 = vmatpush1.msra.mxu0 0.0
        %394 = vmatprep.subr.mxu0 0.0
        %395 = vmatpush1.msra.mxu0 %v281
        %396 = vmatprep.subr.mxu0 0.0
        %397 = vmatpush1.msra.mxu0 %v280
        %398 = vmatprep.subr.mxu0 0.0
        %399 = vmatpush1.msra.mxu0 %v279
        %400 = vmatprep.subr.mxu0 0.0
        %401 = vmatpush1.msra.mxu0 %v278
        %402 = vmatprep.subr.mxu0 0.0
        %403 = vmatpush1.msra.mxu0 %v277
        %404 = vmatprep.subr.mxu0 0.0
        %405 = vmatpush1.msra.mxu0 %v276
        %406 = vmatprep.subr.mxu0 0.0
        %407 = vmatpush1.msra.mxu0 %v275
        %408 = vmatprep.subr.mxu0 0.0
        %409 = vmatpush1.msra.mxu0 %v274
        %410 = vmatprep.subr.mxu0 0.0
        %411 = vmatpush1.msra.mxu0 %v273
        %412 = vmatprep.subr.mxu0 0.0
        %413 = vmatpush1.msra.mxu0 %v272
        %414 = vmatprep.subr.mxu0 0.0
        %415 = vmatpush1.msra.mxu0 %v271
        %416 = vmatprep.subr.mxu0 0.0
        %417 = vmatpush1.msra.mxu0 %v270
        %418 = vmatprep.subr.mxu0 0.0
        %419 = vmatpush2.msra.mxu0 0.0
        %420 = vmatprep.subr.mxu0 0.0
        %421 = vmatpush2.msra.mxu0 0.0
        %422 = vmatprep.subr.mxu0 0.0
        %423 = vmatpush2.msra.mxu0 0.0
        %424 = vmatprep.subr.mxu0 0.0
        %425 = vmatpush2.msra.mxu0 0.0
        %426 = vmatprep.subr.mxu0 0.0
        %427 = vmatpush2.msra.mxu0 0.0
        %428 = vmatprep.subr.mxu0 0.0
        %429 = vmatpush2.msra.mxu0 0.0
        %430 = vmatprep.subr.mxu0 0.0
        %431 = vmatpush2.msra.mxu0 0.0
        %432 = vmatprep.subr.mxu0 0.0
        %433 = vmatpush2.msra.mxu0 0.0
        %434 = vmatprep.subr.mxu0 0.0
        %435 = vmatpush2.msra.mxu0 0.0
        %436 = vmatprep.subr.mxu0 0.0
        %437 = vmatpush2.msra.mxu0 0.0
        %438 = vmatprep.subr.mxu0 0.0
        %439 = vmatpush2.msra.mxu0 0.0
        %440 = vmatprep.subr.mxu0 0.0
        %441 = vmatpush2.msra.mxu0 0.0
        %442 = vmatprep.subr.mxu0 0.0
        %443 = vmatpush2.msra.mxu0 0.0
        %444 = vmatprep.subr.mxu0 0.0
        %445 = vmatpush2.msra.mxu0 0.0
        %446 = vmatprep.subr.mxu0 0.0
        %447 = vmatpush2.msra.mxu0 0.0
        %448 = vmatprep.subr.mxu0 0.0
        %449 = vmatpush2.msra.mxu0 0.0
        %450 = vmatprep.mubr.f32.mxu0 0.0
        %451 = vmatmul.mubr.f32.gmra.mxu0 %v291
        %v452 = vpop.f32.mrf.mxu0
        %v453 = vadd.f32 %v287, %v452
        %v454 = vpop.f32.mrf.mxu0
        %455 = vmatprep.mubr.f32.mxu0 0.0
        %456 = vmatmul.mubr.f32.gmra.mxu0 %v294
        %v457 = vpop.f32.mrf.mxu0
        %v458 = vadd.f32 %v287, %v457
        %v459 = vpop.f32.mrf.mxu0
        %460 = vmatprep.mubr.f32.mxu0 0.0
        %461 = vmatmul.mubr.f32.gmra.mxu0 %v297
        %v462 = vpop.f32.mrf.mxu0
        %v463 = vadd.f32 %v287, %v462
        %v464 = vpop.f32.mrf.mxu0
        %465 = vmatprep.mubr.f32.mxu0 0.0
        %466 = vmatmul.mubr.f32.gmra.mxu0 %v300
        %v467 = vpop.f32.mrf.mxu0
        %v468 = vadd.f32 %v287, %v467
        %v469 = vpop.f32.mrf.mxu0
        %470 = vmatprep.mubr.f32.mxu0 0.0
        %471 = vmatmul.mubr.f32.gmra.mxu0 %v303
        %v472 = vpop.f32.mrf.mxu0
        %v473 = vadd.f32 %v287, %v472
        %v474 = vpop.f32.mrf.mxu0
        %475 = vmatprep.mubr.f32.mxu0 0.0
        %476 = vmatmul.mubr.f32.gmra.mxu0 %v306
        %v477 = vpop.f32.mrf.mxu0
        %v478 = vadd.f32 %v287, %v477
        %v479 = vpop.f32.mrf.mxu0
        %480 = vmatprep.mubr.f32.mxu0 0.0
        %481 = vmatmul.mubr.f32.gmra.mxu0 %v309
        %v482 = vpop.f32.mrf.mxu0
        %v483 = vadd.f32 %v287, %v482
        %v484 = vpop.f32.mrf.mxu0
        %485 = vmatprep.mubr.f32.mxu0 0.0
        %486 = vmatmul.mubr.f32.gmra.mxu0 %v312
        %v487 = vpop.f32.mrf.mxu0
        %v488 = vadd.f32 %v287, %v487
        %v489 = vpop.f32.mrf.mxu0
        %490 = vmatprep.mubr.f32.mxu0 0.0
        %491 = vmatmul.mubr.f32.gmra.mxu0 %v315
        %v492 = vpop.f32.mrf.mxu0
        %v493 = vadd.f32 %v287, %v492
        %v494 = vpop.f32.mrf.mxu0
        %495 = vmatprep.mubr.f32.mxu0 0.0
        %496 = vmatmul.mubr.f32.gmra.mxu0 %v318
        %v497 = vpop.f32.mrf.mxu0
        %v498 = vadd.f32 %v287, %v497
        %v499 = vpop.f32.mrf.mxu0
        %500 = vmatprep.mubr.f32.mxu0 0.0
        %501 = vmatmul.mubr.f32.gmra.mxu0 %v321
        %v502 = vpop.f32.mrf.mxu0
        %v503 = vadd.f32 %v287, %v502
        %v504 = vpop.f32.mrf.mxu0
        %505 = vmatprep.mubr.f32.mxu0 0.0
        %506 = vmatmul.mubr.f32.gmra.mxu0 %v324
        %v507 = vpop.f32.mrf.mxu0
        %v508 = vadd.f32 %v287, %v507
        %v509 = vpop.f32.mrf.mxu0
        %510 = vmatprep.mubr.f32.mxu0 0.0
        %511 = vmatmul.mubr.f32.gmra.mxu0 %v327
        %v512 = vpop.f32.mrf.mxu0
        %v513 = vadd.f32 %v287, %v512
        %v514 = vpop.f32.mrf.mxu0
        %515 = vmatprep.mubr.f32.mxu0 0.0
        %516 = vmatmul.mubr.f32.gmra.mxu0 %v330
        %v517 = vpop.f32.mrf.mxu0
        %v518 = vadd.f32 %v287, %v517
        %v519 = vpop.f32.mrf.mxu0
        %520 = vmatprep.mubr.f32.mxu0 0.0
        %521 = vmatmul.mubr.f32.gmra.mxu0 %v333
        %v522 = vpop.f32.mrf.mxu0
        %v523 = vadd.f32 %v287, %v522
        %v524 = vpop.f32.mrf.mxu0
        %525 = vmatprep.mubr.f32.mxu0 0.0
        %526 = vmatmul.mubr.f32.gmra.mxu0 %v336
        %v527 = vpop.f32.mrf.mxu0
        %v528 = vadd.f32 %v287, %v527
        %v529 = vpop.f32.mrf.mxu0
        %530 = vmatprep.mubr.f32.mxu0 0.0
        %531 = vmatmul.mubr.f32.gmra.mxu0 %v339
        %v532 = vpop.f32.mrf.mxu0
        %v533 = vadd.f32 %v287, %v532
        %v534 = vpop.f32.mrf.mxu0
        %535 = vmatprep.mubr.f32.mxu0 0.0
        %536 = vmatmul.mubr.f32.gmra.mxu0 %v342
        %v537 = vpop.f32.mrf.mxu0
        %v538 = vadd.f32 %v287, %v537
        %v539 = vpop.f32.mrf.mxu0
        %540 = vmatprep.mubr.f32.mxu0 0.0
        %541 = vmatmul.mubr.f32.gmra.mxu0 %v345
        %v542 = vpop.f32.mrf.mxu0
        %v543 = vadd.f32 %v287, %v542
        %v544 = vpop.f32.mrf.mxu0
        %545 = vmatprep.mubr.f32.mxu0 0.0
        %546 = vmatmul.mubr.f32.gmra.mxu0 %v348
        %v547 = vpop.f32.mrf.mxu0
        %v548 = vadd.f32 %v287, %v547
        %v549 = vpop.f32.mrf.mxu0
        %550 = vmatprep.mubr.f32.mxu0 0.0
        %551 = vmatmul.mubr.f32.gmra.mxu0 %v351
        %v552 = vpop.f32.mrf.mxu0
        %v553 = vadd.f32 %v287, %v552
        %v554 = vpop.f32.mrf.mxu0
        %555 = vmatprep.mubr.f32.mxu0 0.0
        %556 = vmatmul.mubr.f32.gmra.mxu0 %v354
        %v557 = vpop.f32.mrf.mxu0
        %v558 = vadd.f32 %v287, %v557
        %v559 = vpop.f32.mrf.mxu0
        %560 = vmatprep.mubr.f32.mxu0 0.0
        %561 = vmatmul.mubr.f32.gmra.mxu0 %v357
        %v562 = vpop.f32.mrf.mxu0
        %v563 = vadd.f32 %v287, %v562
        %v564 = vpop.f32.mrf.mxu0
        %565 = vmatprep.mubr.f32.mxu0 0.0
        %566 = vmatmul.mubr.f32.gmra.mxu0 %v360
        %v567 = vpop.f32.mrf.mxu0
        %v568 = vadd.f32 %v287, %v567
        %v569 = vpop.f32.mrf.mxu0
        %570 = vmatprep.mubr.f32.mxu0 0.0
        %571 = vmatmul.mubr.f32.gmra.mxu0 %v363
        %v572 = vpop.f32.mrf.mxu0
        %v573 = vadd.f32 %v287, %v572
        %v574 = vpop.f32.mrf.mxu0
        %575 = vmatprep.mubr.f32.mxu0 0.0
        %576 = vmatmul.mubr.f32.gmra.mxu0 %v366
        %v577 = vpop.f32.mrf.mxu0
        %v578 = vadd.f32 %v287, %v577
        %v579 = vpop.f32.mrf.mxu0
        %580 = vmatprep.mubr.f32.mxu0 0.0
        %581 = vmatmul.mubr.f32.gmra.mxu0 %v369
        %v582 = vpop.f32.mrf.mxu0
        %v583 = vadd.f32 %v287, %v582
        %v584 = vpop.f32.mrf.mxu0
        %585 = vmatprep.mubr.f32.mxu0 0.0
        %586 = vmatmul.mubr.f32.gmra.mxu0 %v372
        %v587 = vpop.f32.mrf.mxu0
        %v588 = vadd.f32 %v287, %v587
        %v589 = vpop.f32.mrf.mxu0
        %590 = vmatprep.mubr.f32.mxu0 0.0
        %591 = vmatmul.mubr.f32.gmra.mxu0 %v375
        %v592 = vpop.f32.mrf.mxu0
        %v593 = vadd.f32 %v287, %v592
        %v594 = vpop.f32.mrf.mxu0
        %595 = vmatprep.mubr.f32.mxu0 0.0
        %596 = vmatmul.mubr.f32.gmra.mxu0 %v378
        %v597 = vpop.f32.mrf.mxu0
        %v598 = vadd.f32 %v287, %v597
        %v599 = vpop.f32.mrf.mxu0
        %600 = vmatprep.mubr.f32.mxu0 0.0
        %601 = vmatmul.mubr.f32.gmra.mxu0 %v381
        %v602 = vpop.f32.mrf.mxu0
        %v603 = vadd.f32 %v287, %v602
        %v604 = vpop.f32.mrf.mxu0
        %605 = vmatprep.mubr.f32.mxu0 0.0
        %606 = vmatmul.mubr.f32.gmra.mxu0 %v384
        %v607 = vpop.f32.mrf.mxu0
        %v608 = vadd.f32 %v287, %v607
        %v609 = vpop.f32.mrf.mxu0
        %610 = vdwg.mxu0
        %v611 = vmax.f32 %v453, 0.0
        %v612 = vmax.f32 %v458, 0.0
        %v613 = vmax.f32 %v463, 0.0
        %v614 = vmax.f32 %v468, 0.0
        %v615 = vmax.f32 %v473, 0.0
        %v616 = vmax.f32 %v478, 0.0
        %v617 = vmax.f32 %v483, 0.0
        %v618 = vmax.f32 %v488, 0.0
        %v619 = vmax.f32 %v493, 0.0
        %v620 = vmax.f32 %v498, 0.0
        %v621 = vmax.f32 %v503, 0.0
        %v622 = vmax.f32 %v508, 0.0
        %v623 = vmax.f32 %v513, 0.0
        %v624 = vmax.f32 %v518, 0.0
        %v625 = vmax.f32 %v523, 0.0
        %v626 = vmax.f32 %v528, 0.0
        %v627 = vmax.f32 %v533, 0.0
        %v628 = vmax.f32 %v538, 0.0
        %v629 = vmax.f32 %v543, 0.0
        %v630 = vmax.f32 %v548, 0.0
        %v631 = vmax.f32 %v553, 0.0
        %v632 = vmax.f32 %v558, 0.0
        %v633 = vmax.f32 %v563, 0.0
        %v634 = vmax.f32 %v568, 0.0
        %v635 = vmax.f32 %v573, 0.0
        %v636 = vmax.f32 %v578, 0.0
        %v637 = vmax.f32 %v583, 0.0
        %v638 = vmax.f32 %v588, 0.0
        %v639 = vmax.f32 %v593, 0.0
        %v640 = vmax.f32 %v598, 0.0
        %v641 = vmax.f32 %v603, 0.0
        %v642 = vmax.f32 %v608, 0.0
        %675 = vrot.lane.b32.xlu0 %v611, 96
        %v676 = vpop.permute.xlu0 %675
        %677 = vrot.lane.b32.xlu0 %v612, 96
        %v678 = vpop.permute.xlu0 %677
        %679 = vrot.lane.b32.xlu0 %v613, 96
        %v680 = vpop.permute.xlu0 %679
        %681 = vrot.lane.b32.xlu0 %v614, 96
        %v682 = vpop.permute.xlu0 %681
        %683 = vrot.lane.b32.xlu0 %v615, 96
        %v684 = vpop.permute.xlu0 %683
        %685 = vrot.lane.b32.xlu0 %v616, 96
        %v686 = vpop.permute.xlu0 %685
        %687 = vrot.lane.b32.xlu0 %v617, 96
        %v688 = vpop.permute.xlu0 %687
        %689 = vrot.lane.b32.xlu0 %v618, 96
        %v690 = vpop.permute.xlu0 %689
        %691 = vrot.lane.b32.xlu0 %v619, 96
        %v692 = vpop.permute.xlu0 %691
        %693 = vrot.lane.b32.xlu0 %v620, 96
        %v694 = vpop.permute.xlu0 %693
        %695 = vrot.lane.b32.xlu0 %v621, 96
        %v696 = vpop.permute.xlu0 %695
        %697 = vrot.lane.b32.xlu0 %v622, 96
        %v698 = vpop.permute.xlu0 %697
        %699 = vrot.lane.b32.xlu0 %v623, 96
        %v700 = vpop.permute.xlu0 %699
        %701 = vrot.lane.b32.xlu0 %v624, 96
        %v702 = vpop.permute.xlu0 %701
        %703 = vrot.lane.b32.xlu0 %v625, 96
        %v704 = vpop.permute.xlu0 %703
        %705 = vrot.lane.b32.xlu0 %v626, 96
        %v706 = vpop.permute.xlu0 %705
        %707 = vrot.lane.b32.xlu0 %v627, 96
        %v708 = vpop.permute.xlu0 %707
        %709 = vrot.lane.b32.xlu0 %v628, 96
        %v710 = vpop.permute.xlu0 %709
        %711 = vrot.lane.b32.xlu0 %v629, 96
        %v712 = vpop.permute.xlu0 %711
        %713 = vrot.lane.b32.xlu0 %v630, 96
        %v714 = vpop.permute.xlu0 %713
        %715 = vrot.lane.b32.xlu0 %v631, 96
        %v716 = vpop.permute.xlu0 %715
        %717 = vrot.lane.b32.xlu0 %v632, 96
        %v718 = vpop.permute.xlu0 %717
        %719 = vrot.lane.b32.xlu0 %v633, 96
        %v720 = vpop.permute.xlu0 %719
        %721 = vrot.lane.b32.xlu0 %v634, 96
        %v722 = vpop.permute.xlu0 %721
        %723 = vrot.lane.b32.xlu0 %v635, 96
        %v724 = vpop.permute.xlu0 %723
        %725 = vrot.lane.b32.xlu0 %v636, 96
        %v726 = vpop.permute.xlu0 %725
        %727 = vrot.lane.b32.xlu0 %v637, 96
        %v728 = vpop.permute.xlu0 %727
        %729 = vrot.lane.b32.xlu0 %v638, 96
        %v730 = vpop.permute.xlu0 %729
        %731 = vrot.lane.b32.xlu0 %v639, 96
        %v732 = vpop.permute.xlu0 %731
        %733 = vrot.lane.b32.xlu0 %v640, 96
        %v734 = vpop.permute.xlu0 %733
        %735 = vrot.lane.b32.xlu0 %v641, 96
        %v736 = vpop.permute.xlu0 %735
        %737 = vrot.lane.b32.xlu0 %v642, 96
        %v738 = vpop.permute.xlu0 %737
        %771 = vrot.lane.b32.xlu0 %v453, 92
        %v772 = vpop.permute.xlu0 %771
        %773 = vrot.lane.b32.xlu0 %v458, 92
        %v774 = vpop.permute.xlu0 %773
        %775 = vrot.lane.b32.xlu0 %v463, 92
        %v776 = vpop.permute.xlu0 %775
        %777 = vrot.lane.b32.xlu0 %v468, 92
        %v778 = vpop.permute.xlu0 %777
        %779 = vrot.lane.b32.xlu0 %v473, 92
        %v780 = vpop.permute.xlu0 %779
        %781 = vrot.lane.b32.xlu0 %v478, 92
        %v782 = vpop.permute.xlu0 %781
        %783 = vrot.lane.b32.xlu0 %v483, 92
        %v784 = vpop.permute.xlu0 %783
        %785 = vrot.lane.b32.xlu0 %v488, 92
        %v786 = vpop.permute.xlu0 %785
        %787 = vrot.lane.b32.xlu0 %v493, 92
        %v788 = vpop.permute.xlu0 %787
        %789 = vrot.lane.b32.xlu0 %v498, 92
        %v790 = vpop.permute.xlu0 %789
        %791 = vrot.lane.b32.xlu0 %v503, 92
        %v792 = vpop.permute.xlu0 %791
        %793 = vrot.lane.b32.xlu0 %v508, 92
        %v794 = vpop.permute.xlu0 %793
        %795 = vrot.lane.b32.xlu0 %v513, 92
        %v796 = vpop.permute.xlu0 %795
        %797 = vrot.lane.b32.xlu0 %v518, 92
        %v798 = vpop.permute.xlu0 %797
        %799 = vrot.lane.b32.xlu0 %v523, 92
        %v800 = vpop.permute.xlu0 %799
        %801 = vrot.lane.b32.xlu0 %v528, 92
        %v802 = vpop.permute.xlu0 %801
        %803 = vrot.lane.b32.xlu0 %v533, 92
        %v804 = vpop.permute.xlu0 %803
        %805 = vrot.lane.b32.xlu0 %v538, 92
        %v806 = vpop.permute.xlu0 %805
        %807 = vrot.lane.b32.xlu0 %v543, 92
        %v808 = vpop.permute.xlu0 %807
        %809 = vrot.lane.b32.xlu0 %v548, 92
        %v810 = vpop.permute.xlu0 %809
        %811 = vrot.lane.b32.xlu0 %v553, 92
        %v812 = vpop.permute.xlu0 %811
        %813 = vrot.lane.b32.xlu0 %v558, 92
        %v814 = vpop.permute.xlu0 %813
        %815 = vrot.lane.b32.xlu0 %v563, 92
        %v816 = vpop.permute.xlu0 %815
        %817 = vrot.lane.b32.xlu0 %v568, 92
        %v818 = vpop.permute.xlu0 %817
        %819 = vrot.lane.b32.xlu0 %v573, 92
        %v820 = vpop.permute.xlu0 %819
        %821 = vrot.lane.b32.xlu0 %v578, 92
        %v822 = vpop.permute.xlu0 %821
        %823 = vrot.lane.b32.xlu0 %v583, 92
        %v824 = vpop.permute.xlu0 %823
        %825 = vrot.lane.b32.xlu0 %v588, 92
        %v826 = vpop.permute.xlu0 %825
        %827 = vrot.lane.b32.xlu0 %v593, 92
        %v828 = vpop.permute.xlu0 %827
        %829 = vrot.lane.b32.xlu0 %v598, 92
        %v830 = vpop.permute.xlu0 %829
        %831 = vrot.lane.b32.xlu0 %v603, 92
        %v832 = vpop.permute.xlu0 %831
        %833 = vrot.lane.b32.xlu0 %v608, 92
        %v834 = vpop.permute.xlu0 %833
        %vm835 = vcmask 31744
        %v836 = vsel %vm835, %v676, 0
        %v838 = vsel %vm835, %v678, 0
        %v840 = vsel %vm835, %v680, 0
        %v842 = vsel %vm835, %v682, 0
        %v844 = vsel %vm835, %v684, 0
        %v846 = vsel %vm835, %v686, 0
        %v848 = vsel %vm835, %v688, 0
        %v850 = vsel %vm835, %v690, 0
        %v852 = vsel %vm835, %v692, 0
        %v854 = vsel %vm835, %v694, 0
        %v856 = vsel %vm835, %v696, 0
        %v858 = vsel %vm835, %v698, 0
        %v860 = vsel %vm835, %v700, 0
        %v862 = vsel %vm835, %v702, 0
        %v864 = vsel %vm835, %v704, 0
        %v866 = vsel %vm835, %v706, 0
        %v868 = vsel %vm835, %v708, 0
        %v870 = vsel %vm835, %v710, 0
        %v872 = vsel %vm835, %v712, 0
        %v874 = vsel %vm835, %v714, 0
        %v876 = vsel %vm835, %v716, 0
        %v878 = vsel %vm835, %v718, 0
        %v880 = vsel %vm835, %v720, 0
        %v882 = vsel %vm835, %v722, 0
        %v884 = vsel %vm835, %v724, 0
        %v886 = vsel %vm835, %v726, 0
        %v888 = vsel %vm835, %v728, 0
        %v890 = vsel %vm835, %v730, 0
        %v892 = vsel %vm835, %v732, 0
        %v894 = vsel %vm835, %v734, 0
        %v896 = vsel %vm835, %v736, 0
        %v898 = vsel %vm835, %v738, 0
        %v900 = vsel %vm835, %v772, 0
        %v902 = vsel %vm835, %v774, 0
        %v904 = vsel %vm835, %v776, 0
        %v906 = vsel %vm835, %v778, 0
        %v908 = vsel %vm835, %v780, 0
        %v910 = vsel %vm835, %v782, 0
        %v912 = vsel %vm835, %v784, 0
        %v914 = vsel %vm835, %v786, 0
        %v916 = vsel %vm835, %v788, 0
        %v918 = vsel %vm835, %v790, 0
        %v920 = vsel %vm835, %v792, 0
        %v922 = vsel %vm835, %v794, 0
        %v924 = vsel %vm835, %v796, 0
        %v926 = vsel %vm835, %v798, 0
        %v928 = vsel %vm835, %v800, 0
        %v930 = vsel %vm835, %v802, 0
        %v932 = vsel %vm835, %v804, 0
        %v934 = vsel %vm835, %v806, 0
        %v936 = vsel %vm835, %v808, 0
        %v938 = vsel %vm835, %v810, 0
        %v940 = vsel %vm835, %v812, 0
        %v942 = vsel %vm835, %v814, 0
        %v944 = vsel %vm835, %v816, 0
        %v946 = vsel %vm835, %v818, 0
        %v948 = vsel %vm835, %v820, 0
        %v950 = vsel %vm835, %v822, 0
        %v952 = vsel %vm835, %v824, 0
        %v954 = vsel %vm835, %v826, 0
        %v956 = vsel %vm835, %v828, 0
        %v958 = vsel %vm835, %v830, 0
        %v960 = vsel %vm835, %v832, 0
        %v962 = vsel %vm835, %v834, 0
        %964 = vmatprep.subr.mxu0 0.0
        %965 = vmatpush1.xpose.msra.mxu0 %v930
        %966 = vmatprep.subr.mxu0 0.0
        %967 = vmatpush1.xpose.msra.mxu0 %v928
        %968 = vmatprep.subr.mxu0 0.0
        %969 = vmatpush1.xpose.msra.mxu0 %v926
        %970 = vmatprep.subr.mxu0 0.0
        %971 = vmatpush1.xpose.msra.mxu0 %v924
        %972 = vmatprep.subr.mxu0 0.0
        %973 = vmatpush1.xpose.msra.mxu0 %v922
        %974 = vmatprep.subr.mxu0 0.0
        %975 = vmatpush1.xpose.msra.mxu0 %v920
        %976 = vmatprep.subr.mxu0 0.0
        %977 = vmatpush1.xpose.msra.mxu0 %v918
        %978 = vmatprep.subr.mxu0 0.0
        %979 = vmatpush1.xpose.msra.mxu0 %v916
        %980 = vmatprep.subr.mxu0 0.0
        %981 = vmatpush1.xpose.msra.mxu0 %v914
        %982 = vmatprep.subr.mxu0 0.0
        %983 = vmatpush1.xpose.msra.mxu0 %v912
        %984 = vmatprep.subr.mxu0 0.0
        %985 = vmatpush1.xpose.msra.mxu0 %v910
        %986 = vmatprep.subr.mxu0 0.0
        %987 = vmatpush1.xpose.msra.mxu0 %v908
        %988 = vmatprep.subr.mxu0 0.0
        %989 = vmatpush1.xpose.msra.mxu0 %v906
        %990 = vmatprep.subr.mxu0 0.0
        %991 = vmatpush1.xpose.msra.mxu0 %v904
        %992 = vmatprep.subr.mxu0 0.0
        %993 = vmatpush1.xpose.msra.mxu0 %v902
        %994 = vmatprep.subr.mxu0 0.0
        %995 = vmatpush1.xpose.msra.mxu0 %v900
        %996 = vmatprep.subr.mxu0 0.0
        %997 = vmatpush2.xpose.msra.mxu0 %v962
        %998 = vmatprep.subr.mxu0 0.0
        %999 = vmatpush2.xpose.msra.mxu0 %v960
        %1000 = vmatprep.subr.mxu0 0.0
        %1001 = vmatpush2.xpose.msra.mxu0 %v958
        %1002 = vmatprep.subr.mxu0 0.0
        %1003 = vmatpush2.xpose.msra.mxu0 %v956
        %1004 = vmatprep.subr.mxu0 0.0
        %1005 = vmatpush2.xpose.msra.mxu0 %v954
        %1006 = vmatprep.subr.mxu0 0.0
        %1007 = vmatpush2.xpose.msra.mxu0 %v952
        %1008 = vmatprep.subr.mxu0 0.0
        %1009 = vmatpush2.xpose.msra.mxu0 %v950
        %1010 = vmatprep.subr.mxu0 0.0
        %1011 = vmatpush2.xpose.msra.mxu0 %v948
        %1012 = vmatprep.subr.mxu0 0.0
        %1013 = vmatpush2.xpose.msra.mxu0 %v946
        %1014 = vmatprep.subr.mxu0 0.0
        %1015 = vmatpush2.xpose.msra.mxu0 %v944
        %1016 = vmatprep.subr.mxu0 0.0
        %1017 = vmatpush2.xpose.msra.mxu0 %v942
        %1018 = vmatprep.subr.mxu0 0.0
        %1019 = vmatpush2.xpose.msra.mxu0 %v940
        %1020 = vmatprep.subr.mxu0 0.0
        %1021 = vmatpush2.xpose.msra.mxu0 %v938
        %1022 = vmatprep.subr.mxu0 0.0
        %1023 = vmatpush2.xpose.msra.mxu0 %v936
        %1024 = vmatprep.subr.mxu0 0.0
        %1025 = vmatpush2.xpose.msra.mxu0 %v934
        %1026 = vmatprep.subr.mxu0 0.0
        %1027 = vmatpush2.xpose.msra.mxu0 %v932
        %1028 = vmatprep.mubr.f32.mxu0 0.0
        %1029 = vmatmul.mubr.f32.gmra.mxu0 %v836
        %v1030 = vpop.f32.mrf.mxu0
        %v1031 = vadd.f32 0.0, %v1030
        %v1032 = vpop.f32.mrf.mxu0
        %v1033 = vadd.f32 0.0, %v1032
        %1034 = vmatprep.mubr.f32.mxu0 0.0
        %1035 = vmatmul.mubr.f32.gmra.mxu0 %v838
        %v1036 = vpop.f32.mrf.mxu0
        %v1037 = vadd.f32 0.0, %v1036
        %v1038 = vpop.f32.mrf.mxu0
        %v1039 = vadd.f32 0.0, %v1038
        %1040 = vmatprep.mubr.f32.mxu0 0.0
        %1041 = vmatmul.mubr.f32.gmra.mxu0 %v840
        %v1042 = vpop.f32.mrf.mxu0
        %v1043 = vadd.f32 0.0, %v1042
        %v1044 = vpop.f32.mrf.mxu0
        %v1045 = vadd.f32 0.0, %v1044
        %1046 = vmatprep.mubr.f32.mxu0 0.0
        %1047 = vmatmul.mubr.f32.gmra.mxu0 %v842
        %v1048 = vpop.f32.mrf.mxu0
        %v1049 = vadd.f32 0.0, %v1048
        %v1050 = vpop.f32.mrf.mxu0
        %v1051 = vadd.f32 0.0, %v1050
        %1052 = vmatprep.mubr.f32.mxu0 0.0
        %1053 = vmatmul.mubr.f32.gmra.mxu0 %v844
        %v1054 = vpop.f32.mrf.mxu0
        %v1055 = vadd.f32 0.0, %v1054
        %v1056 = vpop.f32.mrf.mxu0
        %v1057 = vadd.f32 0.0, %v1056
        %1058 = vmatprep.mubr.f32.mxu0 0.0
        %1059 = vmatmul.mubr.f32.gmra.mxu0 %v846
        %v1060 = vpop.f32.mrf.mxu0
        %v1061 = vadd.f32 0.0, %v1060
        %v1062 = vpop.f32.mrf.mxu0
        %v1063 = vadd.f32 0.0, %v1062
        %1064 = vmatprep.mubr.f32.mxu0 0.0
        %1065 = vmatmul.mubr.f32.gmra.mxu0 %v848
        %v1066 = vpop.f32.mrf.mxu0
        %v1067 = vadd.f32 0.0, %v1066
        %v1068 = vpop.f32.mrf.mxu0
        %v1069 = vadd.f32 0.0, %v1068
        %1070 = vmatprep.mubr.f32.mxu0 0.0
        %1071 = vmatmul.mubr.f32.gmra.mxu0 %v850
        %v1072 = vpop.f32.mrf.mxu0
        %v1073 = vadd.f32 0.0, %v1072
        %v1074 = vpop.f32.mrf.mxu0
        %v1075 = vadd.f32 0.0, %v1074
        %1076 = vmatprep.mubr.f32.mxu0 0.0
        %1077 = vmatmul.mubr.f32.gmra.mxu0 %v852
        %v1078 = vpop.f32.mrf.mxu0
        %v1079 = vadd.f32 0.0, %v1078
        %v1080 = vpop.f32.mrf.mxu0
        %v1081 = vadd.f32 0.0, %v1080
        %1082 = vmatprep.mubr.f32.mxu0 0.0
        %1083 = vmatmul.mubr.f32.gmra.mxu0 %v854
        %v1084 = vpop.f32.mrf.mxu0
        %v1085 = vadd.f32 0.0, %v1084
        %v1086 = vpop.f32.mrf.mxu0
        %v1087 = vadd.f32 0.0, %v1086
        %1088 = vmatprep.mubr.f32.mxu0 0.0
        %1089 = vmatmul.mubr.f32.gmra.mxu0 %v856
        %v1090 = vpop.f32.mrf.mxu0
        %v1091 = vadd.f32 0.0, %v1090
        %v1092 = vpop.f32.mrf.mxu0
        %v1093 = vadd.f32 0.0, %v1092
        %1094 = vmatprep.mubr.f32.mxu0 0.0
        %1095 = vmatmul.mubr.f32.gmra.mxu0 %v858
        %v1096 = vpop.f32.mrf.mxu0
        %v1097 = vadd.f32 0.0, %v1096
        %v1098 = vpop.f32.mrf.mxu0
        %v1099 = vadd.f32 0.0, %v1098
        %1100 = vmatprep.mubr.f32.mxu0 0.0
        %1101 = vmatmul.mubr.f32.gmra.mxu0 %v860
        %v1102 = vpop.f32.mrf.mxu0
        %v1103 = vadd.f32 0.0, %v1102
        %v1104 = vpop.f32.mrf.mxu0
        %v1105 = vadd.f32 0.0, %v1104
        %1106 = vmatprep.mubr.f32.mxu0 0.0
        %1107 = vmatmul.mubr.f32.gmra.mxu0 %v862
        %v1108 = vpop.f32.mrf.mxu0
        %v1109 = vadd.f32 0.0, %v1108
        %v1110 = vpop.f32.mrf.mxu0
        %v1111 = vadd.f32 0.0, %v1110
        %1112 = vmatprep.mubr.f32.mxu0 0.0
        %1113 = vmatmul.mubr.f32.gmra.mxu0 %v864
        %v1114 = vpop.f32.mrf.mxu0
        %v1115 = vadd.f32 0.0, %v1114
        %v1116 = vpop.f32.mrf.mxu0
        %v1117 = vadd.f32 0.0, %v1116
        %1118 = vmatprep.mubr.f32.mxu0 0.0
        %1119 = vmatmul.mubr.f32.gmra.mxu0 %v866
        %v1120 = vpop.f32.mrf.mxu0
        %v1121 = vadd.f32 0.0, %v1120
        %v1122 = vpop.f32.mrf.mxu0
        %v1123 = vadd.f32 0.0, %v1122
        %1124 = vmatprep.mubr.f32.mxu0 0.0
        %1125 = vmatmul.mubr.f32.gmra.mxu0 %v868
        %v1126 = vpop.f32.mrf.mxu0
        %v1127 = vadd.f32 0.0, %v1126
        %v1128 = vpop.f32.mrf.mxu0
        %v1129 = vadd.f32 0.0, %v1128
        %1130 = vmatprep.mubr.f32.mxu0 0.0
        %1131 = vmatmul.mubr.f32.gmra.mxu0 %v870
        %v1132 = vpop.f32.mrf.mxu0
        %v1133 = vadd.f32 0.0, %v1132
        %v1134 = vpop.f32.mrf.mxu0
        %v1135 = vadd.f32 0.0, %v1134
        %1136 = vmatprep.mubr.f32.mxu0 0.0
        %1137 = vmatmul.mubr.f32.gmra.mxu0 %v872
        %v1138 = vpop.f32.mrf.mxu0
        %v1139 = vadd.f32 0.0, %v1138
        %v1140 = vpop.f32.mrf.mxu0
        %v1141 = vadd.f32 0.0, %v1140
        %1142 = vmatprep.mubr.f32.mxu0 0.0
        %1143 = vmatmul.mubr.f32.gmra.mxu0 %v874
        %v1144 = vpop.f32.mrf.mxu0
        %v1145 = vadd.f32 0.0, %v1144
        %v1146 = vpop.f32.mrf.mxu0
        %v1147 = vadd.f32 0.0, %v1146
        %1148 = vmatprep.mubr.f32.mxu0 0.0
        %1149 = vmatmul.mubr.f32.gmra.mxu0 %v876
        %v1150 = vpop.f32.mrf.mxu0
        %v1151 = vadd.f32 0.0, %v1150
        %v1152 = vpop.f32.mrf.mxu0
        %v1153 = vadd.f32 0.0, %v1152
        %1154 = vmatprep.mubr.f32.mxu0 0.0
        %1155 = vmatmul.mubr.f32.gmra.mxu0 %v878
        %v1156 = vpop.f32.mrf.mxu0
        %v1157 = vadd.f32 0.0, %v1156
        %v1158 = vpop.f32.mrf.mxu0
        %v1159 = vadd.f32 0.0, %v1158
        %1160 = vmatprep.mubr.f32.mxu0 0.0
        %1161 = vmatmul.mubr.f32.gmra.mxu0 %v880
        %v1162 = vpop.f32.mrf.mxu0
        %v1163 = vadd.f32 0.0, %v1162
        %v1164 = vpop.f32.mrf.mxu0
        %v1165 = vadd.f32 0.0, %v1164
        %1166 = vmatprep.mubr.f32.mxu0 0.0
        %1167 = vmatmul.mubr.f32.gmra.mxu0 %v882
        %v1168 = vpop.f32.mrf.mxu0
        %v1169 = vadd.f32 0.0, %v1168
        %v1170 = vpop.f32.mrf.mxu0
        %v1171 = vadd.f32 0.0, %v1170
        %1172 = vmatprep.mubr.f32.mxu0 0.0
        %1173 = vmatmul.mubr.f32.gmra.mxu0 %v884
        %v1174 = vpop.f32.mrf.mxu0
        %v1175 = vadd.f32 0.0, %v1174
        %v1176 = vpop.f32.mrf.mxu0
        %v1177 = vadd.f32 0.0, %v1176
        %1178 = vmatprep.mubr.f32.mxu0 0.0
        %1179 = vmatmul.mubr.f32.gmra.mxu0 %v886
        %v1180 = vpop.f32.mrf.mxu0
        %v1181 = vadd.f32 0.0, %v1180
        %v1182 = vpop.f32.mrf.mxu0
        %v1183 = vadd.f32 0.0, %v1182
        %1184 = vmatprep.mubr.f32.mxu0 0.0
        %1185 = vmatmul.mubr.f32.gmra.mxu0 %v888
        %v1186 = vpop.f32.mrf.mxu0
        %v1187 = vadd.f32 0.0, %v1186
        %v1188 = vpop.f32.mrf.mxu0
        %v1189 = vadd.f32 0.0, %v1188
        %1190 = vmatprep.mubr.f32.mxu0 0.0
        %1191 = vmatmul.mubr.f32.gmra.mxu0 %v890
        %v1192 = vpop.f32.mrf.mxu0
        %v1193 = vadd.f32 0.0, %v1192
        %v1194 = vpop.f32.mrf.mxu0
        %v1195 = vadd.f32 0.0, %v1194
        %1196 = vmatprep.mubr.f32.mxu0 0.0
        %1197 = vmatmul.mubr.f32.gmra.mxu0 %v892
        %v1198 = vpop.f32.mrf.mxu0
        %v1199 = vadd.f32 0.0, %v1198
        %v1200 = vpop.f32.mrf.mxu0
        %v1201 = vadd.f32 0.0, %v1200
        %1202 = vmatprep.mubr.f32.mxu0 0.0
        %1203 = vmatmul.mubr.f32.gmra.mxu0 %v894
        %v1204 = vpop.f32.mrf.mxu0
        %v1205 = vadd.f32 0.0, %v1204
        %v1206 = vpop.f32.mrf.mxu0
        %v1207 = vadd.f32 0.0, %v1206
        %1208 = vmatprep.mubr.f32.mxu0 0.0
        %1209 = vmatmul.mubr.f32.gmra.mxu0 %v896
        %v1210 = vpop.f32.mrf.mxu0
        %v1211 = vadd.f32 0.0, %v1210
        %v1212 = vpop.f32.mrf.mxu0
        %v1213 = vadd.f32 0.0, %v1212
        %1214 = vmatprep.mubr.f32.mxu0 0.0
        %1215 = vmatmul.mubr.f32.gmra.mxu0 %v898
        %v1216 = vpop.f32.mrf.mxu0
        %v1217 = vadd.f32 0.0, %v1216
        %v1218 = vpop.f32.mrf.mxu0
        %v1219 = vadd.f32 0.0, %v1218
        %1220 = vdwg.mxu0
        %v1221 = vmax.f32 %v1031, %v1033
        %1222 = vmax.xlane.f32.xlu0 %v1221
        %v1223 = vpop.xlane.xlu0 %1222
        %v1224 = vmax.f32 %v1037, %v1039
        %1225 = vmax.xlane.f32.xlu0 %v1224
        %v1226 = vpop.xlane.xlu0 %1225
        %v1227 = vmax.f32 %v1043, %v1045
        %1228 = vmax.xlane.f32.xlu0 %v1227
        %v1229 = vpop.xlane.xlu0 %1228
        %v1230 = vmax.f32 %v1049, %v1051
        %1231 = vmax.xlane.f32.xlu0 %v1230
        %v1232 = vpop.xlane.xlu0 %1231
        %v1233 = vmax.f32 %v1055, %v1057
        %1234 = vmax.xlane.f32.xlu0 %v1233
        %v1235 = vpop.xlane.xlu0 %1234
        %v1236 = vmax.f32 %v1061, %v1063
        %1237 = vmax.xlane.f32.xlu0 %v1236
        %v1238 = vpop.xlane.xlu0 %1237
        %v1239 = vmax.f32 %v1067, %v1069
        %1240 = vmax.xlane.f32.xlu0 %v1239
        %v1241 = vpop.xlane.xlu0 %1240
        %v1242 = vmax.f32 %v1073, %v1075
        %1243 = vmax.xlane.f32.xlu0 %v1242
        %v1244 = vpop.xlane.xlu0 %1243
        %v1245 = vmax.f32 %v1079, %v1081
        %1246 = vmax.xlane.f32.xlu0 %v1245
        %v1247 = vpop.xlane.xlu0 %1246
        %v1248 = vmax.f32 %v1085, %v1087
        %1249 = vmax.xlane.f32.xlu0 %v1248
        %v1250 = vpop.xlane.xlu0 %1249
        %v1251 = vmax.f32 %v1091, %v1093
        %1252 = vmax.xlane.f32.xlu0 %v1251
        %v1253 = vpop.xlane.xlu0 %1252
        %v1254 = vmax.f32 %v1097, %v1099
        %1255 = vmax.xlane.f32.xlu0 %v1254
        %v1256 = vpop.xlane.xlu0 %1255
        %v1257 = vmax.f32 %v1103, %v1105
        %1258 = vmax.xlane.f32.xlu0 %v1257
        %v1259 = vpop.xlane.xlu0 %1258
        %v1260 = vmax.f32 %v1109, %v1111
        %1261 = vmax.xlane.f32.xlu0 %v1260
        %v1262 = vpop.xlane.xlu0 %1261
        %v1263 = vmax.f32 %v1115, %v1117
        %1264 = vmax.xlane.f32.xlu0 %v1263
        %v1265 = vpop.xlane.xlu0 %1264
        %v1266 = vmax.f32 %v1121, %v1123
        %1267 = vmax.xlane.f32.xlu0 %v1266
        %v1268 = vpop.xlane.xlu0 %1267
        %v1269 = vmax.f32 %v1127, %v1129
        %1270 = vmax.xlane.f32.xlu0 %v1269
        %v1271 = vpop.xlane.xlu0 %1270
        %v1272 = vmax.f32 %v1133, %v1135
        %1273 = vmax.xlane.f32.xlu0 %v1272
        %v1274 = vpop.xlane.xlu0 %1273
        %v1275 = vmax.f32 %v1139, %v1141
        %1276 = vmax.xlane.f32.xlu0 %v1275
        %v1277 = vpop.xlane.xlu0 %1276
        %v1278 = vmax.f32 %v1145, %v1147
        %1279 = vmax.xlane.f32.xlu0 %v1278
        %v1280 = vpop.xlane.xlu0 %1279
        %v1281 = vmax.f32 %v1151, %v1153
        %1282 = vmax.xlane.f32.xlu0 %v1281
        %v1283 = vpop.xlane.xlu0 %1282
        %v1284 = vmax.f32 %v1157, %v1159
        %1285 = vmax.xlane.f32.xlu0 %v1284
        %v1286 = vpop.xlane.xlu0 %1285
        %v1287 = vmax.f32 %v1163, %v1165
        %1288 = vmax.xlane.f32.xlu0 %v1287
        %v1289 = vpop.xlane.xlu0 %1288
        %v1290 = vmax.f32 %v1169, %v1171
        %1291 = vmax.xlane.f32.xlu0 %v1290
        %v1292 = vpop.xlane.xlu0 %1291
        %v1293 = vmax.f32 %v1175, %v1177
        %1294 = vmax.xlane.f32.xlu0 %v1293
        %v1295 = vpop.xlane.xlu0 %1294
        %v1296 = vmax.f32 %v1181, %v1183
        %1297 = vmax.xlane.f32.xlu0 %v1296
        %v1298 = vpop.xlane.xlu0 %1297
        %v1299 = vmax.f32 %v1187, %v1189
        %1300 = vmax.xlane.f32.xlu0 %v1299
        %v1301 = vpop.xlane.xlu0 %1300
        %v1302 = vmax.f32 %v1193, %v1195
        %1303 = vmax.xlane.f32.xlu0 %v1302
        %v1304 = vpop.xlane.xlu0 %1303
        %v1305 = vmax.f32 %v1199, %v1201
        %1306 = vmax.xlane.f32.xlu0 %v1305
        %v1307 = vpop.xlane.xlu0 %1306
        %v1308 = vmax.f32 %v1205, %v1207
        %1309 = vmax.xlane.f32.xlu0 %v1308
        %v1310 = vpop.xlane.xlu0 %1309
        %v1311 = vmax.f32 %v1211, %v1213
        %1312 = vmax.xlane.f32.xlu0 %v1311
        %v1313 = vpop.xlane.xlu0 %1312
        %v1314 = vmax.f32 %v1217, %v1219
        %1315 = vmax.xlane.f32.xlu0 %v1314
        %v1316 = vpop.xlane.xlu0 %1315
        %v1317 = vsub.f32 %v1031, %v1223
        %v1318 = vsub.f32 %v1033, %v1223
        %v1319 = vsub.f32 %v1037, %v1226
        %v1320 = vsub.f32 %v1039, %v1226
        %v1321 = vsub.f32 %v1043, %v1229
        %v1322 = vsub.f32 %v1045, %v1229
        %v1323 = vsub.f32 %v1049, %v1232
        %v1324 = vsub.f32 %v1051, %v1232
        %v1325 = vsub.f32 %v1055, %v1235
        %v1326 = vsub.f32 %v1057, %v1235
        %v1327 = vsub.f32 %v1061, %v1238
        %v1328 = vsub.f32 %v1063, %v1238
        %v1329 = vsub.f32 %v1067, %v1241
        %v1330 = vsub.f32 %v1069, %v1241
        %v1331 = vsub.f32 %v1073, %v1244
        %v1332 = vsub.f32 %v1075, %v1244
        %v1333 = vsub.f32 %v1079, %v1247
        %v1334 = vsub.f32 %v1081, %v1247
        %v1335 = vsub.f32 %v1085, %v1250
        %v1336 = vsub.f32 %v1087, %v1250
        %v1337 = vsub.f32 %v1091, %v1253
        %v1338 = vsub.f32 %v1093, %v1253
        %v1339 = vsub.f32 %v1097, %v1256
        %v1340 = vsub.f32 %v1099, %v1256
        %v1341 = vsub.f32 %v1103, %v1259
        %v1342 = vsub.f32 %v1105, %v1259
        %v1343 = vsub.f32 %v1109, %v1262
        %v1344 = vsub.f32 %v1111, %v1262
        %v1345 = vsub.f32 %v1115, %v1265
        %v1346 = vsub.f32 %v1117, %v1265
        %v1347 = vsub.f32 %v1121, %v1268
        %v1348 = vsub.f32 %v1123, %v1268
        %v1349 = vsub.f32 %v1127, %v1271
        %v1350 = vsub.f32 %v1129, %v1271
        %v1351 = vsub.f32 %v1133, %v1274
        %v1352 = vsub.f32 %v1135, %v1274
        %v1353 = vsub.f32 %v1139, %v1277
        %v1354 = vsub.f32 %v1141, %v1277
        %v1355 = vsub.f32 %v1145, %v1280
        %v1356 = vsub.f32 %v1147, %v1280
        %v1357 = vsub.f32 %v1151, %v1283
        %v1358 = vsub.f32 %v1153, %v1283
        %v1359 = vsub.f32 %v1157, %v1286
        %v1360 = vsub.f32 %v1159, %v1286
        %v1361 = vsub.f32 %v1163, %v1289
        %v1362 = vsub.f32 %v1165, %v1289
        %v1363 = vsub.f32 %v1169, %v1292
        %v1364 = vsub.f32 %v1171, %v1292
        %v1365 = vsub.f32 %v1175, %v1295
        %v1366 = vsub.f32 %v1177, %v1295
        %v1367 = vsub.f32 %v1181, %v1298
        %v1368 = vsub.f32 %v1183, %v1298
        %v1369 = vsub.f32 %v1187, %v1301
        %v1370 = vsub.f32 %v1189, %v1301
        %v1371 = vsub.f32 %v1193, %v1304
        %v1372 = vsub.f32 %v1195, %v1304
        %v1373 = vsub.f32 %v1199, %v1307
        %v1374 = vsub.f32 %v1201, %v1307
        %v1375 = vsub.f32 %v1205, %v1310
        %v1376 = vsub.f32 %v1207, %v1310
        %v1377 = vsub.f32 %v1211, %v1313
        %v1378 = vsub.f32 %v1213, %v1313
        %v1379 = vsub.f32 %v1217, %v1316
        %v1380 = vsub.f32 %v1219, %v1316
        %v1381 = vmul.f32 %v1317, 1.442695
        %v1382 = vpow.pop %v1381
        %v1383 = vmul.f32 %v1318, 1.442695
        %v1384 = vpow.pop %v1383
        %v1385 = vmul.f32 %v1319, 1.442695
        %v1386 = vpow.pop %v1385
        %v1387 = vmul.f32 %v1320, 1.442695
        %v1388 = vpow.pop %v1387
        %v1389 = vmul.f32 %v1321, 1.442695
        %v1390 = vpow.pop %v1389
        %v1391 = vmul.f32 %v1322, 1.442695
        %v1392 = vpow.pop %v1391
        %v1393 = vmul.f32 %v1323, 1.442695
        %v1394 = vpow.pop %v1393
        %v1395 = vmul.f32 %v1324, 1.442695
        %v1396 = vpow.pop %v1395
        %v1397 = vmul.f32 %v1325, 1.442695
        %v1398 = vpow.pop %v1397
        %v1399 = vmul.f32 %v1326, 1.442695
        %v1400 = vpow.pop %v1399
        %v1401 = vmul.f32 %v1327, 1.442695
        %v1402 = vpow.pop %v1401
        %v1403 = vmul.f32 %v1328, 1.442695
        %v1404 = vpow.pop %v1403
        %v1405 = vmul.f32 %v1329, 1.442695
        %v1406 = vpow.pop %v1405
        %v1407 = vmul.f32 %v1330, 1.442695
        %v1408 = vpow.pop %v1407
        %v1409 = vmul.f32 %v1331, 1.442695
        %v1410 = vpow.pop %v1409
        %v1411 = vmul.f32 %v1332, 1.442695
        %v1412 = vpow.pop %v1411
        %v1413 = vmul.f32 %v1333, 1.442695
        %v1414 = vpow.pop %v1413
        %v1415 = vmul.f32 %v1334, 1.442695
        %v1416 = vpow.pop %v1415
        %v1417 = vmul.f32 %v1335, 1.442695
        %v1418 = vpow.pop %v1417
        %v1419 = vmul.f32 %v1336, 1.442695
        %v1420 = vpow.pop %v1419
        %v1421 = vmul.f32 %v1337, 1.442695
        %v1422 = vpow.pop %v1421
        %v1423 = vmul.f32 %v1338, 1.442695
        %v1424 = vpow.pop %v1423
        %v1425 = vmul.f32 %v1339, 1.442695
        %v1426 = vpow.pop %v1425
        %v1427 = vmul.f32 %v1340, 1.442695
        %v1428 = vpow.pop %v1427
        %v1429 = vmul.f32 %v1341, 1.442695
        %v1430 = vpow.pop %v1429
        %v1431 = vmul.f32 %v1342, 1.442695
        %v1432 = vpow.pop %v1431
        %v1433 = vmul.f32 %v1343, 1.442695
        %v1434 = vpow.pop %v1433
        %v1435 = vmul.f32 %v1344, 1.442695
        %v1436 = vpow.pop %v1435
        %v1437 = vmul.f32 %v1345, 1.442695
        %v1438 = vpow.pop %v1437
        %v1439 = vmul.f32 %v1346, 1.442695
        %v1440 = vpow.pop %v1439
        %v1441 = vmul.f32 %v1347, 1.442695
        %v1442 = vpow.pop %v1441
        %v1443 = vmul.f32 %v1348, 1.442695
        %v1444 = vpow.pop %v1443
        %v1445 = vmul.f32 %v1349, 1.442695
        %v1446 = vpow.pop %v1445
        %v1447 = vmul.f32 %v1350, 1.442695
        %v1448 = vpow.pop %v1447
        %v1449 = vmul.f32 %v1351, 1.442695
        %v1450 = vpow.pop %v1449
        %v1451 = vmul.f32 %v1352, 1.442695
        %v1452 = vpow.pop %v1451
        %v1453 = vmul.f32 %v1353, 1.442695
        %v1454 = vpow.pop %v1453
        %v1455 = vmul.f32 %v1354, 1.442695
        %v1456 = vpow.pop %v1455
        %v1457 = vmul.f32 %v1355, 1.442695
        %v1458 = vpow.pop %v1457
        %v1459 = vmul.f32 %v1356, 1.442695
        %v1460 = vpow.pop %v1459
        %v1461 = vmul.f32 %v1357, 1.442695
        %v1462 = vpow.pop %v1461
        %v1463 = vmul.f32 %v1358, 1.442695
        %v1464 = vpow.pop %v1463
        %v1465 = vmul.f32 %v1359, 1.442695
        %v1466 = vpow.pop %v1465
        %v1467 = vmul.f32 %v1360, 1.442695
        %v1468 = vpow.pop %v1467
        %v1469 = vmul.f32 %v1361, 1.442695
        %v1470 = vpow.pop %v1469
        %v1471 = vmul.f32 %v1362, 1.442695
        %v1472 = vpow.pop %v1471
        %v1473 = vmul.f32 %v1363, 1.442695
        %v1474 = vpow.pop %v1473
        %v1475 = vmul.f32 %v1364, 1.442695
        %v1476 = vpow.pop %v1475
        %v1477 = vmul.f32 %v1365, 1.442695
        %v1478 = vpow.pop %v1477
        %v1479 = vmul.f32 %v1366, 1.442695
        %v1480 = vpow.pop %v1479
        %v1481 = vmul.f32 %v1367, 1.442695
        %v1482 = vpow.pop %v1481
        %v1483 = vmul.f32 %v1368, 1.442695
        %v1484 = vpow.pop %v1483
        %v1485 = vmul.f32 %v1369, 1.442695
        %v1486 = vpow.pop %v1485
        %v1487 = vmul.f32 %v1370, 1.442695
        %v1488 = vpow.pop %v1487
        %v1489 = vmul.f32 %v1371, 1.442695
        %v1490 = vpow.pop %v1489
        %v1491 = vmul.f32 %v1372, 1.442695
        %v1492 = vpow.pop %v1491
        %v1493 = vmul.f32 %v1373, 1.442695
        %v1494 = vpow.pop %v1493
        %v1495 = vmul.f32 %v1374, 1.442695
        %v1496 = vpow.pop %v1495
        %v1497 = vmul.f32 %v1375, 1.442695
        %v1498 = vpow.pop %v1497
        %v1499 = vmul.f32 %v1376, 1.442695
        %v1500 = vpow.pop %v1499
        %v1501 = vmul.f32 %v1377, 1.442695
        %v1502 = vpow.pop %v1501
        %v1503 = vmul.f32 %v1378, 1.442695
        %v1504 = vpow.pop %v1503
        %v1505 = vmul.f32 %v1379, 1.442695
        %v1506 = vpow.pop %v1505
        %v1507 = vmul.f32 %v1380, 1.442695
        %v1508 = vpow.pop %v1507
        %1509 = vmatprep.subr.mxu0 0.0
        %1510 = vmatpush1.msra.mxu0 %v528
        %1511 = vmatprep.subr.mxu0 0.0
        %1512 = vmatpush1.msra.mxu0 %v523
        %1513 = vmatprep.subr.mxu0 0.0
        %1514 = vmatpush1.msra.mxu0 %v518
        %1515 = vmatprep.subr.mxu0 0.0
        %1516 = vmatpush1.msra.mxu0 %v513
        %1517 = vmatprep.subr.mxu0 0.0
        %1518 = vmatpush1.msra.mxu0 %v508
        %1519 = vmatprep.subr.mxu0 0.0
        %1520 = vmatpush1.msra.mxu0 %v503
        %1521 = vmatprep.subr.mxu0 0.0
        %1522 = vmatpush1.msra.mxu0 %v498
        %1523 = vmatprep.subr.mxu0 0.0
        %1524 = vmatpush1.msra.mxu0 %v493
        %1525 = vmatprep.subr.mxu0 0.0
        %1526 = vmatpush1.msra.mxu0 %v488
        %1527 = vmatprep.subr.mxu0 0.0
        %1528 = vmatpush1.msra.mxu0 %v483
        %1529 = vmatprep.subr.mxu0 0.0
        %1530 = vmatpush1.msra.mxu0 %v478
        %1531 = vmatprep.subr.mxu0 0.0
        %1532 = vmatpush1.msra.mxu0 %v473
        %1533 = vmatprep.subr.mxu0 0.0
        %1534 = vmatpush1.msra.mxu0 %v468
        %1535 = vmatprep.subr.mxu0 0.0
        %1536 = vmatpush1.msra.mxu0 %v463
        %1537 = vmatprep.subr.mxu0 0.0
        %1538 = vmatpush1.msra.mxu0 %v458
        %1539 = vmatprep.subr.mxu0 0.0
        %1540 = vmatpush1.msra.mxu0 %v453
        %1541 = vmatprep.subr.mxu0 0.0
        %1542 = vmatpush2.msra.mxu0 %v608
        %1543 = vmatprep.subr.mxu0 0.0
        %1544 = vmatpush2.msra.mxu0 %v603
        %1545 = vmatprep.subr.mxu0 0.0
        %1546 = vmatpush2.msra.mxu0 %v598
        %1547 = vmatprep.subr.mxu0 0.0
        %1548 = vmatpush2.msra.mxu0 %v593
        %1549 = vmatprep.subr.mxu0 0.0
        %1550 = vmatpush2.msra.mxu0 %v588
        %1551 = vmatprep.subr.mxu0 0.0
        %1552 = vmatpush2.msra.mxu0 %v583
        %1553 = vmatprep.subr.mxu0 0.0
        %1554 = vmatpush2.msra.mxu0 %v578
        %1555 = vmatprep.subr.mxu0 0.0
        %1556 = vmatpush2.msra.mxu0 %v573
        %1557 = vmatprep.subr.mxu0 0.0
        %1558 = vmatpush2.msra.mxu0 %v568
        %1559 = vmatprep.subr.mxu0 0.0
        %1560 = vmatpush2.msra.mxu0 %v563
        %1561 = vmatprep.subr.mxu0 0.0
        %1562 = vmatpush2.msra.mxu0 %v558
        %1563 = vmatprep.subr.mxu0 0.0
        %1564 = vmatpush2.msra.mxu0 %v553
        %1565 = vmatprep.subr.mxu0 0.0
        %1566 = vmatpush2.msra.mxu0 %v548
        %1567 = vmatprep.subr.mxu0 0.0
        %1568 = vmatpush2.msra.mxu0 %v543
        %1569 = vmatprep.subr.mxu0 0.0
        %1570 = vmatpush2.msra.mxu0 %v538
        %1571 = vmatprep.subr.mxu0 0.0
        %1572 = vmatpush2.msra.mxu0 %v533
        %1573 = vmatprep.mubr.f32.mxu0 %v1384
        %1574 = vmatmul.mubr.f32.gmra.mxu0 %v1382
        %v1575 = vpop.f32.mrf.mxu0
        %v1576 = vadd.f32 0.0, %v1575
        %v1577 = vpop.f32.mrf.mxu0
        %1578 = vmatprep.mubr.f32.mxu0 %v1388
        %1579 = vmatmul.mubr.f32.gmra.mxu0 %v1386
        %v1580 = vpop.f32.mrf.mxu0
        %v1581 = vadd.f32 0.0, %v1580
        %v1582 = vpop.f32.mrf.mxu0
        %1583 = vmatprep.mubr.f32.mxu0 %v1392
        %1584 = vmatmul.mubr.f32.gmra.mxu0 %v1390
        %v1585 = vpop.f32.mrf.mxu0
        %v1586 = vadd.f32 0.0, %v1585
        %v1587 = vpop.f32.mrf.mxu0
        %1588 = vmatprep.mubr.f32.mxu0 %v1396
        %1589 = vmatmul.mubr.f32.gmra.mxu0 %v1394
        %v1590 = vpop.f32.mrf.mxu0
        %v1591 = vadd.f32 0.0, %v1590
        %v1592 = vpop.f32.mrf.mxu0
        %1593 = vmatprep.mubr.f32.mxu0 %v1400
        %1594 = vmatmul.mubr.f32.gmra.mxu0 %v1398
        %v1595 = vpop.f32.mrf.mxu0
        %v1596 = vadd.f32 0.0, %v1595
        %v1597 = vpop.f32.mrf.mxu0
        %1598 = vmatprep.mubr.f32.mxu0 %v1404
        %1599 = vmatmul.mubr.f32.gmra.mxu0 %v1402
        %v1600 = vpop.f32.mrf.mxu0
        %v1601 = vadd.f32 0.0, %v1600
        %v1602 = vpop.f32.mrf.mxu0
        %1603 = vmatprep.mubr.f32.mxu0 %v1408
        %1604 = vmatmul.mubr.f32.gmra.mxu0 %v1406
        %v1605 = vpop.f32.mrf.mxu0
        %v1606 = vadd.f32 0.0, %v1605
        %v1607 = vpop.f32.mrf.mxu0
        %1608 = vmatprep.mubr.f32.mxu0 %v1412
        %1609 = vmatmul.mubr.f32.gmra.mxu0 %v1410
        %v1610 = vpop.f32.mrf.mxu0
        %v1611 = vadd.f32 0.0, %v1610
        %v1612 = vpop.f32.mrf.mxu0
        %1613 = vmatprep.mubr.f32.mxu0 %v1416
        %1614 = vmatmul.mubr.f32.gmra.mxu0 %v1414
        %v1615 = vpop.f32.mrf.mxu0
        %v1616 = vadd.f32 0.0, %v1615
        %v1617 = vpop.f32.mrf.mxu0
        %1618 = vmatprep.mubr.f32.mxu0 %v1420
        %1619 = vmatmul.mubr.f32.gmra.mxu0 %v1418
        %v1620 = vpop.f32.mrf.mxu0
        %v1621 = vadd.f32 0.0, %v1620
        %v1622 = vpop.f32.mrf.mxu0
        %1623 = vmatprep.mubr.f32.mxu0 %v1424
        %1624 = vmatmul.mubr.f32.gmra.mxu0 %v1422
        %v1625 = vpop.f32.mrf.mxu0
        %v1626 = vadd.f32 0.0, %v1625
        %v1627 = vpop.f32.mrf.mxu0
        %1628 = vmatprep.mubr.f32.mxu0 %v1428
        %1629 = vmatmul.mubr.f32.gmra.mxu0 %v1426
        %v1630 = vpop.f32.mrf.mxu0
        %v1631 = vadd.f32 0.0, %v1630
        %v1632 = vpop.f32.mrf.mxu0
        %1633 = vmatprep.mubr.f32.mxu0 %v1432
        %1634 = vmatmul.mubr.f32.gmra.mxu0 %v1430
        %v1635 = vpop.f32.mrf.mxu0
        %v1636 = vadd.f32 0.0, %v1635
        %v1637 = vpop.f32.mrf.mxu0
        %1638 = vmatprep.mubr.f32.mxu0 %v1436
        %1639 = vmatmul.mubr.f32.gmra.mxu0 %v1434
        %v1640 = vpop.f32.mrf.mxu0
        %v1641 = vadd.f32 0.0, %v1640
        %v1642 = vpop.f32.mrf.mxu0
        %1643 = vmatprep.mubr.f32.mxu0 %v1440
        %1644 = vmatmul.mubr.f32.gmra.mxu0 %v1438
        %v1645 = vpop.f32.mrf.mxu0
        %v1646 = vadd.f32 0.0, %v1645
        %v1647 = vpop.f32.mrf.mxu0
        %1648 = vmatprep.mubr.f32.mxu0 %v1444
        %1649 = vmatmul.mubr.f32.gmra.mxu0 %v1442
        %v1650 = vpop.f32.mrf.mxu0
        %v1651 = vadd.f32 0.0, %v1650
        %v1652 = vpop.f32.mrf.mxu0
        %1653 = vmatprep.mubr.f32.mxu0 %v1448
        %1654 = vmatmul.mubr.f32.gmra.mxu0 %v1446
        %v1655 = vpop.f32.mrf.mxu0
        %v1656 = vadd.f32 0.0, %v1655
        %v1657 = vpop.f32.mrf.mxu0
        %1658 = vmatprep.mubr.f32.mxu0 %v1452
        %1659 = vmatmul.mubr.f32.gmra.mxu0 %v1450
        %v1660 = vpop.f32.mrf.mxu0
        %v1661 = vadd.f32 0.0, %v1660
        %v1662 = vpop.f32.mrf.mxu0
        %1663 = vmatprep.mubr.f32.mxu0 %v1456
        %1664 = vmatmul.mubr.f32.gmra.mxu0 %v1454
        %v1665 = vpop.f32.mrf.mxu0
        %v1666 = vadd.f32 0.0, %v1665
        %v1667 = vpop.f32.mrf.mxu0
        %1668 = vmatprep.mubr.f32.mxu0 %v1460
        %1669 = vmatmul.mubr.f32.gmra.mxu0 %v1458
        %v1670 = vpop.f32.mrf.mxu0
        %v1671 = vadd.f32 0.0, %v1670
        %v1672 = vpop.f32.mrf.mxu0
        %1673 = vmatprep.mubr.f32.mxu0 %v1464
        %1674 = vmatmul.mubr.f32.gmra.mxu0 %v1462
        %v1675 = vpop.f32.mrf.mxu0
        %v1676 = vadd.f32 0.0, %v1675
        %v1677 = vpop.f32.mrf.mxu0
        %1678 = vmatprep.mubr.f32.mxu0 %v1468
        %1679 = vmatmul.mubr.f32.gmra.mxu0 %v1466
        %v1680 = vpop.f32.mrf.mxu0
        %v1681 = vadd.f32 0.0, %v1680
        %v1682 = vpop.f32.mrf.mxu0
        %1683 = vmatprep.mubr.f32.mxu0 %v1472
        %1684 = vmatmul.mubr.f32.gmra.mxu0 %v1470
        %v1685 = vpop.f32.mrf.mxu0
        %v1686 = vadd.f32 0.0, %v1685
        %v1687 = vpop.f32.mrf.mxu0
        %1688 = vmatprep.mubr.f32.mxu0 %v1476
        %1689 = vmatmul.mubr.f32.gmra.mxu0 %v1474
        %v1690 = vpop.f32.mrf.mxu0
        %v1691 = vadd.f32 0.0, %v1690
        %v1692 = vpop.f32.mrf.mxu0
        %1693 = vmatprep.mubr.f32.mxu0 %v1480
        %1694 = vmatmul.mubr.f32.gmra.mxu0 %v1478
        %v1695 = vpop.f32.mrf.mxu0
        %v1696 = vadd.f32 0.0, %v1695
        %v1697 = vpop.f32.mrf.mxu0
        %1698 = vmatprep.mubr.f32.mxu0 %v1484
        %1699 = vmatmul.mubr.f32.gmra.mxu0 %v1482
        %v1700 = vpop.f32.mrf.mxu0
        %v1701 = vadd.f32 0.0, %v1700
        %v1702 = vpop.f32.mrf.mxu0
        %1703 = vmatprep.mubr.f32.mxu0 %v1488
        %1704 = vmatmul.mubr.f32.gmra.mxu0 %v1486
        %v1705 = vpop.f32.mrf.mxu0
        %v1706 = vadd.f32 0.0, %v1705
        %v1707 = vpop.f32.mrf.mxu0
        %1708 = vmatprep.mubr.f32.mxu0 %v1492
        %1709 = vmatmul.mubr.f32.gmra.mxu0 %v1490
        %v1710 = vpop.f32.mrf.mxu0
        %v1711 = vadd.f32 0.0, %v1710
        %v1712 = vpop.f32.mrf.mxu0
        %1713 = vmatprep.mubr.f32.mxu0 %v1496
        %1714 = vmatmul.mubr.f32.gmra.mxu0 %v1494
        %v1715 = vpop.f32.mrf.mxu0
        %v1716 = vadd.f32 0.0, %v1715
        %v1717 = vpop.f32.mrf.mxu0
        %1718 = vmatprep.mubr.f32.mxu0 %v1500
        %1719 = vmatmul.mubr.f32.gmra.mxu0 %v1498
        %v1720 = vpop.f32.mrf.mxu0
        %v1721 = vadd.f32 0.0, %v1720
        %v1722 = vpop.f32.mrf.mxu0
        %1723 = vmatprep.mubr.f32.mxu0 %v1504
        %1724 = vmatmul.mubr.f32.gmra.mxu0 %v1502
        %v1725 = vpop.f32.mrf.mxu0
        %v1726 = vadd.f32 0.0, %v1725
        %v1727 = vpop.f32.mrf.mxu0
        %1728 = vmatprep.mubr.f32.mxu0 %v1508
        %1729 = vmatmul.mubr.f32.gmra.mxu0 %v1506
        %v1730 = vpop.f32.mrf.mxu0
        %v1731 = vadd.f32 0.0, %v1730
        %v1732 = vpop.f32.mrf.mxu0
        %1733 = vdwg.mxu0
        %v1734 = vadd.f32 %v1382, %v1384
        %1735 = vadd.xlane.f32.xlu0 %v1734
        %v1736 = vpop.xlane.xlu0 %1735
        %v1737 = vadd.f32 %v1386, %v1388
        %1738 = vadd.xlane.f32.xlu0 %v1737
        %v1739 = vpop.xlane.xlu0 %1738
        %v1740 = vadd.f32 %v1390, %v1392
        %1741 = vadd.xlane.f32.xlu0 %v1740
        %v1742 = vpop.xlane.xlu0 %1741
        %v1743 = vadd.f32 %v1394, %v1396
        %1744 = vadd.xlane.f32.xlu0 %v1743
        %v1745 = vpop.xlane.xlu0 %1744
        %v1746 = vadd.f32 %v1398, %v1400
        %1747 = vadd.xlane.f32.xlu0 %v1746
        %v1748 = vpop.xlane.xlu0 %1747
        %v1749 = vadd.f32 %v1402, %v1404
        %1750 = vadd.xlane.f32.xlu0 %v1749
        %v1751 = vpop.xlane.xlu0 %1750
        %v1752 = vadd.f32 %v1406, %v1408
        %1753 = vadd.xlane.f32.xlu0 %v1752
        %v1754 = vpop.xlane.xlu0 %1753
        %v1755 = vadd.f32 %v1410, %v1412
        %1756 = vadd.xlane.f32.xlu0 %v1755
        %v1757 = vpop.xlane.xlu0 %1756
        %v1758 = vadd.f32 %v1414, %v1416
        %1759 = vadd.xlane.f32.xlu0 %v1758
        %v1760 = vpop.xlane.xlu0 %1759
        %v1761 = vadd.f32 %v1418, %v1420
        %1762 = vadd.xlane.f32.xlu0 %v1761
        %v1763 = vpop.xlane.xlu0 %1762
        %v1764 = vadd.f32 %v1422, %v1424
        %1765 = vadd.xlane.f32.xlu0 %v1764
        %v1766 = vpop.xlane.xlu0 %1765
        %v1767 = vadd.f32 %v1426, %v1428
        %1768 = vadd.xlane.f32.xlu0 %v1767
        %v1769 = vpop.xlane.xlu0 %1768
        %v1770 = vadd.f32 %v1430, %v1432
        %1771 = vadd.xlane.f32.xlu0 %v1770
        %v1772 = vpop.xlane.xlu0 %1771
        %v1773 = vadd.f32 %v1434, %v1436
        %1774 = vadd.xlane.f32.xlu0 %v1773
        %v1775 = vpop.xlane.xlu0 %1774
        %v1776 = vadd.f32 %v1438, %v1440
        %1777 = vadd.xlane.f32.xlu0 %v1776
        %v1778 = vpop.xlane.xlu0 %1777
        %v1779 = vadd.f32 %v1442, %v1444
        %1780 = vadd.xlane.f32.xlu0 %v1779
        %v1781 = vpop.xlane.xlu0 %1780
        %v1782 = vadd.f32 %v1446, %v1448
        %1783 = vadd.xlane.f32.xlu0 %v1782
        %v1784 = vpop.xlane.xlu0 %1783
        %v1785 = vadd.f32 %v1450, %v1452
        %1786 = vadd.xlane.f32.xlu0 %v1785
        %v1787 = vpop.xlane.xlu0 %1786
        %v1788 = vadd.f32 %v1454, %v1456
        %1789 = vadd.xlane.f32.xlu0 %v1788
        %v1790 = vpop.xlane.xlu0 %1789
        %v1791 = vadd.f32 %v1458, %v1460
        %1792 = vadd.xlane.f32.xlu0 %v1791
        %v1793 = vpop.xlane.xlu0 %1792
        %v1794 = vadd.f32 %v1462, %v1464
        %1795 = vadd.xlane.f32.xlu0 %v1794
        %v1796 = vpop.xlane.xlu0 %1795
        %v1797 = vadd.f32 %v1466, %v1468
        %1798 = vadd.xlane.f32.xlu0 %v1797
        %v1799 = vpop.xlane.xlu0 %1798
        %v1800 = vadd.f32 %v1470, %v1472
        %1801 = vadd.xlane.f32.xlu0 %v1800
        %v1802 = vpop.xlane.xlu0 %1801
        %v1803 = vadd.f32 %v1474, %v1476
        %1804 = vadd.xlane.f32.xlu0 %v1803
        %v1805 = vpop.xlane.xlu0 %1804
        %v1806 = vadd.f32 %v1478, %v1480
        %1807 = vadd.xlane.f32.xlu0 %v1806
        %v1808 = vpop.xlane.xlu0 %1807
        %v1809 = vadd.f32 %v1482, %v1484
        %1810 = vadd.xlane.f32.xlu0 %v1809
        %v1811 = vpop.xlane.xlu0 %1810
        %v1812 = vadd.f32 %v1486, %v1488
        %1813 = vadd.xlane.f32.xlu0 %v1812
        %v1814 = vpop.xlane.xlu0 %1813
        %v1815 = vadd.f32 %v1490, %v1492
        %1816 = vadd.xlane.f32.xlu0 %v1815
        %v1817 = vpop.xlane.xlu0 %1816
        %v1818 = vadd.f32 %v1494, %v1496
        %1819 = vadd.xlane.f32.xlu0 %v1818
        %v1820 = vpop.xlane.xlu0 %1819
        %v1821 = vadd.f32 %v1498, %v1500
        %1822 = vadd.xlane.f32.xlu0 %v1821
        %v1823 = vpop.xlane.xlu0 %1822
        %v1824 = vadd.f32 %v1502, %v1504
        %1825 = vadd.xlane.f32.xlu0 %v1824
        %v1826 = vpop.xlane.xlu0 %1825
        %v1827 = vadd.f32 %v1506, %v1508
        %1828 = vadd.xlane.f32.xlu0 %v1827
        %v1829 = vpop.xlane.xlu0 %1828
        %v1830 = vrcp.pop %v1736
        %v1831 = vmul.f32 1.0, %v1830
        %v1832 = vrcp.pop %v1739
        %v1833 = vmul.f32 1.0, %v1832
        %v1834 = vrcp.pop %v1742
        %v1835 = vmul.f32 1.0, %v1834
        %v1836 = vrcp.pop %v1745
        %v1837 = vmul.f32 1.0, %v1836
        %v1838 = vrcp.pop %v1748
        %v1839 = vmul.f32 1.0, %v1838
        %v1840 = vrcp.pop %v1751
        %v1841 = vmul.f32 1.0, %v1840
        %v1842 = vrcp.pop %v1754
        %v1843 = vmul.f32 1.0, %v1842
        %v1844 = vrcp.pop %v1757
        %v1845 = vmul.f32 1.0, %v1844
        %v1846 = vrcp.pop %v1760
        %v1847 = vmul.f32 1.0, %v1846
        %v1848 = vrcp.pop %v1763
        %v1849 = vmul.f32 1.0, %v1848
        %v1850 = vrcp.pop %v1766
        %v1851 = vmul.f32 1.0, %v1850
        %v1852 = vrcp.pop %v1769
        %v1853 = vmul.f32 1.0, %v1852
        %v1854 = vrcp.pop %v1772
        %v1855 = vmul.f32 1.0, %v1854
        %v1856 = vrcp.pop %v1775
        %v1857 = vmul.f32 1.0, %v1856
        %v1858 = vrcp.pop %v1778
        %v1859 = vmul.f32 1.0, %v1858
        %v1860 = vrcp.pop %v1781
        %v1861 = vmul.f32 1.0, %v1860
        %v1862 = vrcp.pop %v1784
        %v1863 = vmul.f32 1.0, %v1862
        %v1864 = vrcp.pop %v1787
        %v1865 = vmul.f32 1.0, %v1864
        %v1866 = vrcp.pop %v1790
        %v1867 = vmul.f32 1.0, %v1866
        %v1868 = vrcp.pop %v1793
        %v1869 = vmul.f32 1.0, %v1868
        %v1870 = vrcp.pop %v1796
        %v1871 = vmul.f32 1.0, %v1870
        %v1872 = vrcp.pop %v1799
        %v1873 = vmul.f32 1.0, %v1872
        %v1874 = vrcp.pop %v1802
        %v1875 = vmul.f32 1.0, %v1874
        %v1876 = vrcp.pop %v1805
        %v1877 = vmul.f32 1.0, %v1876
        %v1878 = vrcp.pop %v1808
        %v1879 = vmul.f32 1.0, %v1878
        %v1880 = vrcp.pop %v1811
        %v1881 = vmul.f32 1.0, %v1880
        %v1882 = vrcp.pop %v1814
        %v1883 = vmul.f32 1.0, %v1882
        %v1884 = vrcp.pop %v1817
        %v1885 = vmul.f32 1.0, %v1884
        %v1886 = vrcp.pop %v1820
        %v1887 = vmul.f32 1.0, %v1886
        %v1888 = vrcp.pop %v1823
        %v1889 = vmul.f32 1.0, %v1888
        %v1890 = vrcp.pop %v1826
        %v1891 = vmul.f32 1.0, %v1890
        %v1892 = vrcp.pop %v1829
        %v1893 = vmul.f32 1.0, %v1892
        %v1894 = vmul.f32 %v1576, %v1831
        %v1895 = vmul.f32 %v1581, %v1833
        %v1896 = vmul.f32 %v1586, %v1835
        %v1897 = vmul.f32 %v1591, %v1837
        %v1898 = vmul.f32 %v1596, %v1839
        %v1899 = vmul.f32 %v1601, %v1841
        %v1900 = vmul.f32 %v1606, %v1843
        %v1901 = vmul.f32 %v1611, %v1845
        %v1902 = vmul.f32 %v1616, %v1847
        %v1903 = vmul.f32 %v1621, %v1849
        %v1904 = vmul.f32 %v1626, %v1851
        %v1905 = vmul.f32 %v1631, %v1853
        %v1906 = vmul.f32 %v1636, %v1855
        %v1907 = vmul.f32 %v1641, %v1857
        %v1908 = vmul.f32 %v1646, %v1859
        %v1909 = vmul.f32 %v1651, %v1861
        %v1910 = vmul.f32 %v1656, %v1863
        %v1911 = vmul.f32 %v1661, %v1865
        %v1912 = vmul.f32 %v1666, %v1867
        %v1913 = vmul.f32 %v1671, %v1869
        %v1914 = vmul.f32 %v1676, %v1871
        %v1915 = vmul.f32 %v1681, %v1873
        %v1916 = vmul.f32 %v1686, %v1875
        %v1917 = vmul.f32 %v1691, %v1877
        %v1918 = vmul.f32 %v1696, %v1879
        %v1919 = vmul.f32 %v1701, %v1881
        %v1920 = vmul.f32 %v1706, %v1883
        %v1921 = vmul.f32 %v1711, %v1885
        %v1922 = vmul.f32 %v1716, %v1887
        %v1923 = vmul.f32 %v1721, %v1889
        %v1924 = vmul.f32 %v1726, %v1891
        %v1925 = vmul.f32 %v1731, %v1893
        %v1926 = vld [vmem:[%s3] sm:$0xff]
        %v1927 = vld [vmem:[%s3 + $0x8] sm:$0xff]
        %v1928 = vld [vmem:[%s3 + $0x10] sm:$0xff]
        %v1929 = vld [vmem:[%s3 + $0x18] sm:$0xff]
        %v1930 = vld [vmem:[%s3 + $0x20] sm:$0xff]
        %v1931 = vld [vmem:[%s3 + $0x28] sm:$0xff]
        %v1932 = vld [vmem:[%s3 + $0x30] sm:$0xff]
        %v1933 = vld [vmem:[%s3 + $0x38] sm:$0xff]
        %v1934 = vld [vmem:[%s3 + $0x40] sm:$0xff]
        %v1935 = vld [vmem:[%s3 + $0x48] sm:$0xff]
        %v1936 = vld [vmem:[%s3 + $0x50] sm:$0xff]
        %v1937 = vld [vmem:[%s3 + $0x58] sm:$0xff]
        %v1938 = vld [vmem:[%s4] sm:$0x7]
        %v1940 = vlaneseq
        %v1941 = vshrl.u32 %v1940, 7
        %v1942 = vsub.s32 0, %v1941
        %v1943 = vrot.slane %v1938, %v1942
        %v1944 = vlaneseq
        %v1945 = vshrl.u32 %v1944, 7
        %v1946 = vsub.s32 1, %v1945
        %v1947 = vrot.slane %v1938, %v1946
        %v1948 = vlaneseq
        %v1949 = vshrl.u32 %v1948, 7
        %v1950 = vsub.s32 2, %v1949
        %v1951 = vrot.slane %v1938, %v1950
        %vm1955 = vcmask 261120
        %v1957 = vsel %vm1955, %v1894, 0
        %v1960 = vsel %vm1955, %v1895, 0
        %v1963 = vsel %vm1955, %v1896, 0
        %v1966 = vsel %vm1955, %v1897, 0
        %v1969 = vsel %vm1955, %v1898, 0
        %v1972 = vsel %vm1955, %v1899, 0
        %v1975 = vsel %vm1955, %v1900, 0
        %v1978 = vsel %vm1955, %v1901, 0
        %v1981 = vsel %vm1955, %v1902, 0
        %v1984 = vsel %vm1955, %v1903, 0
        %v1987 = vsel %vm1955, %v1904, 0
        %v1990 = vsel %vm1955, %v1905, 0
        %v1993 = vsel %vm1955, %v1906, 0
        %v1996 = vsel %vm1955, %v1907, 0
        %v1999 = vsel %vm1955, %v1908, 0
        %v2002 = vsel %vm1955, %v1909, 0
        %v2005 = vsel %vm1955, %v1910, 0
        %v2008 = vsel %vm1955, %v1911, 0
        %v2011 = vsel %vm1955, %v1912, 0
        %v2014 = vsel %vm1955, %v1913, 0
        %v2017 = vsel %vm1955, %v1914, 0
        %v2020 = vsel %vm1955, %v1915, 0
        %v2023 = vsel %vm1955, %v1916, 0
        %v2026 = vsel %vm1955, %v1917, 0
        %v2029 = vsel %vm1955, %v1918, 0
        %v2032 = vsel %vm1955, %v1919, 0
        %v2035 = vsel %vm1955, %v1920, 0
        %v2038 = vsel %vm1955, %v1921, 0
        %v2041 = vsel %vm1955, %v1922, 0
        %v2044 = vsel %vm1955, %v1923, 0
        %v2047 = vsel %vm1955, %v1924, 0
        %v2050 = vsel %vm1955, %v1925, 0
        %2052 = vmatprep.subr.mxu0 0.0
        %2053 = vmatpush1.msra.mxu0 0.0
        %2054 = vmatprep.subr.mxu0 0.0
        %2055 = vmatpush1.msra.mxu0 0.0
        %2056 = vmatprep.subr.mxu0 0.0
        %2057 = vmatpush1.msra.mxu0 0.0
        %2058 = vmatprep.subr.mxu0 0.0
        %2059 = vmatpush1.msra.mxu0 0.0
        %2060 = vmatprep.subr.mxu0 0.0
        %2061 = vmatpush1.msra.mxu0 0.0
        %2062 = vmatprep.subr.mxu0 0.0
        %2063 = vmatpush1.msra.mxu0 0.0
        %2064 = vmatprep.subr.mxu0 0.0
        %2065 = vmatpush1.msra.mxu0 0.0
        %2066 = vmatprep.subr.mxu0 0.0
        %2067 = vmatpush1.msra.mxu0 0.0
        %2068 = vmatprep.subr.mxu0 0.0
        %2069 = vmatpush1.msra.mxu0 0.0
        %2070 = vmatprep.subr.mxu0 0.0
        %2071 = vmatpush1.msra.mxu0 0.0
        %2072 = vmatprep.subr.mxu0 0.0
        %2073 = vmatpush1.msra.mxu0 0.0
        %2074 = vmatprep.subr.mxu0 0.0
        %2075 = vmatpush1.msra.mxu0 0.0
        %2076 = vmatprep.subr.mxu0 %v1936
        %2077 = vmatpush1.msra.mxu0 %v1935
        %2078 = vmatprep.subr.mxu0 %v1933
        %2079 = vmatpush1.msra.mxu0 %v1932
        %2080 = vmatprep.subr.mxu0 %v1930
        %2081 = vmatpush1.msra.mxu0 %v1929
        %2082 = vmatprep.subr.mxu0 %v1927
        %2083 = vmatpush1.msra.mxu0 %v1926
        %2084 = vmatprep.subr.mxu0 0.0
        %2085 = vmatpush2.msra.mxu0 0.0
        %2086 = vmatprep.subr.mxu0 0.0
        %2087 = vmatpush2.msra.mxu0 0.0
        %2088 = vmatprep.subr.mxu0 0.0
        %2089 = vmatpush2.msra.mxu0 0.0
        %2090 = vmatprep.subr.mxu0 0.0
        %2091 = vmatpush2.msra.mxu0 0.0
        %2092 = vmatprep.subr.mxu0 0.0
        %2093 = vmatpush2.msra.mxu0 0.0
        %2094 = vmatprep.subr.mxu0 0.0
        %2095 = vmatpush2.msra.mxu0 0.0
        %2096 = vmatprep.subr.mxu0 0.0
        %2097 = vmatpush2.msra.mxu0 0.0
        %2098 = vmatprep.subr.mxu0 0.0
        %2099 = vmatpush2.msra.mxu0 0.0
        %2100 = vmatprep.subr.mxu0 0.0
        %2101 = vmatpush2.msra.mxu0 0.0
        %2102 = vmatprep.subr.mxu0 0.0
        %2103 = vmatpush2.msra.mxu0 0.0
        %2104 = vmatprep.subr.mxu0 0.0
        %2105 = vmatpush2.msra.mxu0 0.0
        %2106 = vmatprep.subr.mxu0 0.0
        %2107 = vmatpush2.msra.mxu0 0.0
        %2108 = vmatprep.subr.mxu0 0.0
        %2109 = vmatpush2.msra.mxu0 0.0
        %2110 = vmatprep.subr.mxu0 0.0
        %2111 = vmatpush2.msra.mxu0 0.0
        %2112 = vmatprep.subr.mxu0 0.0
        %2113 = vmatpush2.msra.mxu0 0.0
        %2114 = vmatprep.subr.mxu0 0.0
        %2115 = vmatpush2.msra.mxu0 0.0
        %2116 = vmatprep.mubr.f32.mxu0 0.0
        %2117 = vmatmul.mubr.f32.gmra.mxu0 %v1957
        %v2118 = vpop.f32.mrf.mxu0
        %v2119 = vadd.f32 %v1943, %v2118
        %v2120 = vpop.f32.mrf.mxu0
        %v2121 = vadd.f32 %v1947, %v2120
        %2122 = vmatprep.mubr.f32.mxu0 0.0
        %2123 = vmatmul.mubr.f32.gmra.mxu0 %v1960
        %v2124 = vpop.f32.mrf.mxu0
        %v2125 = vadd.f32 %v1943, %v2124
        %v2126 = vpop.f32.mrf.mxu0
        %v2127 = vadd.f32 %v1947, %v2126
        %2128 = vmatprep.mubr.f32.mxu0 0.0
        %2129 = vmatmul.mubr.f32.gmra.mxu0 %v1963
        %v2130 = vpop.f32.mrf.mxu0
        %v2131 = vadd.f32 %v1943, %v2130
        %v2132 = vpop.f32.mrf.mxu0
        %v2133 = vadd.f32 %v1947, %v2132
        %2134 = vmatprep.mubr.f32.mxu0 0.0
        %2135 = vmatmul.mubr.f32.gmra.mxu0 %v1966
        %v2136 = vpop.f32.mrf.mxu0
        %v2137 = vadd.f32 %v1943, %v2136
        %v2138 = vpop.f32.mrf.mxu0
        %v2139 = vadd.f32 %v1947, %v2138
        %2140 = vmatprep.mubr.f32.mxu0 0.0
        %2141 = vmatmul.mubr.f32.gmra.mxu0 %v1969
        %v2142 = vpop.f32.mrf.mxu0
        %v2143 = vadd.f32 %v1943, %v2142
        %v2144 = vpop.f32.mrf.mxu0
        %v2145 = vadd.f32 %v1947, %v2144
        %2146 = vmatprep.mubr.f32.mxu0 0.0
        %2147 = vmatmul.mubr.f32.gmra.mxu0 %v1972
        %v2148 = vpop.f32.mrf.mxu0
        %v2149 = vadd.f32 %v1943, %v2148
        %v2150 = vpop.f32.mrf.mxu0
        %v2151 = vadd.f32 %v1947, %v2150
        %2152 = vmatprep.mubr.f32.mxu0 0.0
        %2153 = vmatmul.mubr.f32.gmra.mxu0 %v1975
        %v2154 = vpop.f32.mrf.mxu0
        %v2155 = vadd.f32 %v1943, %v2154
        %v2156 = vpop.f32.mrf.mxu0
        %v2157 = vadd.f32 %v1947, %v2156
        %2158 = vmatprep.mubr.f32.mxu0 0.0
        %2159 = vmatmul.mubr.f32.gmra.mxu0 %v1978
        %v2160 = vpop.f32.mrf.mxu0
        %v2161 = vadd.f32 %v1943, %v2160
        %v2162 = vpop.f32.mrf.mxu0
        %v2163 = vadd.f32 %v1947, %v2162
        %2164 = vmatprep.mubr.f32.mxu0 0.0
        %2165 = vmatmul.mubr.f32.gmra.mxu0 %v1981
        %v2166 = vpop.f32.mrf.mxu0
        %v2167 = vadd.f32 %v1943, %v2166
        %v2168 = vpop.f32.mrf.mxu0
        %v2169 = vadd.f32 %v1947, %v2168
        %2170 = vmatprep.mubr.f32.mxu0 0.0
        %2171 = vmatmul.mubr.f32.gmra.mxu0 %v1984
        %v2172 = vpop.f32.mrf.mxu0
        %v2173 = vadd.f32 %v1943, %v2172
        %v2174 = vpop.f32.mrf.mxu0
        %v2175 = vadd.f32 %v1947, %v2174
        %2176 = vmatprep.mubr.f32.mxu0 0.0
        %2177 = vmatmul.mubr.f32.gmra.mxu0 %v1987
        %v2178 = vpop.f32.mrf.mxu0
        %v2179 = vadd.f32 %v1943, %v2178
        %v2180 = vpop.f32.mrf.mxu0
        %v2181 = vadd.f32 %v1947, %v2180
        %2182 = vmatprep.mubr.f32.mxu0 0.0
        %2183 = vmatmul.mubr.f32.gmra.mxu0 %v1990
        %v2184 = vpop.f32.mrf.mxu0
        %v2185 = vadd.f32 %v1943, %v2184
        %v2186 = vpop.f32.mrf.mxu0
        %v2187 = vadd.f32 %v1947, %v2186
        %2188 = vmatprep.mubr.f32.mxu0 0.0
        %2189 = vmatmul.mubr.f32.gmra.mxu0 %v1993
        %v2190 = vpop.f32.mrf.mxu0
        %v2191 = vadd.f32 %v1943, %v2190
        %v2192 = vpop.f32.mrf.mxu0
        %v2193 = vadd.f32 %v1947, %v2192
        %2194 = vmatprep.mubr.f32.mxu0 0.0
        %2195 = vmatmul.mubr.f32.gmra.mxu0 %v1996
        %v2196 = vpop.f32.mrf.mxu0
        %v2197 = vadd.f32 %v1943, %v2196
        %v2198 = vpop.f32.mrf.mxu0
        %v2199 = vadd.f32 %v1947, %v2198
        %2200 = vmatprep.mubr.f32.mxu0 0.0
        %2201 = vmatmul.mubr.f32.gmra.mxu0 %v1999
        %v2202 = vpop.f32.mrf.mxu0
        %v2203 = vadd.f32 %v1943, %v2202
        %v2204 = vpop.f32.mrf.mxu0
        %v2205 = vadd.f32 %v1947, %v2204
        %2206 = vmatprep.mubr.f32.mxu0 0.0
        %2207 = vmatmul.mubr.f32.gmra.mxu0 %v2002
        %v2208 = vpop.f32.mrf.mxu0
        %v2209 = vadd.f32 %v1943, %v2208
        %v2210 = vpop.f32.mrf.mxu0
        %v2211 = vadd.f32 %v1947, %v2210
        %2212 = vmatprep.mubr.f32.mxu0 0.0
        %2213 = vmatmul.mubr.f32.gmra.mxu0 %v2005
        %v2214 = vpop.f32.mrf.mxu0
        %v2215 = vadd.f32 %v1943, %v2214
        %v2216 = vpop.f32.mrf.mxu0
        %v2217 = vadd.f32 %v1947, %v2216
        %2218 = vmatprep.mubr.f32.mxu0 0.0
        %2219 = vmatmul.mubr.f32.gmra.mxu0 %v2008
        %v2220 = vpop.f32.mrf.mxu0
        %v2221 = vadd.f32 %v1943, %v2220
        %v2222 = vpop.f32.mrf.mxu0
        %v2223 = vadd.f32 %v1947, %v2222
        %2224 = vmatprep.mubr.f32.mxu0 0.0
        %2225 = vmatmul.mubr.f32.gmra.mxu0 %v2011
        %v2226 = vpop.f32.mrf.mxu0
        %v2227 = vadd.f32 %v1943, %v2226
        %v2228 = vpop.f32.mrf.mxu0
        %v2229 = vadd.f32 %v1947, %v2228
        %2230 = vmatprep.mubr.f32.mxu0 0.0
        %2231 = vmatmul.mubr.f32.gmra.mxu0 %v2014
        %v2232 = vpop.f32.mrf.mxu0
        %v2233 = vadd.f32 %v1943, %v2232
        %v2234 = vpop.f32.mrf.mxu0
        %v2235 = vadd.f32 %v1947, %v2234
        %2236 = vmatprep.mubr.f32.mxu0 0.0
        %2237 = vmatmul.mubr.f32.gmra.mxu0 %v2017
        %v2238 = vpop.f32.mrf.mxu0
        %v2239 = vadd.f32 %v1943, %v2238
        %v2240 = vpop.f32.mrf.mxu0
        %v2241 = vadd.f32 %v1947, %v2240
        %2242 = vmatprep.mubr.f32.mxu0 0.0
        %2243 = vmatmul.mubr.f32.gmra.mxu0 %v2020
        %v2244 = vpop.f32.mrf.mxu0
        %v2245 = vadd.f32 %v1943, %v2244
        %v2246 = vpop.f32.mrf.mxu0
        %v2247 = vadd.f32 %v1947, %v2246
        %2248 = vmatprep.mubr.f32.mxu0 0.0
        %2249 = vmatmul.mubr.f32.gmra.mxu0 %v2023
        %v2250 = vpop.f32.mrf.mxu0
        %v2251 = vadd.f32 %v1943, %v2250
        %v2252 = vpop.f32.mrf.mxu0
        %v2253 = vadd.f32 %v1947, %v2252
        %2254 = vmatprep.mubr.f32.mxu0 0.0
        %2255 = vmatmul.mubr.f32.gmra.mxu0 %v2026
        %v2256 = vpop.f32.mrf.mxu0
        %v2257 = vadd.f32 %v1943, %v2256
        %v2258 = vpop.f32.mrf.mxu0
        %v2259 = vadd.f32 %v1947, %v2258
        %2260 = vmatprep.mubr.f32.mxu0 0.0
        %2261 = vmatmul.mubr.f32.gmra.mxu0 %v2029
        %v2262 = vpop.f32.mrf.mxu0
        %v2263 = vadd.f32 %v1943, %v2262
        %v2264 = vpop.f32.mrf.mxu0
        %v2265 = vadd.f32 %v1947, %v2264
        %2266 = vmatprep.mubr.f32.mxu0 0.0
        %2267 = vmatmul.mubr.f32.gmra.mxu0 %v2032
        %v2268 = vpop.f32.mrf.mxu0
        %v2269 = vadd.f32 %v1943, %v2268
        %v2270 = vpop.f32.mrf.mxu0
        %v2271 = vadd.f32 %v1947, %v2270
        %2272 = vmatprep.mubr.f32.mxu0 0.0
        %2273 = vmatmul.mubr.f32.gmra.mxu0 %v2035
        %v2274 = vpop.f32.mrf.mxu0
        %v2275 = vadd.f32 %v1943, %v2274
        %v2276 = vpop.f32.mrf.mxu0
        %v2277 = vadd.f32 %v1947, %v2276
        %2278 = vmatprep.mubr.f32.mxu0 0.0
        %2279 = vmatmul.mubr.f32.gmra.mxu0 %v2038
        %v2280 = vpop.f32.mrf.mxu0
        %v2281 = vadd.f32 %v1943, %v2280
        %v2282 = vpop.f32.mrf.mxu0
        %v2283 = vadd.f32 %v1947, %v2282
        %2284 = vmatprep.mubr.f32.mxu0 0.0
        %2285 = vmatmul.mubr.f32.gmra.mxu0 %v2041
        %v2286 = vpop.f32.mrf.mxu0
        %v2287 = vadd.f32 %v1943, %v2286
        %v2288 = vpop.f32.mrf.mxu0
        %v2289 = vadd.f32 %v1947, %v2288
        %2290 = vmatprep.mubr.f32.mxu0 0.0
        %2291 = vmatmul.mubr.f32.gmra.mxu0 %v2044
        %v2292 = vpop.f32.mrf.mxu0
        %v2293 = vadd.f32 %v1943, %v2292
        %v2294 = vpop.f32.mrf.mxu0
        %v2295 = vadd.f32 %v1947, %v2294
        %2296 = vmatprep.mubr.f32.mxu0 0.0
        %2297 = vmatmul.mubr.f32.gmra.mxu0 %v2047
        %v2298 = vpop.f32.mrf.mxu0
        %v2299 = vadd.f32 %v1943, %v2298
        %v2300 = vpop.f32.mrf.mxu0
        %v2301 = vadd.f32 %v1947, %v2300
        %2302 = vmatprep.mubr.f32.mxu0 0.0
        %2303 = vmatmul.mubr.f32.gmra.mxu0 %v2050
        %v2304 = vpop.f32.mrf.mxu0
        %v2305 = vadd.f32 %v1943, %v2304
        %v2306 = vpop.f32.mrf.mxu0
        %v2307 = vadd.f32 %v1947, %v2306
        %2308 = vdwg.mxu0
        %2309 = vmatprep.subr.mxu0 0.0
        %2310 = vmatpush1.msra.mxu0 0.0
        %2311 = vmatprep.subr.mxu0 0.0
        %2312 = vmatpush1.msra.mxu0 0.0
        %2313 = vmatprep.subr.mxu0 0.0
        %2314 = vmatpush1.msra.mxu0 0.0
        %2315 = vmatprep.subr.mxu0 0.0
        %2316 = vmatpush1.msra.mxu0 0.0
        %2317 = vmatprep.subr.mxu0 0.0
        %2318 = vmatpush1.msra.mxu0 0.0
        %2319 = vmatprep.subr.mxu0 0.0
        %2320 = vmatpush1.msra.mxu0 0.0
        %2321 = vmatprep.subr.mxu0 0.0
        %2322 = vmatpush1.msra.mxu0 0.0
        %2323 = vmatprep.subr.mxu0 0.0
        %2324 = vmatpush1.msra.mxu0 0.0
        %2325 = vmatprep.subr.mxu0 0.0
        %2326 = vmatpush1.msra.mxu0 0.0
        %2327 = vmatprep.subr.mxu0 0.0
        %2328 = vmatpush1.msra.mxu0 0.0
        %2329 = vmatprep.subr.mxu0 0.0
        %2330 = vmatpush1.msra.mxu0 0.0
        %2331 = vmatprep.subr.mxu0 0.0
        %2332 = vmatpush1.msra.mxu0 0.0
        %2333 = vmatprep.subr.mxu0 0.0
        %2334 = vmatpush1.msra.mxu0 %v1937
        %2335 = vmatprep.subr.mxu0 0.0
        %2336 = vmatpush1.msra.mxu0 %v1934
        %2337 = vmatprep.subr.mxu0 0.0
        %2338 = vmatpush1.msra.mxu0 %v1931
        %2339 = vmatprep.subr.mxu0 0.0
        %2340 = vmatpush1.msra.mxu0 %v1928
        %2341 = vmatprep.subr.mxu0 0.0
        %2342 = vmatpush2.msra.mxu0 0.0
        %2343 = vmatprep.subr.mxu0 0.0
        %2344 = vmatpush2.msra.mxu0 0.0
        %2345 = vmatprep.subr.mxu0 0.0
        %2346 = vmatpush2.msra.mxu0 0.0
        %2347 = vmatprep.subr.mxu0 0.0
        %2348 = vmatpush2.msra.mxu0 0.0
        %2349 = vmatprep.subr.mxu0 0.0
        %2350 = vmatpush2.msra.mxu0 0.0
        %2351 = vmatprep.subr.mxu0 0.0
        %2352 = vmatpush2.msra.mxu0 0.0
        %2353 = vmatprep.subr.mxu0 0.0
        %2354 = vmatpush2.msra.mxu0 0.0
        %2355 = vmatprep.subr.mxu0 0.0
        %2356 = vmatpush2.msra.mxu0 0.0
        %2357 = vmatprep.subr.mxu0 0.0
        %2358 = vmatpush2.msra.mxu0 0.0
        %2359 = vmatprep.subr.mxu0 0.0
        %2360 = vmatpush2.msra.mxu0 0.0
        %2361 = vmatprep.subr.mxu0 0.0
        %2362 = vmatpush2.msra.mxu0 0.0
        %2363 = vmatprep.subr.mxu0 0.0
        %2364 = vmatpush2.msra.mxu0 0.0
        %2365 = vmatprep.subr.mxu0 0.0
        %2366 = vmatpush2.msra.mxu0 0.0
        %2367 = vmatprep.subr.mxu0 0.0
        %2368 = vmatpush2.msra.mxu0 0.0
        %2369 = vmatprep.subr.mxu0 0.0
        %2370 = vmatpush2.msra.mxu0 0.0
        %2371 = vmatprep.subr.mxu0 0.0
        %2372 = vmatpush2.msra.mxu0 0.0
        %2373 = vmatprep.mubr.f32.mxu0 0.0
        %2374 = vmatmul.mubr.f32.gmra.mxu0 %v1957
        %v2375 = vpop.f32.mrf.mxu0
        %v2376 = vadd.f32 %v1951, %v2375
        %v2377 = vpop.f32.mrf.mxu0
        %2378 = vmatprep.mubr.f32.mxu0 0.0
        %2379 = vmatmul.mubr.f32.gmra.mxu0 %v1960
        %v2380 = vpop.f32.mrf.mxu0
        %v2381 = vadd.f32 %v1951, %v2380
        %v2382 = vpop.f32.mrf.mxu0
        %2383 = vmatprep.mubr.f32.mxu0 0.0
        %2384 = vmatmul.mubr.f32.gmra.mxu0 %v1963
        %v2385 = vpop.f32.mrf.mxu0
        %v2386 = vadd.f32 %v1951, %v2385
        %v2387 = vpop.f32.mrf.mxu0
        %2388 = vmatprep.mubr.f32.mxu0 0.0
        %2389 = vmatmul.mubr.f32.gmra.mxu0 %v1966
        %v2390 = vpop.f32.mrf.mxu0
        %v2391 = vadd.f32 %v1951, %v2390
        %v2392 = vpop.f32.mrf.mxu0
        %2393 = vmatprep.mubr.f32.mxu0 0.0
        %2394 = vmatmul.mubr.f32.gmra.mxu0 %v1969
        %v2395 = vpop.f32.mrf.mxu0
        %v2396 = vadd.f32 %v1951, %v2395
        %v2397 = vpop.f32.mrf.mxu0
        %2398 = vmatprep.mubr.f32.mxu0 0.0
        %2399 = vmatmul.mubr.f32.gmra.mxu0 %v1972
        %v2400 = vpop.f32.mrf.mxu0
        %v2401 = vadd.f32 %v1951, %v2400
        %v2402 = vpop.f32.mrf.mxu0
        %2403 = vmatprep.mubr.f32.mxu0 0.0
        %2404 = vmatmul.mubr.f32.gmra.mxu0 %v1975
        %v2405 = vpop.f32.mrf.mxu0
        %v2406 = vadd.f32 %v1951, %v2405
        %v2407 = vpop.f32.mrf.mxu0
        %2408 = vmatprep.mubr.f32.mxu0 0.0
        %2409 = vmatmul.mubr.f32.gmra.mxu0 %v1978
        %v2410 = vpop.f32.mrf.mxu0
        %v2411 = vadd.f32 %v1951, %v2410
        %v2412 = vpop.f32.mrf.mxu0
        %2413 = vmatprep.mubr.f32.mxu0 0.0
        %2414 = vmatmul.mubr.f32.gmra.mxu0 %v1981
        %v2415 = vpop.f32.mrf.mxu0
        %v2416 = vadd.f32 %v1951, %v2415
        %v2417 = vpop.f32.mrf.mxu0
        %2418 = vmatprep.mubr.f32.mxu0 0.0
        %2419 = vmatmul.mubr.f32.gmra.mxu0 %v1984
        %v2420 = vpop.f32.mrf.mxu0
        %v2421 = vadd.f32 %v1951, %v2420
        %v2422 = vpop.f32.mrf.mxu0
        %2423 = vmatprep.mubr.f32.mxu0 0.0
        %2424 = vmatmul.mubr.f32.gmra.mxu0 %v1987
        %v2425 = vpop.f32.mrf.mxu0
        %v2426 = vadd.f32 %v1951, %v2425
        %v2427 = vpop.f32.mrf.mxu0
        %2428 = vmatprep.mubr.f32.mxu0 0.0
        %2429 = vmatmul.mubr.f32.gmra.mxu0 %v1990
        %v2430 = vpop.f32.mrf.mxu0
        %v2431 = vadd.f32 %v1951, %v2430
        %v2432 = vpop.f32.mrf.mxu0
        %2433 = vmatprep.mubr.f32.mxu0 0.0
        %2434 = vmatmul.mubr.f32.gmra.mxu0 %v1993
        %v2435 = vpop.f32.mrf.mxu0
        %v2436 = vadd.f32 %v1951, %v2435
        %v2437 = vpop.f32.mrf.mxu0
        %2438 = vmatprep.mubr.f32.mxu0 0.0
        %2439 = vmatmul.mubr.f32.gmra.mxu0 %v1996
        %v2440 = vpop.f32.mrf.mxu0
        %v2441 = vadd.f32 %v1951, %v2440
        %v2442 = vpop.f32.mrf.mxu0
        %2443 = vmatprep.mubr.f32.mxu0 0.0
        %2444 = vmatmul.mubr.f32.gmra.mxu0 %v1999
        %v2445 = vpop.f32.mrf.mxu0
        %v2446 = vadd.f32 %v1951, %v2445
        %v2447 = vpop.f32.mrf.mxu0
        %2448 = vmatprep.mubr.f32.mxu0 0.0
        %2449 = vmatmul.mubr.f32.gmra.mxu0 %v2002
        %v2450 = vpop.f32.mrf.mxu0
        %v2451 = vadd.f32 %v1951, %v2450
        %v2452 = vpop.f32.mrf.mxu0
        %2453 = vmatprep.mubr.f32.mxu0 0.0
        %2454 = vmatmul.mubr.f32.gmra.mxu0 %v2005
        %v2455 = vpop.f32.mrf.mxu0
        %v2456 = vadd.f32 %v1951, %v2455
        %v2457 = vpop.f32.mrf.mxu0
        %2458 = vmatprep.mubr.f32.mxu0 0.0
        %2459 = vmatmul.mubr.f32.gmra.mxu0 %v2008
        %v2460 = vpop.f32.mrf.mxu0
        %v2461 = vadd.f32 %v1951, %v2460
        %v2462 = vpop.f32.mrf.mxu0
        %2463 = vmatprep.mubr.f32.mxu0 0.0
        %2464 = vmatmul.mubr.f32.gmra.mxu0 %v2011
        %v2465 = vpop.f32.mrf.mxu0
        %v2466 = vadd.f32 %v1951, %v2465
        %v2467 = vpop.f32.mrf.mxu0
        %2468 = vmatprep.mubr.f32.mxu0 0.0
        %2469 = vmatmul.mubr.f32.gmra.mxu0 %v2014
        %v2470 = vpop.f32.mrf.mxu0
        %v2471 = vadd.f32 %v1951, %v2470
        %v2472 = vpop.f32.mrf.mxu0
        %2473 = vmatprep.mubr.f32.mxu0 0.0
        %2474 = vmatmul.mubr.f32.gmra.mxu0 %v2017
        %v2475 = vpop.f32.mrf.mxu0
        %v2476 = vadd.f32 %v1951, %v2475
        %v2477 = vpop.f32.mrf.mxu0
        %2478 = vmatprep.mubr.f32.mxu0 0.0
        %2479 = vmatmul.mubr.f32.gmra.mxu0 %v2020
        %v2480 = vpop.f32.mrf.mxu0
        %v2481 = vadd.f32 %v1951, %v2480
        %v2482 = vpop.f32.mrf.mxu0
        %2483 = vmatprep.mubr.f32.mxu0 0.0
        %2484 = vmatmul.mubr.f32.gmra.mxu0 %v2023
        %v2485 = vpop.f32.mrf.mxu0
        %v2486 = vadd.f32 %v1951, %v2485
        %v2487 = vpop.f32.mrf.mxu0
        %2488 = vmatprep.mubr.f32.mxu0 0.0
        %2489 = vmatmul.mubr.f32.gmra.mxu0 %v2026
        %v2490 = vpop.f32.mrf.mxu0
        %v2491 = vadd.f32 %v1951, %v2490
        %v2492 = vpop.f32.mrf.mxu0
        %2493 = vmatprep.mubr.f32.mxu0 0.0
        %2494 = vmatmul.mubr.f32.gmra.mxu0 %v2029
        %v2495 = vpop.f32.mrf.mxu0
        %v2496 = vadd.f32 %v1951, %v2495
        %v2497 = vpop.f32.mrf.mxu0
        %2498 = vmatprep.mubr.f32.mxu0 0.0
        %2499 = vmatmul.mubr.f32.gmra.mxu0 %v2032
        %v2500 = vpop.f32.mrf.mxu0
        %v2501 = vadd.f32 %v1951, %v2500
        %v2502 = vpop.f32.mrf.mxu0
        %2503 = vmatprep.mubr.f32.mxu0 0.0
        %2504 = vmatmul.mubr.f32.gmra.mxu0 %v2035
        %v2505 = vpop.f32.mrf.mxu0
        %v2506 = vadd.f32 %v1951, %v2505
        %v2507 = vpop.f32.mrf.mxu0
        %2508 = vmatprep.mubr.f32.mxu0 0.0
        %2509 = vmatmul.mubr.f32.gmra.mxu0 %v2038
        %v2510 = vpop.f32.mrf.mxu0
        %v2511 = vadd.f32 %v1951, %v2510
        %v2512 = vpop.f32.mrf.mxu0
        %2513 = vmatprep.mubr.f32.mxu0 0.0
        %2514 = vmatmul.mubr.f32.gmra.mxu0 %v2041
        %v2515 = vpop.f32.mrf.mxu0
        %v2516 = vadd.f32 %v1951, %v2515
        %v2517 = vpop.f32.mrf.mxu0
        %2518 = vmatprep.mubr.f32.mxu0 0.0
        %2519 = vmatmul.mubr.f32.gmra.mxu0 %v2044
        %v2520 = vpop.f32.mrf.mxu0
        %v2521 = vadd.f32 %v1951, %v2520
        %v2522 = vpop.f32.mrf.mxu0
        %2523 = vmatprep.mubr.f32.mxu0 0.0
        %2524 = vmatmul.mubr.f32.gmra.mxu0 %v2047
        %v2525 = vpop.f32.mrf.mxu0
        %v2526 = vadd.f32 %v1951, %v2525
        %v2527 = vpop.f32.mrf.mxu0
        %2528 = vmatprep.mubr.f32.mxu0 0.0
        %2529 = vmatmul.mubr.f32.gmra.mxu0 %v2050
        %v2530 = vpop.f32.mrf.mxu0
        %v2531 = vadd.f32 %v1951, %v2530
        %v2532 = vpop.f32.mrf.mxu0
        %2533 = vdwg.mxu0
        %v2534 = vxor.u32 %v2119, 2147483648
        %v2535 = vxor.u32 %v2121, 2147483648
        %v2536 = vxor.u32 %v2376, 2147483648
        %v2537 = vxor.u32 %v2125, 2147483648
        %v2538 = vxor.u32 %v2127, 2147483648
        %v2539 = vxor.u32 %v2381, 2147483648
        %v2540 = vxor.u32 %v2131, 2147483648
        %v2541 = vxor.u32 %v2133, 2147483648
        %v2542 = vxor.u32 %v2386, 2147483648
        %v2543 = vxor.u32 %v2137, 2147483648
        %v2544 = vxor.u32 %v2139, 2147483648
        %v2545 = vxor.u32 %v2391, 2147483648
        %v2546 = vxor.u32 %v2143, 2147483648
        %v2547 = vxor.u32 %v2145, 2147483648
        %v2548 = vxor.u32 %v2396, 2147483648
        %v2549 = vxor.u32 %v2149, 2147483648
        %v2550 = vxor.u32 %v2151, 2147483648
        %v2551 = vxor.u32 %v2401, 2147483648
        %v2552 = vxor.u32 %v2155, 2147483648
        %v2553 = vxor.u32 %v2157, 2147483648
        %v2554 = vxor.u32 %v2406, 2147483648
        %v2555 = vxor.u32 %v2161, 2147483648
        %v2556 = vxor.u32 %v2163, 2147483648
        %v2557 = vxor.u32 %v2411, 2147483648
        %v2558 = vxor.u32 %v2167, 2147483648
        %v2559 = vxor.u32 %v2169, 2147483648
        %v2560 = vxor.u32 %v2416, 2147483648
        %v2561 = vxor.u32 %v2173, 2147483648
        %v2562 = vxor.u32 %v2175, 2147483648
        %v2563 = vxor.u32 %v2421, 2147483648
        %v2564 = vxor.u32 %v2179, 2147483648
        %v2565 = vxor.u32 %v2181, 2147483648
        %v2566 = vxor.u32 %v2426, 2147483648
        %v2567 = vxor.u32 %v2185, 2147483648
        %v2568 = vxor.u32 %v2187, 2147483648
        %v2569 = vxor.u32 %v2431, 2147483648
        %v2570 = vxor.u32 %v2191, 2147483648
        %v2571 = vxor.u32 %v2193, 2147483648
        %v2572 = vxor.u32 %v2436, 2147483648
        %v2573 = vxor.u32 %v2197, 2147483648
        %v2574 = vxor.u32 %v2199, 2147483648
        %v2575 = vxor.u32 %v2441, 2147483648
        %v2576 = vxor.u32 %v2203, 2147483648
        %v2577 = vxor.u32 %v2205, 2147483648
        %v2578 = vxor.u32 %v2446, 2147483648
        %v2579 = vxor.u32 %v2209, 2147483648
        %v2580 = vxor.u32 %v2211, 2147483648
        %v2581 = vxor.u32 %v2451, 2147483648
        %v2582 = vxor.u32 %v2215, 2147483648
        %v2583 = vxor.u32 %v2217, 2147483648
        %v2584 = vxor.u32 %v2456, 2147483648
        %v2585 = vxor.u32 %v2221, 2147483648
        %v2586 = vxor.u32 %v2223, 2147483648
        %v2587 = vxor.u32 %v2461, 2147483648
        %v2588 = vxor.u32 %v2227, 2147483648
        %v2589 = vxor.u32 %v2229, 2147483648
        %v2590 = vxor.u32 %v2466, 2147483648
        %v2591 = vxor.u32 %v2233, 2147483648
        %v2592 = vxor.u32 %v2235, 2147483648
        %v2593 = vxor.u32 %v2471, 2147483648
        %v2594 = vxor.u32 %v2239, 2147483648
        %v2595 = vxor.u32 %v2241, 2147483648
        %v2596 = vxor.u32 %v2476, 2147483648
        %v2597 = vxor.u32 %v2245, 2147483648
        %v2598 = vxor.u32 %v2247, 2147483648
        %v2599 = vxor.u32 %v2481, 2147483648
        %v2600 = vxor.u32 %v2251, 2147483648
        %v2601 = vxor.u32 %v2253, 2147483648
        %v2602 = vxor.u32 %v2486, 2147483648
        %v2603 = vxor.u32 %v2257, 2147483648
        %v2604 = vxor.u32 %v2259, 2147483648
        %v2605 = vxor.u32 %v2491, 2147483648
        %v2606 = vxor.u32 %v2263, 2147483648
        %v2607 = vxor.u32 %v2265, 2147483648
        %v2608 = vxor.u32 %v2496, 2147483648
        %v2609 = vxor.u32 %v2269, 2147483648
        %v2610 = vxor.u32 %v2271, 2147483648
        %v2611 = vxor.u32 %v2501, 2147483648
        %v2612 = vxor.u32 %v2275, 2147483648
        %v2613 = vxor.u32 %v2277, 2147483648
        %v2614 = vxor.u32 %v2506, 2147483648
        %v2615 = vxor.u32 %v2281, 2147483648
        %v2616 = vxor.u32 %v2283, 2147483648
        %v2617 = vxor.u32 %v2511, 2147483648
        %v2618 = vxor.u32 %v2287, 2147483648
        %v2619 = vxor.u32 %v2289, 2147483648
        %v2620 = vxor.u32 %v2516, 2147483648
        %v2621 = vxor.u32 %v2293, 2147483648
        %v2622 = vxor.u32 %v2295, 2147483648
        %v2623 = vxor.u32 %v2521, 2147483648
        %v2624 = vxor.u32 %v2299, 2147483648
        %v2625 = vxor.u32 %v2301, 2147483648
        %v2626 = vxor.u32 %v2526, 2147483648
        %v2627 = vxor.u32 %v2305, 2147483648
        %v2628 = vxor.u32 %v2307, 2147483648
        %v2629 = vxor.u32 %v2531, 2147483648
        %v2630 = vmul.f32 %v2534, 1.442695
        %v2631 = vpow.pop %v2630
        %v2632 = vmul.f32 %v2535, 1.442695
        %v2633 = vpow.pop %v2632
        %v2634 = vmul.f32 %v2536, 1.442695
        %v2635 = vpow.pop %v2634
        %v2636 = vmul.f32 %v2537, 1.442695
        %v2637 = vpow.pop %v2636
        %v2638 = vmul.f32 %v2538, 1.442695
        %v2639 = vpow.pop %v2638
        %v2640 = vmul.f32 %v2539, 1.442695
        %v2641 = vpow.pop %v2640
        %v2642 = vmul.f32 %v2540, 1.442695
        %v2643 = vpow.pop %v2642
        %v2644 = vmul.f32 %v2541, 1.442695
        %v2645 = vpow.pop %v2644
        %v2646 = vmul.f32 %v2542, 1.442695
        %v2647 = vpow.pop %v2646
        %v2648 = vmul.f32 %v2543, 1.442695
        %v2649 = vpow.pop %v2648
        %v2650 = vmul.f32 %v2544, 1.442695
        %v2651 = vpow.pop %v2650
        %v2652 = vmul.f32 %v2545, 1.442695
        %v2653 = vpow.pop %v2652
        %v2654 = vmul.f32 %v2546, 1.442695
        %v2655 = vpow.pop %v2654
        %v2656 = vmul.f32 %v2547, 1.442695
        %v2657 = vpow.pop %v2656
        %v2658 = vmul.f32 %v2548, 1.442695
        %v2659 = vpow.pop %v2658
        %v2660 = vmul.f32 %v2549, 1.442695
        %v2661 = vpow.pop %v2660
        %v2662 = vmul.f32 %v2550, 1.442695
        %v2663 = vpow.pop %v2662
        %v2664 = vmul.f32 %v2551, 1.442695
        %v2665 = vpow.pop %v2664
        %v2666 = vmul.f32 %v2552, 1.442695
        %v2667 = vpow.pop %v2666
        %v2668 = vmul.f32 %v2553, 1.442695
        %v2669 = vpow.pop %v2668
        %v2670 = vmul.f32 %v2554, 1.442695
        %v2671 = vpow.pop %v2670
        %v2672 = vmul.f32 %v2555, 1.442695
        %v2673 = vpow.pop %v2672
        %v2674 = vmul.f32 %v2556, 1.442695
        %v2675 = vpow.pop %v2674
        %v2676 = vmul.f32 %v2557, 1.442695
        %v2677 = vpow.pop %v2676
        %v2678 = vmul.f32 %v2558, 1.442695
        %v2679 = vpow.pop %v2678
        %v2680 = vmul.f32 %v2559, 1.442695
        %v2681 = vpow.pop %v2680
        %v2682 = vmul.f32 %v2560, 1.442695
        %v2683 = vpow.pop %v2682
        %v2684 = vmul.f32 %v2561, 1.442695
        %v2685 = vpow.pop %v2684
        %v2686 = vmul.f32 %v2562, 1.442695
        %v2687 = vpow.pop %v2686
        %v2688 = vmul.f32 %v2563, 1.442695
        %v2689 = vpow.pop %v2688
        %v2690 = vmul.f32 %v2564, 1.442695
        %v2691 = vpow.pop %v2690
        %v2692 = vmul.f32 %v2565, 1.442695
        %v2693 = vpow.pop %v2692
        %v2694 = vmul.f32 %v2566, 1.442695
        %v2695 = vpow.pop %v2694
        %v2696 = vmul.f32 %v2567, 1.442695
        %v2697 = vpow.pop %v2696
        %v2698 = vmul.f32 %v2568, 1.442695
        %v2699 = vpow.pop %v2698
        %v2700 = vmul.f32 %v2569, 1.442695
        %v2701 = vpow.pop %v2700
        %v2702 = vmul.f32 %v2570, 1.442695
        %v2703 = vpow.pop %v2702
        %v2704 = vmul.f32 %v2571, 1.442695
        %v2705 = vpow.pop %v2704
        %v2706 = vmul.f32 %v2572, 1.442695
        %v2707 = vpow.pop %v2706
        %v2708 = vmul.f32 %v2573, 1.442695
        %v2709 = vpow.pop %v2708
        %v2710 = vmul.f32 %v2574, 1.442695
        %v2711 = vpow.pop %v2710
        %v2712 = vmul.f32 %v2575, 1.442695
        %v2713 = vpow.pop %v2712
        %v2714 = vmul.f32 %v2576, 1.442695
        %v2715 = vpow.pop %v2714
        %v2716 = vmul.f32 %v2577, 1.442695
        %v2717 = vpow.pop %v2716
        %v2718 = vmul.f32 %v2578, 1.442695
        %v2719 = vpow.pop %v2718
        %v2720 = vmul.f32 %v2579, 1.442695
        %v2721 = vpow.pop %v2720
        %v2722 = vmul.f32 %v2580, 1.442695
        %v2723 = vpow.pop %v2722
        %v2724 = vmul.f32 %v2581, 1.442695
        %v2725 = vpow.pop %v2724
        %v2726 = vmul.f32 %v2582, 1.442695
        %v2727 = vpow.pop %v2726
        %v2728 = vmul.f32 %v2583, 1.442695
        %v2729 = vpow.pop %v2728
        %v2730 = vmul.f32 %v2584, 1.442695
        %v2731 = vpow.pop %v2730
        %v2732 = vmul.f32 %v2585, 1.442695
        %v2733 = vpow.pop %v2732
        %v2734 = vmul.f32 %v2586, 1.442695
        %v2735 = vpow.pop %v2734
        %v2736 = vmul.f32 %v2587, 1.442695
        %v2737 = vpow.pop %v2736
        %v2738 = vmul.f32 %v2588, 1.442695
        %v2739 = vpow.pop %v2738
        %v2740 = vmul.f32 %v2589, 1.442695
        %v2741 = vpow.pop %v2740
        %v2742 = vmul.f32 %v2590, 1.442695
        %v2743 = vpow.pop %v2742
        %v2744 = vmul.f32 %v2591, 1.442695
        %v2745 = vpow.pop %v2744
        %v2746 = vmul.f32 %v2592, 1.442695
        %v2747 = vpow.pop %v2746
        %v2748 = vmul.f32 %v2593, 1.442695
        %v2749 = vpow.pop %v2748
        %v2750 = vmul.f32 %v2594, 1.442695
        %v2751 = vpow.pop %v2750
        %v2752 = vmul.f32 %v2595, 1.442695
        %v2753 = vpow.pop %v2752
        %v2754 = vmul.f32 %v2596, 1.442695
        %v2755 = vpow.pop %v2754
        %v2756 = vmul.f32 %v2597, 1.442695
        %v2757 = vpow.pop %v2756
        %v2758 = vmul.f32 %v2598, 1.442695
        %v2759 = vpow.pop %v2758
        %v2760 = vmul.f32 %v2599, 1.442695
        %v2761 = vpow.pop %v2760
        %v2762 = vmul.f32 %v2600, 1.442695
        %v2763 = vpow.pop %v2762
        %v2764 = vmul.f32 %v2601, 1.442695
        %v2765 = vpow.pop %v2764
        %v2766 = vmul.f32 %v2602, 1.442695
        %v2767 = vpow.pop %v2766
        %v2768 = vmul.f32 %v2603, 1.442695
        %v2769 = vpow.pop %v2768
        %v2770 = vmul.f32 %v2604, 1.442695
        %v2771 = vpow.pop %v2770
        %v2772 = vmul.f32 %v2605, 1.442695
        %v2773 = vpow.pop %v2772
        %v2774 = vmul.f32 %v2606, 1.442695
        %v2775 = vpow.pop %v2774
        %v2776 = vmul.f32 %v2607, 1.442695
        %v2777 = vpow.pop %v2776
        %v2778 = vmul.f32 %v2608, 1.442695
        %v2779 = vpow.pop %v2778
        %v2780 = vmul.f32 %v2609, 1.442695
        %v2781 = vpow.pop %v2780
        %v2782 = vmul.f32 %v2610, 1.442695
        %v2783 = vpow.pop %v2782
        %v2784 = vmul.f32 %v2611, 1.442695
        %v2785 = vpow.pop %v2784
        %v2786 = vmul.f32 %v2612, 1.442695
        %v2787 = vpow.pop %v2786
        %v2788 = vmul.f32 %v2613, 1.442695
        %v2789 = vpow.pop %v2788
        %v2790 = vmul.f32 %v2614, 1.442695
        %v2791 = vpow.pop %v2790
        %v2792 = vmul.f32 %v2615, 1.442695
        %v2793 = vpow.pop %v2792
        %v2794 = vmul.f32 %v2616, 1.442695
        %v2795 = vpow.pop %v2794
        %v2796 = vmul.f32 %v2617, 1.442695
        %v2797 = vpow.pop %v2796
        %v2798 = vmul.f32 %v2618, 1.442695
        %v2799 = vpow.pop %v2798
        %v2800 = vmul.f32 %v2619, 1.442695
        %v2801 = vpow.pop %v2800
        %v2802 = vmul.f32 %v2620, 1.442695
        %v2803 = vpow.pop %v2802
        %v2804 = vmul.f32 %v2621, 1.442695
        %v2805 = vpow.pop %v2804
        %v2806 = vmul.f32 %v2622, 1.442695
        %v2807 = vpow.pop %v2806
        %v2808 = vmul.f32 %v2623, 1.442695
        %v2809 = vpow.pop %v2808
        %v2810 = vmul.f32 %v2624, 1.442695
        %v2811 = vpow.pop %v2810
        %v2812 = vmul.f32 %v2625, 1.442695
        %v2813 = vpow.pop %v2812
        %v2814 = vmul.f32 %v2626, 1.442695
        %v2815 = vpow.pop %v2814
        %v2816 = vmul.f32 %v2627, 1.442695
        %v2817 = vpow.pop %v2816
        %v2818 = vmul.f32 %v2628, 1.442695
        %v2819 = vpow.pop %v2818
        %v2820 = vmul.f32 %v2629, 1.442695
        %v2821 = vpow.pop %v2820
        %v2822 = vadd.f32 %v2631, 1.0
        %v2823 = vadd.f32 %v2633, 1.0
        %v2824 = vadd.f32 %v2635, 1.0
        %v2825 = vadd.f32 %v2637, 1.0
        %v2826 = vadd.f32 %v2639, 1.0
        %v2827 = vadd.f32 %v2641, 1.0
        %v2828 = vadd.f32 %v2643, 1.0
        %v2829 = vadd.f32 %v2645, 1.0
        %v2830 = vadd.f32 %v2647, 1.0
        %v2831 = vadd.f32 %v2649, 1.0
        %v2832 = vadd.f32 %v2651, 1.0
        %v2833 = vadd.f32 %v2653, 1.0
        %v2834 = vadd.f32 %v2655, 1.0
        %v2835 = vadd.f32 %v2657, 1.0
        %v2836 = vadd.f32 %v2659, 1.0
        %v2837 = vadd.f32 %v2661, 1.0
        %v2838 = vadd.f32 %v2663, 1.0
        %v2839 = vadd.f32 %v2665, 1.0
        %v2840 = vadd.f32 %v2667, 1.0
        %v2841 = vadd.f32 %v2669, 1.0
        %v2842 = vadd.f32 %v2671, 1.0
        %v2843 = vadd.f32 %v2673, 1.0
        %v2844 = vadd.f32 %v2675, 1.0
        %v2845 = vadd.f32 %v2677, 1.0
        %v2846 = vadd.f32 %v2679, 1.0
        %v2847 = vadd.f32 %v2681, 1.0
        %v2848 = vadd.f32 %v2683, 1.0
        %v2849 = vadd.f32 %v2685, 1.0
        %v2850 = vadd.f32 %v2687, 1.0
        %v2851 = vadd.f32 %v2689, 1.0
        %v2852 = vadd.f32 %v2691, 1.0
        %v2853 = vadd.f32 %v2693, 1.0
        %v2854 = vadd.f32 %v2695, 1.0
        %v2855 = vadd.f32 %v2697, 1.0
        %v2856 = vadd.f32 %v2699, 1.0
        %v2857 = vadd.f32 %v2701, 1.0
        %v2858 = vadd.f32 %v2703, 1.0
        %v2859 = vadd.f32 %v2705, 1.0
        %v2860 = vadd.f32 %v2707, 1.0
        %v2861 = vadd.f32 %v2709, 1.0
        %v2862 = vadd.f32 %v2711, 1.0
        %v2863 = vadd.f32 %v2713, 1.0
        %v2864 = vadd.f32 %v2715, 1.0
        %v2865 = vadd.f32 %v2717, 1.0
        %v2866 = vadd.f32 %v2719, 1.0
        %v2867 = vadd.f32 %v2721, 1.0
        %v2868 = vadd.f32 %v2723, 1.0
        %v2869 = vadd.f32 %v2725, 1.0
        %v2870 = vadd.f32 %v2727, 1.0
        %v2871 = vadd.f32 %v2729, 1.0
        %v2872 = vadd.f32 %v2731, 1.0
        %v2873 = vadd.f32 %v2733, 1.0
        %v2874 = vadd.f32 %v2735, 1.0
        %v2875 = vadd.f32 %v2737, 1.0
        %v2876 = vadd.f32 %v2739, 1.0
        %v2877 = vadd.f32 %v2741, 1.0
        %v2878 = vadd.f32 %v2743, 1.0
        %v2879 = vadd.f32 %v2745, 1.0
        %v2880 = vadd.f32 %v2747, 1.0
        %v2881 = vadd.f32 %v2749, 1.0
        %v2882 = vadd.f32 %v2751, 1.0
        %v2883 = vadd.f32 %v2753, 1.0
        %v2884 = vadd.f32 %v2755, 1.0
        %v2885 = vadd.f32 %v2757, 1.0
        %v2886 = vadd.f32 %v2759, 1.0
        %v2887 = vadd.f32 %v2761, 1.0
        %v2888 = vadd.f32 %v2763, 1.0
        %v2889 = vadd.f32 %v2765, 1.0
        %v2890 = vadd.f32 %v2767, 1.0
        %v2891 = vadd.f32 %v2769, 1.0
        %v2892 = vadd.f32 %v2771, 1.0
        %v2893 = vadd.f32 %v2773, 1.0
        %v2894 = vadd.f32 %v2775, 1.0
        %v2895 = vadd.f32 %v2777, 1.0
        %v2896 = vadd.f32 %v2779, 1.0
        %v2897 = vadd.f32 %v2781, 1.0
        %v2898 = vadd.f32 %v2783, 1.0
        %v2899 = vadd.f32 %v2785, 1.0
        %v2900 = vadd.f32 %v2787, 1.0
        %v2901 = vadd.f32 %v2789, 1.0
        %v2902 = vadd.f32 %v2791, 1.0
        %v2903 = vadd.f32 %v2793, 1.0
        %v2904 = vadd.f32 %v2795, 1.0
        %v2905 = vadd.f32 %v2797, 1.0
        %v2906 = vadd.f32 %v2799, 1.0
        %v2907 = vadd.f32 %v2801, 1.0
        %v2908 = vadd.f32 %v2803, 1.0
        %v2909 = vadd.f32 %v2805, 1.0
        %v2910 = vadd.f32 %v2807, 1.0
        %v2911 = vadd.f32 %v2809, 1.0
        %v2912 = vadd.f32 %v2811, 1.0
        %v2913 = vadd.f32 %v2813, 1.0
        %v2914 = vadd.f32 %v2815, 1.0
        %v2915 = vadd.f32 %v2817, 1.0
        %v2916 = vadd.f32 %v2819, 1.0
        %v2917 = vadd.f32 %v2821, 1.0
        %v2918 = vrcp.pop %v2822
        %v2919 = vmul.f32 1.0, %v2918
        %v2920 = vrcp.pop %v2823
        %v2921 = vmul.f32 1.0, %v2920
        %v2922 = vrcp.pop %v2824
        %v2923 = vmul.f32 1.0, %v2922
        %v2924 = vrcp.pop %v2825
        %v2925 = vmul.f32 1.0, %v2924
        %v2926 = vrcp.pop %v2826
        %v2927 = vmul.f32 1.0, %v2926
        %v2928 = vrcp.pop %v2827
        %v2929 = vmul.f32 1.0, %v2928
        %v2930 = vrcp.pop %v2828
        %v2931 = vmul.f32 1.0, %v2930
        %v2932 = vrcp.pop %v2829
        %v2933 = vmul.f32 1.0, %v2932
        %v2934 = vrcp.pop %v2830
        %v2935 = vmul.f32 1.0, %v2934
        %v2936 = vrcp.pop %v2831
        %v2937 = vmul.f32 1.0, %v2936
        %v2938 = vrcp.pop %v2832
        %v2939 = vmul.f32 1.0, %v2938
        %v2940 = vrcp.pop %v2833
        %v2941 = vmul.f32 1.0, %v2940
        %v2942 = vrcp.pop %v2834
        %v2943 = vmul.f32 1.0, %v2942
        %v2944 = vrcp.pop %v2835
        %v2945 = vmul.f32 1.0, %v2944
        %v2946 = vrcp.pop %v2836
        %v2947 = vmul.f32 1.0, %v2946
        %v2948 = vrcp.pop %v2837
        %v2949 = vmul.f32 1.0, %v2948
        %v2950 = vrcp.pop %v2838
        %v2951 = vmul.f32 1.0, %v2950
        %v2952 = vrcp.pop %v2839
        %v2953 = vmul.f32 1.0, %v2952
        %v2954 = vrcp.pop %v2840
        %v2955 = vmul.f32 1.0, %v2954
        %v2956 = vrcp.pop %v2841
        %v2957 = vmul.f32 1.0, %v2956
        %v2958 = vrcp.pop %v2842
        %v2959 = vmul.f32 1.0, %v2958
        %v2960 = vrcp.pop %v2843
        %v2961 = vmul.f32 1.0, %v2960
        %v2962 = vrcp.pop %v2844
        %v2963 = vmul.f32 1.0, %v2962
        %v2964 = vrcp.pop %v2845
        %v2965 = vmul.f32 1.0, %v2964
        %v2966 = vrcp.pop %v2846
        %v2967 = vmul.f32 1.0, %v2966
        %v2968 = vrcp.pop %v2847
        %v2969 = vmul.f32 1.0, %v2968
        %v2970 = vrcp.pop %v2848
        %v2971 = vmul.f32 1.0, %v2970
        %v2972 = vrcp.pop %v2849
        %v2973 = vmul.f32 1.0, %v2972
        %v2974 = vrcp.pop %v2850
        %v2975 = vmul.f32 1.0, %v2974
        %v2976 = vrcp.pop %v2851
        %v2977 = vmul.f32 1.0, %v2976
        %v2978 = vrcp.pop %v2852
        %v2979 = vmul.f32 1.0, %v2978
        %v2980 = vrcp.pop %v2853
        %v2981 = vmul.f32 1.0, %v2980
        %v2982 = vrcp.pop %v2854
        %v2983 = vmul.f32 1.0, %v2982
        %v2984 = vrcp.pop %v2855
        %v2985 = vmul.f32 1.0, %v2984
        %v2986 = vrcp.pop %v2856
        %v2987 = vmul.f32 1.0, %v2986
        %v2988 = vrcp.pop %v2857
        %v2989 = vmul.f32 1.0, %v2988
        %v2990 = vrcp.pop %v2858
        %v2991 = vmul.f32 1.0, %v2990
        %v2992 = vrcp.pop %v2859
        %v2993 = vmul.f32 1.0, %v2992
        %v2994 = vrcp.pop %v2860
        %v2995 = vmul.f32 1.0, %v2994
        %v2996 = vrcp.pop %v2861
        %v2997 = vmul.f32 1.0, %v2996
        %v2998 = vrcp.pop %v2862
        %v2999 = vmul.f32 1.0, %v2998
        %v3000 = vrcp.pop %v2863
        %v3001 = vmul.f32 1.0, %v3000
        %v3002 = vrcp.pop %v2864
        %v3003 = vmul.f32 1.0, %v3002
        %v3004 = vrcp.pop %v2865
        %v3005 = vmul.f32 1.0, %v3004
        %v3006 = vrcp.pop %v2866
        %v3007 = vmul.f32 1.0, %v3006
        %v3008 = vrcp.pop %v2867
        %v3009 = vmul.f32 1.0, %v3008
        %v3010 = vrcp.pop %v2868
        %v3011 = vmul.f32 1.0, %v3010
        %v3012 = vrcp.pop %v2869
        %v3013 = vmul.f32 1.0, %v3012
        %v3014 = vrcp.pop %v2870
        %v3015 = vmul.f32 1.0, %v3014
        %v3016 = vrcp.pop %v2871
        %v3017 = vmul.f32 1.0, %v3016
        %v3018 = vrcp.pop %v2872
        %v3019 = vmul.f32 1.0, %v3018
        %v3020 = vrcp.pop %v2873
        %v3021 = vmul.f32 1.0, %v3020
        %v3022 = vrcp.pop %v2874
        %v3023 = vmul.f32 1.0, %v3022
        %v3024 = vrcp.pop %v2875
        %v3025 = vmul.f32 1.0, %v3024
        %v3026 = vrcp.pop %v2876
        %v3027 = vmul.f32 1.0, %v3026
        %v3028 = vrcp.pop %v2877
        %v3029 = vmul.f32 1.0, %v3028
        %v3030 = vrcp.pop %v2878
        %v3031 = vmul.f32 1.0, %v3030
        %v3032 = vrcp.pop %v2879
        %v3033 = vmul.f32 1.0, %v3032
        %v3034 = vrcp.pop %v2880
        %v3035 = vmul.f32 1.0, %v3034
        %v3036 = vrcp.pop %v2881
        %v3037 = vmul.f32 1.0, %v3036
        %v3038 = vrcp.pop %v2882
        %v3039 = vmul.f32 1.0, %v3038
        %v3040 = vrcp.pop %v2883
        %v3041 = vmul.f32 1.0, %v3040
        %v3042 = vrcp.pop %v2884
        %v3043 = vmul.f32 1.0, %v3042
        %v3044 = vrcp.pop %v2885
        %v3045 = vmul.f32 1.0, %v3044
        %v3046 = vrcp.pop %v2886
        %v3047 = vmul.f32 1.0, %v3046
        %v3048 = vrcp.pop %v2887
        %v3049 = vmul.f32 1.0, %v3048
        %v3050 = vrcp.pop %v2888
        %v3051 = vmul.f32 1.0, %v3050
        %v3052 = vrcp.pop %v2889
        %v3053 = vmul.f32 1.0, %v3052
        %v3054 = vrcp.pop %v2890
        %v3055 = vmul.f32 1.0, %v3054
        %v3056 = vrcp.pop %v2891
        %v3057 = vmul.f32 1.0, %v3056
        %v3058 = vrcp.pop %v2892
        %v3059 = vmul.f32 1.0, %v3058
        %v3060 = vrcp.pop %v2893
        %v3061 = vmul.f32 1.0, %v3060
        %v3062 = vrcp.pop %v2894
        %v3063 = vmul.f32 1.0, %v3062
        %v3064 = vrcp.pop %v2895
        %v3065 = vmul.f32 1.0, %v3064
        %v3066 = vrcp.pop %v2896
        %v3067 = vmul.f32 1.0, %v3066
        %v3068 = vrcp.pop %v2897
        %v3069 = vmul.f32 1.0, %v3068
        %v3070 = vrcp.pop %v2898
        %v3071 = vmul.f32 1.0, %v3070
        %v3072 = vrcp.pop %v2899
        %v3073 = vmul.f32 1.0, %v3072
        %v3074 = vrcp.pop %v2900
        %v3075 = vmul.f32 1.0, %v3074
        %v3076 = vrcp.pop %v2901
        %v3077 = vmul.f32 1.0, %v3076
        %v3078 = vrcp.pop %v2902
        %v3079 = vmul.f32 1.0, %v3078
        %v3080 = vrcp.pop %v2903
        %v3081 = vmul.f32 1.0, %v3080
        %v3082 = vrcp.pop %v2904
        %v3083 = vmul.f32 1.0, %v3082
        %v3084 = vrcp.pop %v2905
        %v3085 = vmul.f32 1.0, %v3084
        %v3086 = vrcp.pop %v2906
        %v3087 = vmul.f32 1.0, %v3086
        %v3088 = vrcp.pop %v2907
        %v3089 = vmul.f32 1.0, %v3088
        %v3090 = vrcp.pop %v2908
        %v3091 = vmul.f32 1.0, %v3090
        %v3092 = vrcp.pop %v2909
        %v3093 = vmul.f32 1.0, %v3092
        %v3094 = vrcp.pop %v2910
        %v3095 = vmul.f32 1.0, %v3094
        %v3096 = vrcp.pop %v2911
        %v3097 = vmul.f32 1.0, %v3096
        %v3098 = vrcp.pop %v2912
        %v3099 = vmul.f32 1.0, %v3098
        %v3100 = vrcp.pop %v2913
        %v3101 = vmul.f32 1.0, %v3100
        %v3102 = vrcp.pop %v2914
        %v3103 = vmul.f32 1.0, %v3102
        %v3104 = vrcp.pop %v2915
        %v3105 = vmul.f32 1.0, %v3104
        %v3106 = vrcp.pop %v2916
        %v3107 = vmul.f32 1.0, %v3106
        %v3108 = vrcp.pop %v2917
        %v3109 = vmul.f32 1.0, %v3108
        %3110 = vrot.lane.b32.xlu0 %v238, 32
        %v3111 = vpop.permute.xlu0 %3110
        %3112 = vrot.lane.b32.xlu0 %v239, 32
        %v3113 = vpop.permute.xlu0 %3112
        %3114 = vrot.lane.b32.xlu0 %v240, 32
        %v3115 = vpop.permute.xlu0 %3114
        %3116 = vrot.lane.b32.xlu0 %v241, 32
        %v3117 = vpop.permute.xlu0 %3116
        %3118 = vrot.lane.b32.xlu0 %v242, 32
        %v3119 = vpop.permute.xlu0 %3118
        %3120 = vrot.lane.b32.xlu0 %v243, 32
        %v3121 = vpop.permute.xlu0 %3120
        %3122 = vrot.lane.b32.xlu0 %v244, 32
        %v3123 = vpop.permute.xlu0 %3122
        %3124 = vrot.lane.b32.xlu0 %v245, 32
        %v3125 = vpop.permute.xlu0 %3124
        %3126 = vrot.lane.b32.xlu0 %v246, 32
        %v3127 = vpop.permute.xlu0 %3126
        %3128 = vrot.lane.b32.xlu0 %v247, 32
        %v3129 = vpop.permute.xlu0 %3128
        %3130 = vrot.lane.b32.xlu0 %v248, 32
        %v3131 = vpop.permute.xlu0 %3130
        %3132 = vrot.lane.b32.xlu0 %v249, 32
        %v3133 = vpop.permute.xlu0 %3132
        %3134 = vrot.lane.b32.xlu0 %v250, 32
        %v3135 = vpop.permute.xlu0 %3134
        %3136 = vrot.lane.b32.xlu0 %v251, 32
        %v3137 = vpop.permute.xlu0 %3136
        %3138 = vrot.lane.b32.xlu0 %v252, 32
        %v3139 = vpop.permute.xlu0 %3138
        %3140 = vrot.lane.b32.xlu0 %v253, 32
        %v3141 = vpop.permute.xlu0 %3140
        %3142 = vrot.lane.b32.xlu0 %v254, 32
        %v3143 = vpop.permute.xlu0 %3142
        %3144 = vrot.lane.b32.xlu0 %v255, 32
        %v3145 = vpop.permute.xlu0 %3144
        %3146 = vrot.lane.b32.xlu0 %v256, 32
        %v3147 = vpop.permute.xlu0 %3146
        %3148 = vrot.lane.b32.xlu0 %v257, 32
        %v3149 = vpop.permute.xlu0 %3148
        %3150 = vrot.lane.b32.xlu0 %v258, 32
        %v3151 = vpop.permute.xlu0 %3150
        %3152 = vrot.lane.b32.xlu0 %v259, 32
        %v3153 = vpop.permute.xlu0 %3152
        %3154 = vrot.lane.b32.xlu0 %v260, 32
        %v3155 = vpop.permute.xlu0 %3154
        %3156 = vrot.lane.b32.xlu0 %v261, 32
        %v3157 = vpop.permute.xlu0 %3156
        %3158 = vrot.lane.b32.xlu0 %v262, 32
        %v3159 = vpop.permute.xlu0 %3158
        %3160 = vrot.lane.b32.xlu0 %v263, 32
        %v3161 = vpop.permute.xlu0 %3160
        %3162 = vrot.lane.b32.xlu0 %v264, 32
        %v3163 = vpop.permute.xlu0 %3162
        %3164 = vrot.lane.b32.xlu0 %v265, 32
        %v3165 = vpop.permute.xlu0 %3164
        %3166 = vrot.lane.b32.xlu0 %v266, 32
        %v3167 = vpop.permute.xlu0 %3166
        %3168 = vrot.lane.b32.xlu0 %v267, 32
        %v3169 = vpop.permute.xlu0 %3168
        %3170 = vrot.lane.b32.xlu0 %v268, 32
        %v3171 = vpop.permute.xlu0 %3170
        %3172 = vrot.lane.b32.xlu0 %v269, 32
        %v3173 = vpop.permute.xlu0 %3172
        %3206 = vrot.lane.b32.xlu0 %v238, 64
        %v3207 = vpop.permute.xlu0 %3206
        %3208 = vrot.lane.b32.xlu0 %v239, 64
        %v3209 = vpop.permute.xlu0 %3208
        %3210 = vrot.lane.b32.xlu0 %v240, 64
        %v3211 = vpop.permute.xlu0 %3210
        %3212 = vrot.lane.b32.xlu0 %v241, 64
        %v3213 = vpop.permute.xlu0 %3212
        %3214 = vrot.lane.b32.xlu0 %v242, 64
        %v3215 = vpop.permute.xlu0 %3214
        %3216 = vrot.lane.b32.xlu0 %v243, 64
        %v3217 = vpop.permute.xlu0 %3216
        %3218 = vrot.lane.b32.xlu0 %v244, 64
        %v3219 = vpop.permute.xlu0 %3218
        %3220 = vrot.lane.b32.xlu0 %v245, 64
        %v3221 = vpop.permute.xlu0 %3220
        %3222 = vrot.lane.b32.xlu0 %v246, 64
        %v3223 = vpop.permute.xlu0 %3222
        %3224 = vrot.lane.b32.xlu0 %v247, 64
        %v3225 = vpop.permute.xlu0 %3224
        %3226 = vrot.lane.b32.xlu0 %v248, 64
        %v3227 = vpop.permute.xlu0 %3226
        %3228 = vrot.lane.b32.xlu0 %v249, 64
        %v3229 = vpop.permute.xlu0 %3228
        %3230 = vrot.lane.b32.xlu0 %v250, 64
        %v3231 = vpop.permute.xlu0 %3230
        %3232 = vrot.lane.b32.xlu0 %v251, 64
        %v3233 = vpop.permute.xlu0 %3232
        %3234 = vrot.lane.b32.xlu0 %v252, 64
        %v3235 = vpop.permute.xlu0 %3234
        %3236 = vrot.lane.b32.xlu0 %v253, 64
        %v3237 = vpop.permute.xlu0 %3236
        %3238 = vrot.lane.b32.xlu0 %v254, 64
        %v3239 = vpop.permute.xlu0 %3238
        %3240 = vrot.lane.b32.xlu0 %v255, 64
        %v3241 = vpop.permute.xlu0 %3240
        %3242 = vrot.lane.b32.xlu0 %v256, 64
        %v3243 = vpop.permute.xlu0 %3242
        %3244 = vrot.lane.b32.xlu0 %v257, 64
        %v3245 = vpop.permute.xlu0 %3244
        %3246 = vrot.lane.b32.xlu0 %v258, 64
        %v3247 = vpop.permute.xlu0 %3246
        %3248 = vrot.lane.b32.xlu0 %v259, 64
        %v3249 = vpop.permute.xlu0 %3248
        %3250 = vrot.lane.b32.xlu0 %v260, 64
        %v3251 = vpop.permute.xlu0 %3250
        %3252 = vrot.lane.b32.xlu0 %v261, 64
        %v3253 = vpop.permute.xlu0 %3252
        %3254 = vrot.lane.b32.xlu0 %v262, 64
        %v3255 = vpop.permute.xlu0 %3254
        %3256 = vrot.lane.b32.xlu0 %v263, 64
        %v3257 = vpop.permute.xlu0 %3256
        %3258 = vrot.lane.b32.xlu0 %v264, 64
        %v3259 = vpop.permute.xlu0 %3258
        %3260 = vrot.lane.b32.xlu0 %v265, 64
        %v3261 = vpop.permute.xlu0 %3260
        %3262 = vrot.lane.b32.xlu0 %v266, 64
        %v3263 = vpop.permute.xlu0 %3262
        %3264 = vrot.lane.b32.xlu0 %v267, 64
        %v3265 = vpop.permute.xlu0 %3264
        %3266 = vrot.lane.b32.xlu0 %v268, 64
        %v3267 = vpop.permute.xlu0 %3266
        %3268 = vrot.lane.b32.xlu0 %v269, 64
        %v3269 = vpop.permute.xlu0 %3268
        %3302 = vrot.lane.b32.xlu0 %v238, 96
        %v3303 = vpop.permute.xlu0 %3302
        %3304 = vrot.lane.b32.xlu0 %v239, 96
        %v3305 = vpop.permute.xlu0 %3304
        %3306 = vrot.lane.b32.xlu0 %v240, 96
        %v3307 = vpop.permute.xlu0 %3306
        %3308 = vrot.lane.b32.xlu0 %v241, 96
        %v3309 = vpop.permute.xlu0 %3308
        %3310 = vrot.lane.b32.xlu0 %v242, 96
        %v3311 = vpop.permute.xlu0 %3310
        %3312 = vrot.lane.b32.xlu0 %v243, 96
        %v3313 = vpop.permute.xlu0 %3312
        %3314 = vrot.lane.b32.xlu0 %v244, 96
        %v3315 = vpop.permute.xlu0 %3314
        %3316 = vrot.lane.b32.xlu0 %v245, 96
        %v3317 = vpop.permute.xlu0 %3316
        %3318 = vrot.lane.b32.xlu0 %v246, 96
        %v3319 = vpop.permute.xlu0 %3318
        %3320 = vrot.lane.b32.xlu0 %v247, 96
        %v3321 = vpop.permute.xlu0 %3320
        %3322 = vrot.lane.b32.xlu0 %v248, 96
        %v3323 = vpop.permute.xlu0 %3322
        %3324 = vrot.lane.b32.xlu0 %v249, 96
        %v3325 = vpop.permute.xlu0 %3324
        %3326 = vrot.lane.b32.xlu0 %v250, 96
        %v3327 = vpop.permute.xlu0 %3326
        %3328 = vrot.lane.b32.xlu0 %v251, 96
        %v3329 = vpop.permute.xlu0 %3328
        %3330 = vrot.lane.b32.xlu0 %v252, 96
        %v3331 = vpop.permute.xlu0 %3330
        %3332 = vrot.lane.b32.xlu0 %v253, 96
        %v3333 = vpop.permute.xlu0 %3332
        %3334 = vrot.lane.b32.xlu0 %v254, 96
        %v3335 = vpop.permute.xlu0 %3334
        %3336 = vrot.lane.b32.xlu0 %v255, 96
        %v3337 = vpop.permute.xlu0 %3336
        %3338 = vrot.lane.b32.xlu0 %v256, 96
        %v3339 = vpop.permute.xlu0 %3338
        %3340 = vrot.lane.b32.xlu0 %v257, 96
        %v3341 = vpop.permute.xlu0 %3340
        %3342 = vrot.lane.b32.xlu0 %v258, 96
        %v3343 = vpop.permute.xlu0 %3342
        %3344 = vrot.lane.b32.xlu0 %v259, 96
        %v3345 = vpop.permute.xlu0 %3344
        %3346 = vrot.lane.b32.xlu0 %v260, 96
        %v3347 = vpop.permute.xlu0 %3346
        %3348 = vrot.lane.b32.xlu0 %v261, 96
        %v3349 = vpop.permute.xlu0 %3348
        %3350 = vrot.lane.b32.xlu0 %v262, 96
        %v3351 = vpop.permute.xlu0 %3350
        %3352 = vrot.lane.b32.xlu0 %v263, 96
        %v3353 = vpop.permute.xlu0 %3352
        %3354 = vrot.lane.b32.xlu0 %v264, 96
        %v3355 = vpop.permute.xlu0 %3354
        %3356 = vrot.lane.b32.xlu0 %v265, 96
        %v3357 = vpop.permute.xlu0 %3356
        %3358 = vrot.lane.b32.xlu0 %v266, 96
        %v3359 = vpop.permute.xlu0 %3358
        %3360 = vrot.lane.b32.xlu0 %v267, 96
        %v3361 = vpop.permute.xlu0 %3360
        %3362 = vrot.lane.b32.xlu0 %v268, 96
        %v3363 = vpop.permute.xlu0 %3362
        %3364 = vrot.lane.b32.xlu0 %v269, 96
        %v3365 = vpop.permute.xlu0 %3364
        %v3398 = vsel %vm1955, %v238, %v3111
        %v3399 = vsel %vm1955, %v239, %v3113
        %v3400 = vsel %vm1955, %v240, %v3115
        %v3401 = vsel %vm1955, %v241, %v3117
        %v3402 = vsel %vm1955, %v242, %v3119
        %v3403 = vsel %vm1955, %v243, %v3121
        %v3404 = vsel %vm1955, %v244, %v3123
        %v3405 = vsel %vm1955, %v245, %v3125
        %v3406 = vsel %vm1955, %v246, %v3127
        %v3407 = vsel %vm1955, %v247, %v3129
        %v3408 = vsel %vm1955, %v248, %v3131
        %v3409 = vsel %vm1955, %v249, %v3133
        %v3410 = vsel %vm1955, %v250, %v3135
        %v3411 = vsel %vm1955, %v251, %v3137
        %v3412 = vsel %vm1955, %v252, %v3139
        %v3413 = vsel %vm1955, %v253, %v3141
        %v3414 = vsel %vm1955, %v254, %v3143
        %v3415 = vsel %vm1955, %v255, %v3145
        %v3416 = vsel %vm1955, %v256, %v3147
        %v3417 = vsel %vm1955, %v257, %v3149
        %v3418 = vsel %vm1955, %v258, %v3151
        %v3419 = vsel %vm1955, %v259, %v3153
        %v3420 = vsel %vm1955, %v260, %v3155
        %v3421 = vsel %vm1955, %v261, %v3157
        %v3422 = vsel %vm1955, %v262, %v3159
        %v3423 = vsel %vm1955, %v263, %v3161
        %v3424 = vsel %vm1955, %v264, %v3163
        %v3425 = vsel %vm1955, %v265, %v3165
        %v3426 = vsel %vm1955, %v266, %v3167
        %v3427 = vsel %vm1955, %v267, %v3169
        %v3428 = vsel %vm1955, %v268, %v3171
        %v3429 = vsel %vm1955, %v269, %v3173
        %vm3430 = vcmask 523264
        %v3431 = vsel %vm3430, %v3398, %v3207
        %v3432 = vsel %vm3430, %v3399, %v3209
        %v3433 = vsel %vm3430, %v3400, %v3211
        %v3434 = vsel %vm3430, %v3401, %v3213
        %v3435 = vsel %vm3430, %v3402, %v3215
        %v3436 = vsel %vm3430, %v3403, %v3217
        %v3437 = vsel %vm3430, %v3404, %v3219
        %v3438 = vsel %vm3430, %v3405, %v3221
        %v3439 = vsel %vm3430, %v3406, %v3223
        %v3440 = vsel %vm3430, %v3407, %v3225
        %v3441 = vsel %vm3430, %v3408, %v3227
        %v3442 = vsel %vm3430, %v3409, %v3229
        %v3443 = vsel %vm3430, %v3410, %v3231
        %v3444 = vsel %vm3430, %v3411, %v3233
        %v3445 = vsel %vm3430, %v3412, %v3235
        %v3446 = vsel %vm3430, %v3413, %v3237
        %v3447 = vsel %vm3430, %v3414, %v3239
        %v3448 = vsel %vm3430, %v3415, %v3241
        %v3449 = vsel %vm3430, %v3416, %v3243
        %v3450 = vsel %vm3430, %v3417, %v3245
        %v3451 = vsel %vm3430, %v3418, %v3247
        %v3452 = vsel %vm3430, %v3419, %v3249
        %v3453 = vsel %vm3430, %v3420, %v3251
        %v3454 = vsel %vm3430, %v3421, %v3253
        %v3455 = vsel %vm3430, %v3422, %v3255
        %v3456 = vsel %vm3430, %v3423, %v3257
        %v3457 = vsel %vm3430, %v3424, %v3259
        %v3458 = vsel %vm3430, %v3425, %v3261
        %v3459 = vsel %vm3430, %v3426, %v3263
        %v3460 = vsel %vm3430, %v3427, %v3265
        %v3461 = vsel %vm3430, %v3428, %v3267
        %v3462 = vsel %vm3430, %v3429, %v3269
        %v3463 = vsel %vm289, %v3431, %v3303
        %v3464 = vsel %vm289, %v3432, %v3305
        %v3465 = vsel %vm289, %v3433, %v3307
        %v3466 = vsel %vm289, %v3434, %v3309
        %v3467 = vsel %vm289, %v3435, %v3311
        %v3468 = vsel %vm289, %v3436, %v3313
        %v3469 = vsel %vm289, %v3437, %v3315
        %v3470 = vsel %vm289, %v3438, %v3317
        %v3471 = vsel %vm289, %v3439, %v3319
        %v3472 = vsel %vm289, %v3440, %v3321
        %v3473 = vsel %vm289, %v3441, %v3323
        %v3474 = vsel %vm289, %v3442, %v3325
        %v3475 = vsel %vm289, %v3443, %v3327
        %v3476 = vsel %vm289, %v3444, %v3329
        %v3477 = vsel %vm289, %v3445, %v3331
        %v3478 = vsel %vm289, %v3446, %v3333
        %v3479 = vsel %vm289, %v3447, %v3335
        %v3480 = vsel %vm289, %v3448, %v3337
        %v3481 = vsel %vm289, %v3449, %v3339
        %v3482 = vsel %vm289, %v3450, %v3341
        %v3483 = vsel %vm289, %v3451, %v3343
        %v3484 = vsel %vm289, %v3452, %v3345
        %v3485 = vsel %vm289, %v3453, %v3347
        %v3486 = vsel %vm289, %v3454, %v3349
        %v3487 = vsel %vm289, %v3455, %v3351
        %v3488 = vsel %vm289, %v3456, %v3353
        %v3489 = vsel %vm289, %v3457, %v3355
        %v3490 = vsel %vm289, %v3458, %v3357
        %v3491 = vsel %vm289, %v3459, %v3359
        %v3492 = vsel %vm289, %v3460, %v3361
        %v3493 = vsel %vm289, %v3461, %v3363
        %v3494 = vsel %vm289, %v3462, %v3365
        %v3495 = vmul.f32 %v3463, %v2919
        %v3496 = vmul.f32 %v3464, %v2925
        %v3497 = vmul.f32 %v3465, %v2931
        %v3498 = vmul.f32 %v3466, %v2937
        %v3499 = vmul.f32 %v3467, %v2943
        %v3500 = vmul.f32 %v3468, %v2949
        %v3501 = vmul.f32 %v3469, %v2955
        %v3502 = vmul.f32 %v3470, %v2961
        %v3503 = vmul.f32 %v3471, %v2967
        %v3504 = vmul.f32 %v3472, %v2973
        %v3505 = vmul.f32 %v3473, %v2979
        %v3506 = vmul.f32 %v3474, %v2985
        %v3507 = vmul.f32 %v3475, %v2991
        %v3508 = vmul.f32 %v3476, %v2997
        %v3509 = vmul.f32 %v3477, %v3003
        %v3510 = vmul.f32 %v3478, %v3009
        %v3511 = vmul.f32 %v3479, %v3015
        %v3512 = vmul.f32 %v3480, %v3021
        %v3513 = vmul.f32 %v3481, %v3027
        %v3514 = vmul.f32 %v3482, %v3033
        %v3515 = vmul.f32 %v3483, %v3039
        %v3516 = vmul.f32 %v3484, %v3045
        %v3517 = vmul.f32 %v3485, %v3051
        %v3518 = vmul.f32 %v3486, %v3057
        %v3519 = vmul.f32 %v3487, %v3063
        %v3520 = vmul.f32 %v3488, %v3069
        %v3521 = vmul.f32 %v3489, %v3075
        %v3522 = vmul.f32 %v3490, %v3081
        %v3523 = vmul.f32 %v3491, %v3087
        %v3524 = vmul.f32 %v3492, %v3093
        %v3525 = vmul.f32 %v3493, %v3099
        %v3526 = vmul.f32 %v3494, %v3105
        %v3527 = vsel %vm1955, %v3303, %v238
        %v3528 = vsel %vm1955, %v3305, %v239
        %v3529 = vsel %vm1955, %v3307, %v240
        %v3530 = vsel %vm1955, %v3309, %v241
        %v3531 = vsel %vm1955, %v3311, %v242
        %v3532 = vsel %vm1955, %v3313, %v243
        %v3533 = vsel %vm1955, %v3315, %v244
        %v3534 = vsel %vm1955, %v3317, %v245
        %v3535 = vsel %vm1955, %v3319, %v246
        %v3536 = vsel %vm1955, %v3321, %v247
        %v3537 = vsel %vm1955, %v3323, %v248
        %v3538 = vsel %vm1955, %v3325, %v249
        %v3539 = vsel %vm1955, %v3327, %v250
        %v3540 = vsel %vm1955, %v3329, %v251
        %v3541 = vsel %vm1955, %v3331, %v252
        %v3542 = vsel %vm1955, %v3333, %v253
        %v3543 = vsel %vm1955, %v3335, %v254
        %v3544 = vsel %vm1955, %v3337, %v255
        %v3545 = vsel %vm1955, %v3339, %v256
        %v3546 = vsel %vm1955, %v3341, %v257
        %v3547 = vsel %vm1955, %v3343, %v258
        %v3548 = vsel %vm1955, %v3345, %v259
        %v3549 = vsel %vm1955, %v3347, %v260
        %v3550 = vsel %vm1955, %v3349, %v261
        %v3551 = vsel %vm1955, %v3351, %v262
        %v3552 = vsel %vm1955, %v3353, %v263
        %v3553 = vsel %vm1955, %v3355, %v264
        %v3554 = vsel %vm1955, %v3357, %v265
        %v3555 = vsel %vm1955, %v3359, %v266
        %v3556 = vsel %vm1955, %v3361, %v267
        %v3557 = vsel %vm1955, %v3363, %v268
        %v3558 = vsel %vm1955, %v3365, %v269
        %v3559 = vsel %vm3430, %v3527, %v3111
        %v3560 = vsel %vm3430, %v3528, %v3113
        %v3561 = vsel %vm3430, %v3529, %v3115
        %v3562 = vsel %vm3430, %v3530, %v3117
        %v3563 = vsel %vm3430, %v3531, %v3119
        %v3564 = vsel %vm3430, %v3532, %v3121
        %v3565 = vsel %vm3430, %v3533, %v3123
        %v3566 = vsel %vm3430, %v3534, %v3125
        %v3567 = vsel %vm3430, %v3535, %v3127
        %v3568 = vsel %vm3430, %v3536, %v3129
        %v3569 = vsel %vm3430, %v3537, %v3131
        %v3570 = vsel %vm3430, %v3538, %v3133
        %v3571 = vsel %vm3430, %v3539, %v3135
        %v3572 = vsel %vm3430, %v3540, %v3137
        %v3573 = vsel %vm3430, %v3541, %v3139
        %v3574 = vsel %vm3430, %v3542, %v3141
        %v3575 = vsel %vm3430, %v3543, %v3143
        %v3576 = vsel %vm3430, %v3544, %v3145
        %v3577 = vsel %vm3430, %v3545, %v3147
        %v3578 = vsel %vm3430, %v3546, %v3149
        %v3579 = vsel %vm3430, %v3547, %v3151
        %v3580 = vsel %vm3430, %v3548, %v3153
        %v3581 = vsel %vm3430, %v3549, %v3155
        %v3582 = vsel %vm3430, %v3550, %v3157
        %v3583 = vsel %vm3430, %v3551, %v3159
        %v3584 = vsel %vm3430, %v3552, %v3161
        %v3585 = vsel %vm3430, %v3553, %v3163
        %v3586 = vsel %vm3430, %v3554, %v3165
        %v3587 = vsel %vm3430, %v3555, %v3167
        %v3588 = vsel %vm3430, %v3556, %v3169
        %v3589 = vsel %vm3430, %v3557, %v3171
        %v3590 = vsel %vm3430, %v3558, %v3173
        %v3591 = vsel %vm289, %v3559, %v3207
        %v3592 = vsel %vm289, %v3560, %v3209
        %v3593 = vsel %vm289, %v3561, %v3211
        %v3594 = vsel %vm289, %v3562, %v3213
        %v3595 = vsel %vm289, %v3563, %v3215
        %v3596 = vsel %vm289, %v3564, %v3217
        %v3597 = vsel %vm289, %v3565, %v3219
        %v3598 = vsel %vm289, %v3566, %v3221
        %v3599 = vsel %vm289, %v3567, %v3223
        %v3600 = vsel %vm289, %v3568, %v3225
        %v3601 = vsel %vm289, %v3569, %v3227
        %v3602 = vsel %vm289, %v3570, %v3229
        %v3603 = vsel %vm289, %v3571, %v3231
        %v3604 = vsel %vm289, %v3572, %v3233
        %v3605 = vsel %vm289, %v3573, %v3235
        %v3606 = vsel %vm289, %v3574, %v3237
        %v3607 = vsel %vm289, %v3575, %v3239
        %v3608 = vsel %vm289, %v3576, %v3241
        %v3609 = vsel %vm289, %v3577, %v3243
        %v3610 = vsel %vm289, %v3578, %v3245
        %v3611 = vsel %vm289, %v3579, %v3247
        %v3612 = vsel %vm289, %v3580, %v3249
        %v3613 = vsel %vm289, %v3581, %v3251
        %v3614 = vsel %vm289, %v3582, %v3253
        %v3615 = vsel %vm289, %v3583, %v3255
        %v3616 = vsel %vm289, %v3584, %v3257
        %v3617 = vsel %vm289, %v3585, %v3259
        %v3618 = vsel %vm289, %v3586, %v3261
        %v3619 = vsel %vm289, %v3587, %v3263
        %v3620 = vsel %vm289, %v3588, %v3265
        %v3621 = vsel %vm289, %v3589, %v3267
        %v3622 = vsel %vm289, %v3590, %v3269
        %v3623 = vmul.f32 %v3591, %v2921
        %v3624 = vmul.f32 %v3592, %v2927
        %v3625 = vmul.f32 %v3593, %v2933
        %v3626 = vmul.f32 %v3594, %v2939
        %v3627 = vmul.f32 %v3595, %v2945
        %v3628 = vmul.f32 %v3596, %v2951
        %v3629 = vmul.f32 %v3597, %v2957
        %v3630 = vmul.f32 %v3598, %v2963
        %v3631 = vmul.f32 %v3599, %v2969
        %v3632 = vmul.f32 %v3600, %v2975
        %v3633 = vmul.f32 %v3601, %v2981
        %v3634 = vmul.f32 %v3602, %v2987
        %v3635 = vmul.f32 %v3603, %v2993
        %v3636 = vmul.f32 %v3604, %v2999
        %v3637 = vmul.f32 %v3605, %v3005
        %v3638 = vmul.f32 %v3606, %v3011
        %v3639 = vmul.f32 %v3607, %v3017
        %v3640 = vmul.f32 %v3608, %v3023
        %v3641 = vmul.f32 %v3609, %v3029
        %v3642 = vmul.f32 %v3610, %v3035
        %v3643 = vmul.f32 %v3611, %v3041
        %v3644 = vmul.f32 %v3612, %v3047
        %v3645 = vmul.f32 %v3613, %v3053
        %v3646 = vmul.f32 %v3614, %v3059
        %v3647 = vmul.f32 %v3615, %v3065
        %v3648 = vmul.f32 %v3616, %v3071
        %v3649 = vmul.f32 %v3617, %v3077
        %v3650 = vmul.f32 %v3618, %v3083
        %v3651 = vmul.f32 %v3619, %v3089
        %v3652 = vmul.f32 %v3620, %v3095
        %v3653 = vmul.f32 %v3621, %v3101
        %v3654 = vmul.f32 %v3622, %v3107
        %v3655 = vadd.f32 %v3495, %v3623
        %v3656 = vadd.f32 %v3496, %v3624
        %v3657 = vadd.f32 %v3497, %v3625
        %v3658 = vadd.f32 %v3498, %v3626
        %v3659 = vadd.f32 %v3499, %v3627
        %v3660 = vadd.f32 %v3500, %v3628
        %v3661 = vadd.f32 %v3501, %v3629
        %v3662 = vadd.f32 %v3502, %v3630
        %v3663 = vadd.f32 %v3503, %v3631
        %v3664 = vadd.f32 %v3504, %v3632
        %v3665 = vadd.f32 %v3505, %v3633
        %v3666 = vadd.f32 %v3506, %v3634
        %v3667 = vadd.f32 %v3507, %v3635
        %v3668 = vadd.f32 %v3508, %v3636
        %v3669 = vadd.f32 %v3509, %v3637
        %v3670 = vadd.f32 %v3510, %v3638
        %v3671 = vadd.f32 %v3511, %v3639
        %v3672 = vadd.f32 %v3512, %v3640
        %v3673 = vadd.f32 %v3513, %v3641
        %v3674 = vadd.f32 %v3514, %v3642
        %v3675 = vadd.f32 %v3515, %v3643
        %v3676 = vadd.f32 %v3516, %v3644
        %v3677 = vadd.f32 %v3517, %v3645
        %v3678 = vadd.f32 %v3518, %v3646
        %v3679 = vadd.f32 %v3519, %v3647
        %v3680 = vadd.f32 %v3520, %v3648
        %v3681 = vadd.f32 %v3521, %v3649
        %v3682 = vadd.f32 %v3522, %v3650
        %v3683 = vadd.f32 %v3523, %v3651
        %v3684 = vadd.f32 %v3524, %v3652
        %v3685 = vadd.f32 %v3525, %v3653
        %v3686 = vadd.f32 %v3526, %v3654
        %v3687 = vsel %vm1955, %v3207, %v3303
        %v3688 = vsel %vm1955, %v3209, %v3305
        %v3689 = vsel %vm1955, %v3211, %v3307
        %v3690 = vsel %vm1955, %v3213, %v3309
        %v3691 = vsel %vm1955, %v3215, %v3311
        %v3692 = vsel %vm1955, %v3217, %v3313
        %v3693 = vsel %vm1955, %v3219, %v3315
        %v3694 = vsel %vm1955, %v3221, %v3317
        %v3695 = vsel %vm1955, %v3223, %v3319
        %v3696 = vsel %vm1955, %v3225, %v3321
        %v3697 = vsel %vm1955, %v3227, %v3323
        %v3698 = vsel %vm1955, %v3229, %v3325
        %v3699 = vsel %vm1955, %v3231, %v3327
        %v3700 = vsel %vm1955, %v3233, %v3329
        %v3701 = vsel %vm1955, %v3235, %v3331
        %v3702 = vsel %vm1955, %v3237, %v3333
        %v3703 = vsel %vm1955, %v3239, %v3335
        %v3704 = vsel %vm1955, %v3241, %v3337
        %v3705 = vsel %vm1955, %v3243, %v3339
        %v3706 = vsel %vm1955, %v3245, %v3341
        %v3707 = vsel %vm1955, %v3247, %v3343
        %v3708 = vsel %vm1955, %v3249, %v3345
        %v3709 = vsel %vm1955, %v3251, %v3347
        %v3710 = vsel %vm1955, %v3253, %v3349
        %v3711 = vsel %vm1955, %v3255, %v3351
        %v3712 = vsel %vm1955, %v3257, %v3353
        %v3713 = vsel %vm1955, %v3259, %v3355
        %v3714 = vsel %vm1955, %v3261, %v3357
        %v3715 = vsel %vm1955, %v3263, %v3359
        %v3716 = vsel %vm1955, %v3265, %v3361
        %v3717 = vsel %vm1955, %v3267, %v3363
        %v3718 = vsel %vm1955, %v3269, %v3365
        %v3719 = vsel %vm3430, %v3687, %v238
        %v3720 = vsel %vm3430, %v3688, %v239
        %v3721 = vsel %vm3430, %v3689, %v240
        %v3722 = vsel %vm3430, %v3690, %v241
        %v3723 = vsel %vm3430, %v3691, %v242
        %v3724 = vsel %vm3430, %v3692, %v243
        %v3725 = vsel %vm3430, %v3693, %v244
        %v3726 = vsel %vm3430, %v3694, %v245
        %v3727 = vsel %vm3430, %v3695, %v246
        %v3728 = vsel %vm3430, %v3696, %v247
        %v3729 = vsel %vm3430, %v3697, %v248
        %v3730 = vsel %vm3430, %v3698, %v249
        %v3731 = vsel %vm3430, %v3699, %v250
        %v3732 = vsel %vm3430, %v3700, %v251
        %v3733 = vsel %vm3430, %v3701, %v252
        %v3734 = vsel %vm3430, %v3702, %v253
        %v3735 = vsel %vm3430, %v3703, %v254
        %v3736 = vsel %vm3430, %v3704, %v255
        %v3737 = vsel %vm3430, %v3705, %v256
        %v3738 = vsel %vm3430, %v3706, %v257
        %v3739 = vsel %vm3430, %v3707, %v258
        %v3740 = vsel %vm3430, %v3708, %v259
        %v3741 = vsel %vm3430, %v3709, %v260
        %v3742 = vsel %vm3430, %v3710, %v261
        %v3743 = vsel %vm3430, %v3711, %v262
        %v3744 = vsel %vm3430, %v3712, %v263
        %v3745 = vsel %vm3430, %v3713, %v264
        %v3746 = vsel %vm3430, %v3714, %v265
        %v3747 = vsel %vm3430, %v3715, %v266
        %v3748 = vsel %vm3430, %v3716, %v267
        %v3749 = vsel %vm3430, %v3717, %v268
        %v3750 = vsel %vm3430, %v3718, %v269
        %v3751 = vsel %vm289, %v3719, %v3111
        %v3752 = vsel %vm289, %v3720, %v3113
        %v3753 = vsel %vm289, %v3721, %v3115
        %v3754 = vsel %vm289, %v3722, %v3117
        %v3755 = vsel %vm289, %v3723, %v3119
        %v3756 = vsel %vm289, %v3724, %v3121
        %v3757 = vsel %vm289, %v3725, %v3123
        %v3758 = vsel %vm289, %v3726, %v3125
        %v3759 = vsel %vm289, %v3727, %v3127
        %v3760 = vsel %vm289, %v3728, %v3129
        %v3761 = vsel %vm289, %v3729, %v3131
        %v3762 = vsel %vm289, %v3730, %v3133
        %v3763 = vsel %vm289, %v3731, %v3135
        %v3764 = vsel %vm289, %v3732, %v3137
        %v3765 = vsel %vm289, %v3733, %v3139
        %v3766 = vsel %vm289, %v3734, %v3141
        %v3767 = vsel %vm289, %v3735, %v3143
        %v3768 = vsel %vm289, %v3736, %v3145
        %v3769 = vsel %vm289, %v3737, %v3147
        %v3770 = vsel %vm289, %v3738, %v3149
        %v3771 = vsel %vm289, %v3739, %v3151
        %v3772 = vsel %vm289, %v3740, %v3153
        %v3773 = vsel %vm289, %v3741, %v3155
        %v3774 = vsel %vm289, %v3742, %v3157
        %v3775 = vsel %vm289, %v3743, %v3159
        %v3776 = vsel %vm289, %v3744, %v3161
        %v3777 = vsel %vm289, %v3745, %v3163
        %v3778 = vsel %vm289, %v3746, %v3165
        %v3779 = vsel %vm289, %v3747, %v3167
        %v3780 = vsel %vm289, %v3748, %v3169
        %v3781 = vsel %vm289, %v3749, %v3171
        %v3782 = vsel %vm289, %v3750, %v3173
        %v3783 = vmul.f32 %v3751, %v2923
        %v3784 = vmul.f32 %v3752, %v2929
        %v3785 = vmul.f32 %v3753, %v2935
        %v3786 = vmul.f32 %v3754, %v2941
        %v3787 = vmul.f32 %v3755, %v2947
        %v3788 = vmul.f32 %v3756, %v2953
        %v3789 = vmul.f32 %v3757, %v2959
        %v3790 = vmul.f32 %v3758, %v2965
        %v3791 = vmul.f32 %v3759, %v2971
        %v3792 = vmul.f32 %v3760, %v2977
        %v3793 = vmul.f32 %v3761, %v2983
        %v3794 = vmul.f32 %v3762, %v2989
        %v3795 = vmul.f32 %v3763, %v2995
        %v3796 = vmul.f32 %v3764, %v3001
        %v3797 = vmul.f32 %v3765, %v3007
        %v3798 = vmul.f32 %v3766, %v3013
        %v3799 = vmul.f32 %v3767, %v3019
        %v3800 = vmul.f32 %v3768, %v3025
        %v3801 = vmul.f32 %v3769, %v3031
        %v3802 = vmul.f32 %v3770, %v3037
        %v3803 = vmul.f32 %v3771, %v3043
        %v3804 = vmul.f32 %v3772, %v3049
        %v3805 = vmul.f32 %v3773, %v3055
        %v3806 = vmul.f32 %v3774, %v3061
        %v3807 = vmul.f32 %v3775, %v3067
        %v3808 = vmul.f32 %v3776, %v3073
        %v3809 = vmul.f32 %v3777, %v3079
        %v3810 = vmul.f32 %v3778, %v3085
        %v3811 = vmul.f32 %v3779, %v3091
        %v3812 = vmul.f32 %v3780, %v3097
        %v3813 = vmul.f32 %v3781, %v3103
        %v3814 = vmul.f32 %v3782, %v3109
        %v3815 = vadd.f32 %v3655, %v3783
        %v3816 = vadd.f32 %v3656, %v3784
        %v3817 = vadd.f32 %v3657, %v3785
        %v3818 = vadd.f32 %v3658, %v3786
        %v3819 = vadd.f32 %v3659, %v3787
        %v3820 = vadd.f32 %v3660, %v3788
        %v3821 = vadd.f32 %v3661, %v3789
        %v3822 = vadd.f32 %v3662, %v3790
        %v3823 = vadd.f32 %v3663, %v3791
        %v3824 = vadd.f32 %v3664, %v3792
        %v3825 = vadd.f32 %v3665, %v3793
        %v3826 = vadd.f32 %v3666, %v3794
        %v3827 = vadd.f32 %v3667, %v3795
        %v3828 = vadd.f32 %v3668, %v3796
        %v3829 = vadd.f32 %v3669, %v3797
        %v3830 = vadd.f32 %v3670, %v3798
        %v3831 = vadd.f32 %v3671, %v3799
        %v3832 = vadd.f32 %v3672, %v3800
        %v3833 = vadd.f32 %v3673, %v3801
        %v3834 = vadd.f32 %v3674, %v3802
        %v3835 = vadd.f32 %v3675, %v3803
        %v3836 = vadd.f32 %v3676, %v3804
        %v3837 = vadd.f32 %v3677, %v3805
        %v3838 = vadd.f32 %v3678, %v3806
        %v3839 = vadd.f32 %v3679, %v3807
        %v3840 = vadd.f32 %v3680, %v3808
        %v3841 = vadd.f32 %v3681, %v3809
        %v3842 = vadd.f32 %v3682, %v3810
        %v3843 = vadd.f32 %v3683, %v3811
        %v3844 = vadd.f32 %v3684, %v3812
        %v3845 = vadd.f32 %v3685, %v3813
        %v3846 = vadd.f32 %v3686, %v3814
        %3847 = vst [vmem:[%s231] sm:$0xff] %v3815
        %3848 = vst [vmem:[%s231 + $0x8] sm:$0xff] %v3816
        %3849 = vst [vmem:[%s231 + $0x10] sm:$0xff] %v3817
        %3850 = vst [vmem:[%s231 + $0x18] sm:$0xff] %v3818
        %3851 = vst [vmem:[%s231 + $0x20] sm:$0xff] %v3819
        %3852 = vst [vmem:[%s231 + $0x28] sm:$0xff] %v3820
        %3853 = vst [vmem:[%s231 + $0x30] sm:$0xff] %v3821
        %3854 = vst [vmem:[%s231 + $0x38] sm:$0xff] %v3822
        %3855 = vst [vmem:[%s231 + $0x40] sm:$0xff] %v3823
        %3856 = vst [vmem:[%s231 + $0x48] sm:$0xff] %v3824
        %3857 = vst [vmem:[%s231 + $0x50] sm:$0xff] %v3825
        %3858 = vst [vmem:[%s231 + $0x58] sm:$0xff] %v3826
        %3859 = vst [vmem:[%s231 + $0x60] sm:$0xff] %v3827
        %3860 = vst [vmem:[%s231 + $0x68] sm:$0xff] %v3828
        %3861 = vst [vmem:[%s231 + $0x70] sm:$0xff] %v3829
        %3862 = vst [vmem:[%s231 + $0x78] sm:$0xff] %v3830
        %3863 = vst [vmem:[%s231 + $0x80] sm:$0xff] %v3831
        %3864 = vst [vmem:[%s231 + $0x88] sm:$0xff] %v3832
        %3865 = vst [vmem:[%s231 + $0x90] sm:$0xff] %v3833
        %3866 = vst [vmem:[%s231 + $0x98] sm:$0xff] %v3834
        %3867 = vst [vmem:[%s231 + $0xa0] sm:$0xff] %v3835
        %3868 = vst [vmem:[%s231 + $0xa8] sm:$0xff] %v3836
        %3869 = vst [vmem:[%s231 + $0xb0] sm:$0xff] %v3837
        %3870 = vst [vmem:[%s231 + $0xb8] sm:$0xff] %v3838
        %3871 = vst [vmem:[%s231 + $0xc0] sm:$0xff] %v3839
        %3872 = vst [vmem:[%s231 + $0xc8] sm:$0xff] %v3840
        %3873 = vst [vmem:[%s231 + $0xd0] sm:$0xff] %v3841
        %3874 = vst [vmem:[%s231 + $0xd8] sm:$0xff] %v3842
        %3875 = vst [vmem:[%s231 + $0xe0] sm:$0xff] %v3843
        %3876 = vst [vmem:[%s231 + $0xe8] sm:$0xff] %v3844
        %3877 = vst [vmem:[%s231 + $0xf0] sm:$0xff] %v3845
        %3878 = vst [vmem:[%s231 + $0xf8] sm:$0xff] %v3846
        %s3879 = sand.u32 %s151, 1
        %s3880 = scalar_lea.sflag [#allocation3], %s3879
        %s3881 = sand.u32 %s151, 1
        %s3882 = smul.addr %s3881, 256
        %s3883 = scalar_lea.vmem [#allocation2], %s3882
        // Predicated region
        $region41: #{tpu_custom_call.1} parent=39 // pred_check
          %p3884 = pneg %p161
        $region42: #{tpu_custom_call.1} parent=39 // pred_check_branch
          %3886 = sbr.rel (%p3884) target = $region44
        $region43: #{tpu_custom_call.1} parent=39 // pred_region
          %s3887 = smul.u32 32, %s24
          %s3889 = ssub.s32 4096, 4096
          %3890 = vsyncadd %s3880, %s3889
          %s3891 = smul.addr %s23, 32
          %s3892 = sadd.s32 %s3887, %s3891
          %s3893 = smul.addr %s3892, 128
          %s3894 = scalar_lea.hbm %s5, %s3893
          %s3895 = sshll.u32 %s3883, 4
          %s3896 = int_to_ptr.vmem [resolvable:$true] %s3895
          %3901 = dma.vmem_to_hbm [thread:$0]  %s3896, 4096, %s3894, %s3880, 128, 128, 8
        $region44: #{tpu_custom_call.1} parent=39 // pred_fallthru
          _
      $region40: #{tpu_custom_call.1} parent=5 // pred_fallthru
        _
      %p3902 = scmp.le.s32.totalorder 2, %s14
      // Predicated region
      $region45: #{tpu_custom_call.1} parent=5 // pred_check
        %p3903 = pneg %p3902
      $region46: #{tpu_custom_call.1} parent=5 // pred_check_branch
        %3905 = sbr.rel (%p3903) target = $region48
      $region47: #{tpu_custom_call.1} parent=5 // pred_region
        %s3906 = ssub.s32 %s14, 2
        // Predicated region
        $region49: #{tpu_custom_call.1} parent=47 // pred_check
          %p3907 = pneg %p167
        $region50: #{tpu_custom_call.1} parent=47 // pred_check_branch
          %3909 = sbr.rel (%p3907) target = $region52
        $region51: #{tpu_custom_call.1} parent=47 // pred_region
          %s3910 = sand.u32 %s152, 1
          %s3911 = scalar_lea.sflag [#allocation3], %s3910
          %s3912 = sand.u32 %s152, 1
          %s3913 = smul.addr %s3912, 256
          %s3914 = scalar_lea.vmem [#allocation2], %s3913
          %3915 = dma.done %s3911, 4096
        $region52: #{tpu_custom_call.1} parent=47 // pred_fallthru
          _
      $region48: #{tpu_custom_call.1} parent=5 // pred_fallthru
        _
    $region6: #{tpu_custom_call.1} parent=1 // loop_footer
      %s18 = sadd.s32 1, %s14
    $region7: #{tpu_custom_call.1} parent=1 // loop_footer_branch
      %13 = sbr.rel target = $region3
    $region8: #{tpu_custom_call.1} parent=1 // loop_exit
      _
    %3916 = vsyncpa [#allocation3], 1
    %s3917 = scalar_lea.sflag [#allocation3], 1
    %3918 = vsyncpa %s3917, 1

</llo_original>
